<compile_context>
chip_gen: v7x
topology: tpu7x:2x2x1
jax: 0.10.0
libtpu: 0.0.40
codegen_flags: <defaults>
</compile_context>

<pallas_src>
import functools

import jax
import jax.numpy as jnp
from jax import lax
from jax.experimental import pallas as pl
from jax.experimental.pallas import tpu as pltpu

EPS_LN = 1e-6


# ---------------- shared math helpers (kernel + reference) --------------------------

def _layernorm(x, eps=EPS_LN):
    mu = jnp.mean(x, axis=-1, keepdims=True)
    xc = x - mu
    var = jnp.mean(xc * xc, axis=-1, keepdims=True)
    return xc * lax.rsqrt(var + eps)


def _gelu_tanh(x):
    c = 0.7978845608028654  # sqrt(2/pi)
    return 0.5 * x * (1.0 + jnp.tanh(c * (x + 0.044715 * x * x * x)))


def _mm(a, w, b):
    """bf16 matmul with f32 accumulation: cast activation to the weight dtype."""
    return jnp.dot(a.astype(w.dtype), w, preferred_element_type=jnp.float32) + b


# ---------------- Pallas kernel ------------------------------------------------------

def _mha_flat(q, k_ref, v_ref, H, dhp):
    """Per-head attention on the padded flat-head layout.

    q: (TQ, H*dhp) bf16 (already scaled); k_ref/v_ref: (M, H*dhp) VMEM refs.
    dhp is a multiple of 128, so every head slice below is lane-aligned (unmasked)
    and only one (TQ, M) logits tile is live at a time.
    Returns (TQ, H*dhp) bf16 (padded lanes are exactly zero).
    """
    outs = []
    for h in range(H):                     # static loop: value math only, no stores
        lo = h * dhp
        qh = q[:, lo:lo + dhp]
        kh = k_ref[:, pl.ds(lo, dhp)]
        vh = v_ref[:, pl.ds(lo, dhp)]
        s = jnp.einsum('qd,kd->qk', qh, kh, preferred_element_type=jnp.float32)
        m = jnp.max(s, axis=-1, keepdims=True)
        e = jnp.exp(s - m)
        p = e * pl.reciprocal(jnp.sum(e, axis=-1, keepdims=True), approx=True)
        outs.append(jnp.dot(p.astype(vh.dtype), vh,
                            preferred_element_type=jnp.float32).astype(jnp.bfloat16))
    return jnp.concatenate(outs, axis=-1)  # lane-aligned concat -> (TQ, H*dhp)


def sana_ums_block_kernel(H, dhp, cs,
                          x_tile_ref, x_full_ref, y_ref, t_ref, sst_ref,
                          wq_ref, bq_ref, wk_ref, bk_ref, wv_ref, bv_ref,
                          wao_ref, bao_ref,
                          wcq_ref, bcq_ref, wck_ref, bck_ref, wcv_ref, bcv_ref,
                          wco_ref, bco_ref,
                          wfc1_ref, bfc1_ref, wfc2_ref, bfc2_ref,
                          o_ref,
                          k_scr, v_scr, ky_scr, vy_scr):
    f32, bf16 = jnp.float32, jnp.bfloat16
    qi = pl.program_id(1)
    _, TQ, C = x_tile_ref.shape
    N = x_full_ref.shape[1]
    scale = (C // H) ** -0.5               # scale uses the TRUE head dim, not dhp

    # adaLN-single modulation vectors (per batch element; f32).
    ss = sst_ref[...].astype(f32) + t_ref[0].astype(f32)          # (6, C)
    shift_msa, scale_msa, gate_msa = ss[0:1], ss[1:2], ss[2:3]
    shift_mlp, scale_mlp, gate_mlp = ss[3:4], ss[4:5], ss[5:6]

    # ---- once per batch element (qi == 0): fill K/V scratch (lane-dense, no masked
    #      stores).  Self-attn K/V is chunked over N so the live f32 intermediate is
    #      only (cs, H*dhp), never (N, 3C). ----
    @pl.when(qi == 0)
    def _precompute_kv():
        yb = y_ref[0].astype(bf16)                                 # (L, C)
        ky_scr[...] = (jnp.dot(yb, wck_ref[...], preferred_element_type=f32)
                       + bck_ref[...]).astype(bf16)
        vy_scr[...] = (jnp.dot(yb, wcv_ref[...], preferred_element_type=f32)
                       + bcv_ref[...]).astype(bf16)

        def chunk(ci, carry):
            n0 = pl.multiple_of(ci * cs, cs)
            xc = x_full_ref[:, pl.ds(n0, cs), :][0].astype(f32)    # (cs, C)
            xm = (_layernorm(xc) * (1.0 + scale_msa) + shift_msa).astype(bf16)
            k_scr[pl.ds(n0, cs), :] = (
                jnp.dot(xm, wk_ref[...], preferred_element_type=f32)
                + bk_ref[...]).astype(bf16)
            v_scr[pl.ds(n0, cs), :] = (
                jnp.dot(xm, wv_ref[...], preferred_element_type=f32)
                + bv_ref[...]).astype(bf16)
            return carry

        lax.fori_loop(0, N // cs, chunk, 0)

    x = x_tile_ref[0].astype(f32)                                  # (TQ, C)

    # ---- self-attention: x += gate_msa * W_o(MHA(Q_tile, K_full, V_full)) ----
    xm = (_layernorm(x) * (1.0 + scale_msa) + shift_msa).astype(bf16)
    q = ((jnp.dot(xm, wq_ref[...], preferred_element_type=f32)
          + bq_ref[...]) * scale).astype(bf16)                     # (TQ, H*dhp)
    a = _mha_flat(q, k_scr, v_scr, H, dhp)                         # (TQ, H*dhp) bf16
    attn = jnp.dot(a, wao_ref[...], preferred_element_type=f32) + bao_ref[...]
    x = x + gate_msa * attn

    # ---- cross-attention: x += W_o(MHA(Q(x), K(y), V(y))) ----
    cq = ((jnp.dot(x.astype(bf16), wcq_ref[...], preferred_element_type=f32)
           + bcq_ref[...]) * scale).astype(bf16)
    ca = _mha_flat(cq, ky_scr, vy_scr, H, dhp)
    x = x + (jnp.dot(ca, wco_ref[...], preferred_element_type=f32) + bco_ref[...])

    # ---- MLP: x += gate_mlp * fc2(gelu_tanh(fc1(modulate(LN(x))))) ----
    xm2 = (_layernorm(x) * (1.0 + scale_mlp) + shift_mlp).astype(bf16)
    hdn = _gelu_tanh(jnp.dot(xm2, wfc1_ref[...], preferred_element_type=f32)
                     + bfc1_ref[...])
    x = x + gate_mlp * (jnp.dot(hdn.astype(bf16), wfc2_ref[...],
                                preferred_element_type=f32) + bfc2_ref[...])

    o_ref[0] = x.astype(o_ref.dtype)


# ---------------- wrapper ------------------------------------------------------------

def _estimate_vmem_bytes(N, C, L, Ch, Hdp, TQ, weight_buffering):
    bf2, f4 = 2, 4
    nbuf = 1 if weight_buffering else 2
    weights = nbuf * (6 * C * Hdp + 2 * Hdp * C + 2 * C * Ch) * bf2
    biases = nbuf * (6 * Hdp + 3 * C + Ch + 6 * C) * f4
    x_full = nbuf * N * C * f4
    tiles = 2 * (2 * TQ * C * f4) + 2 * (L * C + 6 * C) * f4
    scratch = (2 * N + 2 * L) * Hdp * bf2
    live = (TQ * N + TQ * Ch + 3 * TQ * Hdp + 4 * TQ * C) * f4
    return weights + biases + x_full + tiles + scratch + live


def _pick_vmem_limit(est_bytes):
    mib = 1024 * 1024
    try:
        cap = pltpu.get_tpu_info().vmem_capacity_bytes
    except Exception:  # hardware-query helper only; a failure just means "be conservative"
        cap = 64 * mib                      # v7x per-core physical VMEM (smallest)
    ceiling = max(cap - 16 * mib, 16 * mib)  # headroom for compiler-internal scratch
    want = max(32 * mib, est_bytes + 8 * mib)
    return int(min(want, ceiling))


def _build_call(B, N, C, L, Ch, H, dhp, TQ, out_dtype, weight_buffering):
    Hdp = H * dhp
    NT = N // TQ

    def const_spec(shape):
        ndim = len(shape)
        imap = lambda b, qi, _n=ndim: (0,) * _n
        if weight_buffering:
            # Grid-invariant operands: single-buffer (no double-buffer VMEM waste).
            return pl.BlockSpec(shape, imap, pipeline_mode=pl.Buffered(1))
        return pl.BlockSpec(shape, imap)

    if weight_buffering:
        x_full_spec = pl.BlockSpec((1, N, C), lambda b, qi: (b, 0, 0),
                                   pipeline_mode=pl.Buffered(1))
    else:
        x_full_spec = pl.BlockSpec((1, N, C), lambda b, qi: (b, 0, 0))

    in_specs = [
        pl.BlockSpec((1, TQ, C), lambda b, qi: (b, qi, 0)),   # x (query tile)
        x_full_spec,                                          # x (full seq, K/V precompute)
        pl.BlockSpec((1, L, C), lambda b, qi: (b, 0, 0)),     # y
        pl.BlockSpec((1, 6, C), lambda b, qi: (b, 0, 0)),     # t (adaLN-single)
        const_spec((6, C)),                                   # scale_shift_table
        const_spec((C, Hdp)), const_spec((1, Hdp)),           # self-attn Q (padded heads)
        const_spec((C, Hdp)), const_spec((1, Hdp)),           # self-attn K
        const_spec((C, Hdp)), const_spec((1, Hdp)),           # self-attn V
        const_spec((Hdp, C)), const_spec((1, C)),             # self-attn out proj
        const_spec((C, Hdp)), const_spec((1, Hdp)),           # cross Q
        const_spec((C, Hdp)), const_spec((1, Hdp)),           # cross K
        const_spec((C, Hdp)), const_spec((1, Hdp)),           # cross V
        const_spec((Hdp, C)), const_spec((1, C)),             # cross out proj
        const_spec((C, Ch)), const_spec((1, Ch)),             # mlp fc1
        const_spec((Ch, C)), const_spec((1, C)),              # mlp fc2
    ]
    grid_spec = pltpu.PrefetchScalarGridSpec(
        num_scalar_prefetch=0,
        grid=(B, NT),
        in_specs=in_specs,
        out_specs=pl.BlockSpec((1, TQ, C), lambda b, qi: (b, qi, 0)),
        scratch_shapes=[
            pltpu.VMEM((N, Hdp), jnp.bfloat16),   # self-attn K (padded flat heads)
            pltpu.VMEM((N, Hdp), jnp.bfloat16),   # self-attn V
            pltpu.VMEM((L, Hdp), jnp.bfloat16),   # cross-attn K
            pltpu.VMEM((L, Hdp), jnp.bfloat16),   # cross-attn V
        ],
    )
    vmem_limit = _pick_vmem_limit(
        _estimate_vmem_bytes(N, C, L, Ch, Hdp, TQ, weight_buffering))
    return pl.pallas_call(
        functools.partial(sana_ums_block_kernel, H, dhp, TQ),
        out_shape=jax.ShapeDtypeStruct((B, N, C), out_dtype),
        grid_spec=grid_spec,
        compiler_params=pltpu.CompilerParams(
            # B 'parallel' (megacore); qi must be 'arbitrary' (scratch filled at qi==0).
            dimension_semantics=("parallel", "arbitrary"),
            vmem_limit_bytes=vmem_limit,
        ),
    )


def _prepare_weights(params, H, dh, dhp):
    """Reshape/zero-pad weights wrapper-side so every head slab is 128-lane aligned."""
    C = params["w_q"].shape[0]

    def pad_cols(w):   # (C, H*dh) -> (C, H*dhp)
        w3 = jnp.pad(w.reshape(C, H, dh), ((0, 0), (0, 0), (0, dhp - dh)))
        return w3.reshape(C, H * dhp)

    def pad_bias(b):   # (1, H*dh) -> (1, H*dhp)
        b3 = jnp.pad(b.reshape(1, H, dh), ((0, 0), (0, 0), (0, dhp - dh)))
        return b3.reshape(1, H * dhp)

    def pad_rows(w):   # (H*dh, C) -> (H*dhp, C)
        w3 = jnp.pad(w.reshape(H, dh, C), ((0, 0), (0, dhp - dh), (0, 0)))
        return w3.reshape(H * dhp, C)

    w_qkv, b_qkv = params["w_qkv"], params["b_qkv"]
    w_kv, b_kv = params["w_kv"], params["b_kv"]
    return dict(
        wq=pad_cols(w_qkv[:, :C]),        bq=pad_bias(b_qkv[:, :C]),
        wk=pad_cols(w_qkv[:, C:2 * C]),   bk=pad_bias(b_qkv[:, C:2 * C]),
        wv=pad_cols(w_qkv[:, 2 * C:]),    bv=pad_bias(b_qkv[:, 2 * C:]),
        wao=pad_rows(params["w_ao"]),     bao=params["b_ao"],
        wcq=pad_cols(params["w_q"]),      bcq=pad_bias(params["b_q"]),
        wck=pad_cols(w_kv[:, :C]),        bck=pad_bias(b_kv[:, :C]),
        wcv=pad_cols(w_kv[:, C:]),        bcv=pad_bias(b_kv[:, C:]),
        wco=pad_rows(params["w_co"]),     bco=params["b_co"],
    )


def sana_ums_block(x, y, t, params, num_heads, tq=256):
    B, N, C = x.shape
    L = y.shape[1]
    Ch = params["w_fc1"].shape[1]
    H = num_heads
    assert C % H == 0
    dh = C // H
    dhp = ((dh + 127) // 128) * 128          # head_dim padded to the 128-lane width
    tq = min(tq, N)
    assert N % tq == 0 and tq % 8 == 0, "N must be divisible by the query-tile size"
    # TODO(synk): pad N to a multiple of tq for shapes that do not divide evenly.

    t6 = t.reshape(B, 6, C)
    wp = _prepare_weights(params, H, dh, dhp)

    args = (x, x, y, t6, params["sst"],
            wp["wq"], wp["bq"], wp["wk"], wp["bk"], wp["wv"], wp["bv"],
            wp["wao"], wp["bao"],
            wp["wcq"], wp["bcq"], wp["wck"], wp["bck"], wp["wcv"], wp["bcv"],
            wp["wco"], wp["bco"],
            params["w_fc1"], params["b_fc1"], params["w_fc2"], params["b_fc2"])

    build = functools.partial(_build_call, B, N, C, L, Ch, H, dhp, tq, x.dtype)
    compiled = None
    try:
        # Probe only BUILD + LOWER + COMPILE of the single-buffered (Buffered(1))
        # variant; a failure here falls back to default double-buffered BlockSpecs.
        fn = build(True)
        compiled = jax.jit(fn).lower(*args).compile()
    except Exception:
        fn = build(False)
    # Actual execution is never wrapped: runtime errors surface directly.
    if compiled is not None:
        return compiled(*args)
    return fn(*args)


# ---------------- pure-JAX reference (same bf16 matmul rounding points) --------------

def _split_heads(x2d, H):
    M, C = x2d.shape
    dh = C // H
    return x2d.reshape(M, H, dh).transpose(1, 0, 2)


def _mha_batched_ref(q3, k3, v3):
    s = jnp.einsum('hqd,hkd->hqk', q3, k3, preferred_element_type=jnp.float32)
    m = jnp.max(s, axis=-1, keepdims=True)
    e = jnp.exp(s - m)
    p = e / jnp.sum(e, axis=-1, keepdims=True)
    return jnp.einsum('hqk,hkd->hqd', p.astype(v3.dtype), v3,
                      preferred_element_type=jnp.float32)


def _head_merge_proj_ref(o3, w_h, b):
    return jnp.einsum('hqd,hdc->qc', o3.astype(w_h.dtype), w_h,
                      preferred_element_type=jnp.float32) + b


def sana_ums_block_ref(x, y, t, params, num_heads):
    B, N, C = x.shape
    H = num_heads
    dh = C // H
    scale = dh ** -0.5
    bf16 = jnp.bfloat16
    t6 = t.reshape(B, 6, C)
    w_ao_h = params["w_ao"].reshape(H, dh, C)
    w_co_h = params["w_co"].reshape(H, dh, C)
    outs = []
    for b in range(B):
        xb = x[b].astype(jnp.float32)
        yb = y[b].astype(jnp.float32)
        ss = params["sst"] + t6[b]
        sh_msa, sc_msa, g_msa = ss[0:1], ss[1:2], ss[2:3]
        sh_mlp, sc_mlp, g_mlp = ss[3:4], ss[4:5], ss[5:6]

        xfm = _layernorm(xb) * (1.0 + sc_msa) + sh_msa
        qkv = _mm(xfm, params["w_qkv"], params["b_qkv"])
        q3 = _split_heads(qkv[:, :C] * scale, H).astype(bf16)
        k3 = _split_heads(qkv[:, C:2 * C], H).astype(bf16)
        v3 = _split_heads(qkv[:, 2 * C:], H).astype(bf16)
        a3 = _mha_batched_ref(q3, k3, v3)
        xb = xb + g_msa * _head_merge_proj_ref(a3, w_ao_h, params["b_ao"])

        cq = _mm(xb, params["w_q"], params["b_q"])
        cq3 = _split_heads(cq * scale, H).astype(bf16)
        ykv = _mm(yb, params["w_kv"], params["b_kv"])
        ky3 = _split_heads(ykv[:, :C], H).astype(bf16)
        vy3 = _split_heads(ykv[:, C:], H).astype(bf16)
        c3 = _mha_batched_ref(cq3, ky3, vy3)
        xb = xb + _head_merge_proj_ref(c3, w_co_h, params["b_co"])

        xm2 = _layernorm(xb) * (1.0 + sc_mlp) + sh_mlp
        hdn = _gelu_tanh(_mm(xm2, params["w_fc1"], params["b_fc1"]))
        xb = xb + g_mlp * _mm(hdn, params["w_fc2"], params["b_fc2"])
        outs.append(xb)
    return jnp.stack(outs, axis=0)


# ---------------- params -------------------------------------------------------------

def init_params(key, C, mlp_ratio=4.0):
    Ch = int(C * mlp_ratio)
    keys = jax.random.split(key, 15)
    s = 0.02

    def w(k, shape):     # weights stored bf16 (matmul operands)
        return (jax.random.normal(k, shape, jnp.float32) * s).astype(jnp.bfloat16)

    def bias(k, shape):  # biases / modulation table stay f32
        return jax.random.normal(k, shape, jnp.float32) * s

    return {
        "sst":   jax.random.normal(keys[0], (6, C), jnp.float32) / (C ** 0.5),
        "w_qkv": w(keys[1], (C, 3 * C)),  "b_qkv": bias(keys[2], (1, 3 * C)),
        "w_ao":  w(keys[3], (C, C)),      "b_ao":  bias(keys[4], (1, C)),
        "w_q":   w(keys[5], (C, C)),      "b_q":   bias(keys[6], (1, C)),
        "w_kv":  w(keys[7], (C, 2 * C)),  "b_kv":  bias(keys[8], (1, 2 * C)),
        "w_co":  w(keys[9], (C, C)),      "b_co":  bias(keys[10], (1, C)),
        "w_fc1": w(keys[11], (C, Ch)),    "b_fc1": bias(keys[12], (1, Ch)),
        "w_fc2": w(keys[13], (Ch, C)),    "b_fc2": bias(keys[14], (1, C)),
    }


# ---------------- main ---------------------------------------------------------------

if __name__ == "__main__":
    B, N, C = 2, 64, 32      # batch, image tokens, hidden
    L = 8                    # text tokens (cross-attn context)
    num_heads = 4            # head_dim = 8 (padded to 128 lanes inside the kernel)
    TQ = 32                  # query tile (N // TQ = 2 grid steps per batch element)

    key = jax.random.PRNGKey(0)
    kx, ky_, kt, kp = jax.random.split(key, 4)
    x = jax.random.normal(kx, (B, N, C), jnp.float32)
    y = jax.random.normal(ky_, (B, L, C), jnp.float32)
    t = jax.random.normal(kt, (B, 6 * C), jnp.float32)
    params = init_params(kp, C)

    out = sana_ums_block(x, y, t, params, num_heads, tq=TQ)
    out = jax.block_until_ready(out)

    ref = sana_ums_block_ref(x, y, t, params, num_heads)
    assert out.shape == (B, N, C)
    assert jnp.allclose(out, ref, atol=1e-2, rtol=1e-2), "mismatch vs reference"

    print("KERNEL_OK")
</pallas_src>

<mosaic_0001>
module attributes {stable_mosaic.version = 11 : i64} {
  func.func @sana_ums_block_kernel(%arg0: i32, %arg1: i32, %arg2: memref<1x32x32xf32, #tpu.memory_space<vmem>>, %arg3: memref<1x64x32xf32, #tpu.memory_space<vmem>>, %arg4: memref<1x8x32xf32, #tpu.memory_space<vmem>>, %arg5: memref<1x6x32xf32, #tpu.memory_space<vmem>>, %arg6: memref<6x32xf32, #tpu.memory_space<vmem>>, %arg7: memref<32x512xbf16, #tpu.memory_space<vmem>>, %arg8: memref<1x512xf32, #tpu.memory_space<vmem>>, %arg9: memref<32x512xbf16, #tpu.memory_space<vmem>>, %arg10: memref<1x512xf32, #tpu.memory_space<vmem>>, %arg11: memref<32x512xbf16, #tpu.memory_space<vmem>>, %arg12: memref<1x512xf32, #tpu.memory_space<vmem>>, %arg13: memref<512x32xbf16, #tpu.memory_space<vmem>>, %arg14: memref<1x32xf32, #tpu.memory_space<vmem>>, %arg15: memref<32x512xbf16, #tpu.memory_space<vmem>>, %arg16: memref<1x512xf32, #tpu.memory_space<vmem>>, %arg17: memref<32x512xbf16, #tpu.memory_space<vmem>>, %arg18: memref<1x512xf32, #tpu.memory_space<vmem>>, %arg19: memref<32x512xbf16, #tpu.memory_space<vmem>>, %arg20: memref<1x512xf32, #tpu.memory_space<vmem>>, %arg21: memref<512x32xbf16, #tpu.memory_space<vmem>>, %arg22: memref<1x32xf32, #tpu.memory_space<vmem>>, %arg23: memref<32x128xbf16, #tpu.memory_space<vmem>>, %arg24: memref<1x128xf32, #tpu.memory_space<vmem>>, %arg25: memref<128x32xbf16, #tpu.memory_space<vmem>>, %arg26: memref<1x32xf32, #tpu.memory_space<vmem>>, %arg27: memref<1x32x32xf32, #tpu.memory_space<vmem>>, %arg28: memref<64x512xbf16, #tpu.memory_space<vmem>>, %arg29: memref<64x512xbf16, #tpu.memory_space<vmem>>, %arg30: memref<8x512xbf16, #tpu.memory_space<vmem>>, %arg31: memref<8x512xbf16, #tpu.memory_space<vmem>>) attributes {dimension_semantics = [#tpu.dimension_semantics<parallel>, #tpu.dimension_semantics<arbitrary>], iteration_bounds = array<i64: 2, 2>, scalar_prefetch = 0 : i64, scratch_operands = 4 : i64, tpu.core_type = #tpu.core_type<tc>, window_params = [{transform_indices = @transform_0, window_bounds = array<i64: 1, 32, 32>}, {transform_indices = @transform_1, window_bounds = array<i64: 1, 64, 32>}, {transform_indices = @transform_2, window_bounds = array<i64: 1, 8, 32>}, {transform_indices = @transform_3, window_bounds = array<i64: 1, 6, 32>}, {pipeline_mode = #tpu.pipeline_mode<synchronous>, transform_indices = @transform_4, window_bounds = array<i64: 6, 32>}, {pipeline_mode = #tpu.pipeline_mode<synchronous>, transform_indices = @transform_5, window_bounds = array<i64: 32, 512>}, {pipeline_mode = #tpu.pipeline_mode<synchronous>, transform_indices = @transform_6, window_bounds = array<i64: 1, 512>}, {pipeline_mode = #tpu.pipeline_mode<synchronous>, transform_indices = @transform_7, window_bounds = array<i64: 32, 512>}, {pipeline_mode = #tpu.pipeline_mode<synchronous>, transform_indices = @transform_8, window_bounds = array<i64: 1, 512>}, {pipeline_mode = #tpu.pipeline_mode<synchronous>, transform_indices = @transform_9, window_bounds = array<i64: 32, 512>}, {pipeline_mode = #tpu.pipeline_mode<synchronous>, transform_indices = @transform_10, window_bounds = array<i64: 1, 512>}, {pipeline_mode = #tpu.pipeline_mode<synchronous>, transform_indices = @transform_11, window_bounds = array<i64: 512, 32>}, {pipeline_mode = #tpu.pipeline_mode<synchronous>, transform_indices = @transform_12, window_bounds = array<i64: 1, 32>}, {pipeline_mode = #tpu.pipeline_mode<synchronous>, transform_indices = @transform_13, window_bounds = array<i64: 32, 512>}, {pipeline_mode = #tpu.pipeline_mode<synchronous>, transform_indices = @transform_14, window_bounds = array<i64: 1, 512>}, {pipeline_mode = #tpu.pipeline_mode<synchronous>, transform_indices = @transform_15, window_bounds = array<i64: 32, 512>}, {pipeline_mode = #tpu.pipeline_mode<synchronous>, transform_indices = @transform_16, window_bounds = array<i64: 1, 512>}, {pipeline_mode = #tpu.pipeline_mode<synchronous>, transform_indices = @transform_17, window_bounds = array<i64: 32, 512>}, {pipeline_mode = #tpu.pipeline_mode<synchronous>, transform_indices = @transform_18, window_bounds = array<i64: 1, 512>}, {pipeline_mode = #tpu.pipeline_mode<synchronous>, transform_indices = @transform_19, window_bounds = array<i64: 512, 32>}, {pipeline_mode = #tpu.pipeline_mode<synchronous>, transform_indices = @transform_20, window_bounds = array<i64: 1, 32>}, {pipeline_mode = #tpu.pipeline_mode<synchronous>, transform_indices = @transform_21, window_bounds = array<i64: 32, 128>}, {pipeline_mode = #tpu.pipeline_mode<synchronous>, transform_indices = @transform_22, window_bounds = array<i64: 1, 128>}, {pipeline_mode = #tpu.pipeline_mode<synchronous>, transform_indices = @transform_23, window_bounds = array<i64: 128, 32>}, {pipeline_mode = #tpu.pipeline_mode<synchronous>, transform_indices = @transform_24, window_bounds = array<i64: 1, 32>}, {transform_indices = @transform_25, window_bounds = array<i64: 1, 32, 32>}]} {
    %c0 = arith.constant 0 : index
    %c0_0 = arith.constant 0 : index
    %0 = vector.load %arg6[%c0, %c0_0] : memref<6x32xf32, #tpu.memory_space<vmem>>, vector<6x32xf32>
    %c0_1 = arith.constant 0 : index
    %c0_2 = arith.constant 0 : index
    %c0_3 = arith.constant 0 : index
    %1 = vector.load %arg5[%c0_1, %c0_2, %c0_3] : memref<1x6x32xf32, #tpu.memory_space<vmem>>, vector<1x6x32xf32>
    %2 = vector.shape_cast %1 : vector<1x6x32xf32> to vector<6x32xf32>
    %3 = arith.addf %0, %2 : vector<6x32xf32>
    %4 = vector.extract_strided_slice %3 {offsets = [0, 0], sizes = [1, 32], strides = [1, 1]} : vector<6x32xf32> to vector<1x32xf32>
    %5 = vector.extract_strided_slice %3 {offsets = [1, 0], sizes = [1, 32], strides = [1, 1]} : vector<6x32xf32> to vector<1x32xf32>
    %6 = vector.extract_strided_slice %3 {offsets = [2, 0], sizes = [1, 32], strides = [1, 1]} : vector<6x32xf32> to vector<1x32xf32>
    %7 = vector.extract_strided_slice %3 {offsets = [3, 0], sizes = [1, 32], strides = [1, 1]} : vector<6x32xf32> to vector<1x32xf32>
    %8 = vector.extract_strided_slice %3 {offsets = [4, 0], sizes = [1, 32], strides = [1, 1]} : vector<6x32xf32> to vector<1x32xf32>
    %9 = vector.extract_strided_slice %3 {offsets = [5, 0], sizes = [1, 32], strides = [1, 1]} : vector<6x32xf32> to vector<1x32xf32>
    %c0_i32 = arith.constant 0 : i32
    %10 = arith.cmpi eq, %arg1, %c0_i32 : i32
    %11 = arith.extui %10 : i1 to i32
    %c0_i32_4 = arith.constant 0 : i32
    %12 = arith.cmpi ne, %11, %c0_i32_4 : i32
    scf.if %12 {
      %c0_119 = arith.constant 0 : index
      %c0_120 = arith.constant 0 : index
      %c0_121 = arith.constant 0 : index
      %260 = vector.load %arg4[%c0_119, %c0_120, %c0_121] : memref<1x8x32xf32, #tpu.memory_space<vmem>>, vector<1x8x32xf32>
      %261 = vector.shape_cast %260 : vector<1x8x32xf32> to vector<8x32xf32>
      %262 = arith.truncf %261 : vector<8x32xf32> to vector<8x32xbf16>
      %c0_122 = arith.constant 0 : index
      %c0_123 = arith.constant 0 : index
      %263 = vector.load %arg17[%c0_122, %c0_123] : memref<32x512xbf16, #tpu.memory_space<vmem>>, vector<32x512xbf16>
      %cst_124 = arith.constant dense<0.000000e+00> : vector<8x512xf32>
      %264 = tpu.matmul %262, %263, %cst_124 {dimension_numbers = #tpu.dot_dimension_numbers<[1], [0], [0], [1], [0, 0, 1, 1], [], []>} : vector<8x32xbf16>, vector<32x512xbf16>, vector<8x512xf32> -> vector<8x512xf32>
      %c0_125 = arith.constant 0 : index
      %c0_126 = arith.constant 0 : index
      %265 = vector.load %arg18[%c0_125, %c0_126] : memref<1x512xf32, #tpu.memory_space<vmem>>, vector<1x512xf32>
      %266 = vector.broadcast %265 : vector<1x512xf32> to vector<8x512xf32>
      %267 = arith.addf %264, %266 : vector<8x512xf32>
      %268 = arith.truncf %267 : vector<8x512xf32> to vector<8x512xbf16>
      %c0_127 = arith.constant 0 : index
      %c0_128 = arith.constant 0 : index
      %269 = vector.load %arg30[%c0_127, %c0_128] : memref<8x512xbf16, #tpu.memory_space<vmem>>, vector<8x512xbf16>
      tpu.vector_store %arg30[%c0_127, %c0_128], %268 {strides = array<i32>} : memref<8x512xbf16, #tpu.memory_space<vmem>>, vector<8x512xbf16>,
      %c0_129 = arith.constant 0 : index
      %c0_130 = arith.constant 0 : index
      %270 = vector.load %arg19[%c0_129, %c0_130] : memref<32x512xbf16, #tpu.memory_space<vmem>>, vector<32x512xbf16>
      %cst_131 = arith.constant dense<0.000000e+00> : vector<8x512xf32>
      %271 = tpu.matmul %262, %270, %cst_131 {dimension_numbers = #tpu.dot_dimension_numbers<[1], [0], [0], [1], [0, 0, 1, 1], [], []>} : vector<8x32xbf16>, vector<32x512xbf16>, vector<8x512xf32> -> vector<8x512xf32>
      %c0_132 = arith.constant 0 : index
      %c0_133 = arith.constant 0 : index
      %272 = vector.load %arg20[%c0_132, %c0_133] : memref<1x512xf32, #tpu.memory_space<vmem>>, vector<1x512xf32>
      %273 = vector.broadcast %272 : vector<1x512xf32> to vector<8x512xf32>
      %274 = arith.addf %271, %273 : vector<8x512xf32>
      %275 = arith.truncf %274 : vector<8x512xf32> to vector<8x512xbf16>
      %c0_134 = arith.constant 0 : index
      %c0_135 = arith.constant 0 : index
      %276 = vector.load %arg31[%c0_134, %c0_135] : memref<8x512xbf16, #tpu.memory_space<vmem>>, vector<8x512xbf16>
      tpu.vector_store %arg31[%c0_134, %c0_135], %275 {strides = array<i32>} : memref<8x512xbf16, #tpu.memory_space<vmem>>, vector<8x512xbf16>,
      %c0_i32_136 = arith.constant 0 : i32
      %c2_i32 = arith.constant 2 : i32
      %277 = arith.addi %c0_i32_136, %c2_i32 : i32
      %c1_i32 = arith.constant 1 : i32
      scf.for %arg32 = %c0_i32_136 to %277 step %c1_i32  : i32 {
        %c32_i32 = arith.constant 32 : i32
        %278 = arith.muli %arg32, %c32_i32 : i32
        %279 = tpu.assume_multiple %278, 32 : i32
        %c0_138 = arith.constant 0 : index
        %280 = arith.index_cast %279 : i32 to index
        %c0_139 = arith.constant 0 : index
        %281 = vector.load %arg3[%c0_138, %280, %c0_139] : memref<1x64x32xf32, #tpu.memory_space<vmem>>, vector<1x32x32xf32>
        %282 = vector.shape_cast %281 : vector<1x32x32xf32> to vector<32x32xf32>
        %cst_140 = arith.constant dense<0.000000e+00> : vector<32xf32>
        %283 = vector.multi_reduction <add>, %282, %cst_140 [1] : vector<32x32xf32> to vector<32xf32>
        %284 = vector.shape_cast %283 : vector<32xf32> to vector<32x1xf32>
        %cst_141 = arith.constant 3.200000e+01 : f32
        %285 = vector.broadcast %cst_141 : f32 to vector<32x1xf32>
        %286 = arith.divf %284, %285 : vector<32x1xf32>
        %287 = vector.broadcast %286 : vector<32x1xf32> to vector<32x32xf32>
        %288 = arith.subf %282, %287 : vector<32x32xf32>
        %289 = arith.mulf %288, %288 : vector<32x32xf32>
        %cst_142 = arith.constant dense<0.000000e+00> : vector<32xf32>
        %290 = vector.multi_reduction <add>, %289, %cst_142 [1] : vector<32x32xf32> to vector<32xf32>
        %291 = vector.shape_cast %290 : vector<32xf32> to vector<32x1xf32>
        %cst_143 = arith.constant 3.200000e+01 : f32
        %292 = vector.broadcast %cst_143 : f32 to vector<32x1xf32>
        %293 = arith.divf %291, %292 : vector<32x1xf32>
        %cst_144 = arith.constant 9.99999997E-7 : f32
        %294 = vector.broadcast %cst_144 : f32 to vector<32x1xf32>
        %295 = arith.addf %293, %294 : vector<32x1xf32>
        %296 = math.rsqrt %295 : vector<32x1xf32>
        %297 = vector.broadcast %296 : vector<32x1xf32> to vector<32x32xf32>
        %298 = arith.mulf %288, %297 : vector<32x32xf32>
        %cst_145 = arith.constant 1.000000e+00 : f32
        %299 = vector.broadcast %cst_145 : f32 to vector<1x32xf32>
        %300 = arith.addf %299, %5 : vector<1x32xf32>
        %301 = vector.broadcast %300 : vector<1x32xf32> to vector<32x32xf32>
        %302 = arith.mulf %298, %301 : vector<32x32xf32>
        %303 = vector.broadcast %4 : vector<1x32xf32> to vector<32x32xf32>
        %304 = arith.addf %302, %303 : vector<32x32xf32>
        %305 = arith.truncf %304 : vector<32x32xf32> to vector<32x32xbf16>
        %c0_146 = arith.constant 0 : index
        %c0_147 = arith.constant 0 : index
        %306 = vector.load %arg9[%c0_146, %c0_147] : memref<32x512xbf16, #tpu.memory_space<vmem>>, vector<32x512xbf16>
        %cst_148 = arith.constant dense<0.000000e+00> : vector<32x512xf32>
        %307 = tpu.matmul %305, %306, %cst_148 {dimension_numbers = #tpu.dot_dimension_numbers<[1], [0], [0], [1], [0, 0, 1, 1], [], []>} : vector<32x32xbf16>, vector<32x512xbf16>, vector<32x512xf32> -> vector<32x512xf32>
        %c0_149 = arith.constant 0 : index
        %c0_150 = arith.constant 0 : index
        %308 = vector.load %arg10[%c0_149, %c0_150] : memref<1x512xf32, #tpu.memory_space<vmem>>, vector<1x512xf32>
        %309 = vector.broadcast %308 : vector<1x512xf32> to vector<32x512xf32>
        %310 = arith.addf %307, %309 : vector<32x512xf32>
        %311 = arith.truncf %310 : vector<32x512xf32> to vector<32x512xbf16>
        %312 = arith.index_cast %279 : i32 to index
        %c0_151 = arith.constant 0 : index
        %313 = vector.load %arg28[%312, %c0_151] : memref<64x512xbf16, #tpu.memory_space<vmem>>, vector<32x512xbf16>
        tpu.vector_store %arg28[%312, %c0_151], %311 {strides = array<i32>} : memref<64x512xbf16, #tpu.memory_space<vmem>>, vector<32x512xbf16>,
        %c0_152 = arith.constant 0 : index
        %c0_153 = arith.constant 0 : index
        %314 = vector.load %arg11[%c0_152, %c0_153] : memref<32x512xbf16, #tpu.memory_space<vmem>>, vector<32x512xbf16>
        %cst_154 = arith.constant dense<0.000000e+00> : vector<32x512xf32>
        %315 = tpu.matmul %305, %314, %cst_154 {dimension_numbers = #tpu.dot_dimension_numbers<[1], [0], [0], [1], [0, 0, 1, 1], [], []>} : vector<32x32xbf16>, vector<32x512xbf16>, vector<32x512xf32> -> vector<32x512xf32>
        %c0_155 = arith.constant 0 : index
        %c0_156 = arith.constant 0 : index
        %316 = vector.load %arg12[%c0_155, %c0_156] : memref<1x512xf32, #tpu.memory_space<vmem>>, vector<1x512xf32>
        %317 = vector.broadcast %316 : vector<1x512xf32> to vector<32x512xf32>
        %318 = arith.addf %315, %317 : vector<32x512xf32>
        %319 = arith.truncf %318 : vector<32x512xf32> to vector<32x512xbf16>
        %320 = arith.index_cast %279 : i32 to index
        %c0_157 = arith.constant 0 : index
        %321 = vector.load %arg29[%320, %c0_157] : memref<64x512xbf16, #tpu.memory_space<vmem>>, vector<32x512xbf16>
        tpu.vector_store %arg29[%320, %c0_157], %319 {strides = array<i32>} : memref<64x512xbf16, #tpu.memory_space<vmem>>, vector<32x512xbf16>,
      }
      %c2_i32_137 = arith.constant 2 : i32
    } else {
    }
    %c0_5 = arith.constant 0 : index
    %c0_6 = arith.constant 0 : index
    %c0_7 = arith.constant 0 : index
    %13 = vector.load %arg2[%c0_5, %c0_6, %c0_7] : memref<1x32x32xf32, #tpu.memory_space<vmem>>, vector<1x32x32xf32>
    %14 = vector.shape_cast %13 : vector<1x32x32xf32> to vector<32x32xf32>
    %cst = arith.constant dense<0.000000e+00> : vector<32xf32>
    %15 = vector.multi_reduction <add>, %14, %cst [1] : vector<32x32xf32> to vector<32xf32>
    %16 = vector.shape_cast %15 : vector<32xf32> to vector<32x1xf32>
    %cst_8 = arith.constant 3.200000e+01 : f32
    %17 = vector.broadcast %cst_8 : f32 to vector<32x1xf32>
    %18 = arith.divf %16, %17 : vector<32x1xf32>
    %19 = vector.broadcast %18 : vector<32x1xf32> to vector<32x32xf32>
    %20 = arith.subf %14, %19 : vector<32x32xf32>
    %21 = arith.mulf %20, %20 : vector<32x32xf32>
    %cst_9 = arith.constant dense<0.000000e+00> : vector<32xf32>
    %22 = vector.multi_reduction <add>, %21, %cst_9 [1] : vector<32x32xf32> to vector<32xf32>
    %23 = vector.shape_cast %22 : vector<32xf32> to vector<32x1xf32>
    %cst_10 = arith.constant 3.200000e+01 : f32
    %24 = vector.broadcast %cst_10 : f32 to vector<32x1xf32>
    %25 = arith.divf %23, %24 : vector<32x1xf32>
    %cst_11 = arith.constant 9.99999997E-7 : f32
    %26 = vector.broadcast %cst_11 : f32 to vector<32x1xf32>
    %27 = arith.addf %25, %26 : vector<32x1xf32>
    %28 = math.rsqrt %27 : vector<32x1xf32>
    %29 = vector.broadcast %28 : vector<32x1xf32> to vector<32x32xf32>
    %30 = arith.mulf %20, %29 : vector<32x32xf32>
    %cst_12 = arith.constant 1.000000e+00 : f32
    %31 = vector.broadcast %cst_12 : f32 to vector<1x32xf32>
    %32 = arith.addf %31, %5 : vector<1x32xf32>
    %33 = vector.broadcast %32 : vector<1x32xf32> to vector<32x32xf32>
    %34 = arith.mulf %30, %33 : vector<32x32xf32>
    %35 = vector.broadcast %4 : vector<1x32xf32> to vector<32x32xf32>
    %36 = arith.addf %34, %35 : vector<32x32xf32>
    %37 = arith.truncf %36 : vector<32x32xf32> to vector<32x32xbf16>
    %c0_13 = arith.constant 0 : index
    %c0_14 = arith.constant 0 : index
    %38 = vector.load %arg7[%c0_13, %c0_14] : memref<32x512xbf16, #tpu.memory_space<vmem>>, vector<32x512xbf16>
    %cst_15 = arith.constant dense<0.000000e+00> : vector<32x512xf32>
    %39 = tpu.matmul %37, %38, %cst_15 {dimension_numbers = #tpu.dot_dimension_numbers<[1], [0], [0], [1], [0, 0, 1, 1], [], []>} : vector<32x32xbf16>, vector<32x512xbf16>, vector<32x512xf32> -> vector<32x512xf32>
    %c0_16 = arith.constant 0 : index
    %c0_17 = arith.constant 0 : index
    %40 = vector.load %arg8[%c0_16, %c0_17] : memref<1x512xf32, #tpu.memory_space<vmem>>, vector<1x512xf32>
    %41 = vector.broadcast %40 : vector<1x512xf32> to vector<32x512xf32>
    %42 = arith.addf %39, %41 : vector<32x512xf32>
    %cst_18 = arith.constant 0.353553385 : f32
    %43 = vector.broadcast %cst_18 : f32 to vector<32x512xf32>
    %44 = arith.mulf %42, %43 : vector<32x512xf32>
    %45 = arith.truncf %44 : vector<32x512xf32> to vector<32x512xbf16>
    %46 = vector.extract_strided_slice %45 {offsets = [0, 0], sizes = [32, 128], strides = [1, 1]} : vector<32x512xbf16> to vector<32x128xbf16>
    %c0_19 = arith.constant 0 : index
    %c0_20 = arith.constant 0 : index
    %47 = vector.load %arg28[%c0_19, %c0_20] : memref<64x512xbf16, #tpu.memory_space<vmem>>, vector<64x128xbf16>
    %c0_21 = arith.constant 0 : index
    %c0_22 = arith.constant 0 : index
    %48 = vector.load %arg29[%c0_21, %c0_22] : memref<64x512xbf16, #tpu.memory_space<vmem>>, vector<64x128xbf16>
    "tpu.trace_start"() <{level = 10 : i32, message = "qd,kd->qk"}> : () -> ()
    %cst_23 = arith.constant dense<0.000000e+00> : vector<32x64xf32>
    %49 = tpu.matmul %46, %47, %cst_23 {dimension_numbers = #tpu.dot_dimension_numbers<[1], [1], [0], [0], [0, 0, 1, 0], [], []>} : vector<32x128xbf16>, vector<64x128xbf16>, vector<32x64xf32> -> vector<32x64xf32>
    "tpu.trace_stop"() : () -> ()
    %cst_24 = arith.constant dense<0xFF800000> : vector<32xf32>
    %50 = vector.multi_reduction <maximumf>, %49, %cst_24 [1] : vector<32x64xf32> to vector<32xf32>
    %51 = vector.shape_cast %50 : vector<32xf32> to vector<32x1xf32>
    %52 = vector.broadcast %51 : vector<32x1xf32> to vector<32x64xf32>
    %53 = arith.subf %49, %52 : vector<32x64xf32>
    %54 = math.exp %53 : vector<32x64xf32>
    %cst_25 = arith.constant dense<0.000000e+00> : vector<32xf32>
    %55 = vector.multi_reduction <add>, %54, %cst_25 [1] : vector<32x64xf32> to vector<32xf32>
    %56 = vector.shape_cast %55 : vector<32xf32> to vector<32x1xf32>
    %57 = tpu.reciprocal %56 {approx = true} : vector<32x1xf32> -> vector<32x1xf32>
    %58 = vector.broadcast %57 : vector<32x1xf32> to vector<32x64xf32>
    %59 = arith.mulf %54, %58 : vector<32x64xf32>
    %60 = arith.truncf %59 : vector<32x64xf32> to vector<32x64xbf16>
    %cst_26 = arith.constant dense<0.000000e+00> : vector<32x128xf32>
    %61 = tpu.matmul %60, %48, %cst_26 {dimension_numbers = #tpu.dot_dimension_numbers<[1], [0], [0], [1], [0, 0, 1, 1], [], []>} : vector<32x64xbf16>, vector<64x128xbf16>, vector<32x128xf32> -> vector<32x128xf32>
    %62 = arith.truncf %61 : vector<32x128xf32> to vector<32x128xbf16>
    %63 = vector.extract_strided_slice %45 {offsets = [0, 128], sizes = [32, 128], strides = [1, 1]} : vector<32x512xbf16> to vector<32x128xbf16>
    %c0_27 = arith.constant 0 : index
    %c128 = arith.constant 128 : index
    %64 = vector.load %arg28[%c0_27, %c128] : memref<64x512xbf16, #tpu.memory_space<vmem>>, vector<64x128xbf16>
    %c0_28 = arith.constant 0 : index
    %c128_29 = arith.constant 128 : index
    %65 = vector.load %arg29[%c0_28, %c128_29] : memref<64x512xbf16, #tpu.memory_space<vmem>>, vector<64x128xbf16>
    "tpu.trace_start"() <{level = 10 : i32, message = "qd,kd->qk"}> : () -> ()
    %cst_30 = arith.constant dense<0.000000e+00> : vector<32x64xf32>
    %66 = tpu.matmul %63, %64, %cst_30 {dimension_numbers = #tpu.dot_dimension_numbers<[1], [1], [0], [0], [0, 0, 1, 0], [], []>} : vector<32x128xbf16>, vector<64x128xbf16>, vector<32x64xf32> -> vector<32x64xf32>
    "tpu.trace_stop"() : () -> ()
    %cst_31 = arith.constant dense<0xFF800000> : vector<32xf32>
    %67 = vector.multi_reduction <maximumf>, %66, %cst_31 [1] : vector<32x64xf32> to vector<32xf32>
    %68 = vector.shape_cast %67 : vector<32xf32> to vector<32x1xf32>
    %69 = vector.broadcast %68 : vector<32x1xf32> to vector<32x64xf32>
    %70 = arith.subf %66, %69 : vector<32x64xf32>
    %71 = math.exp %70 : vector<32x64xf32>
    %cst_32 = arith.constant dense<0.000000e+00> : vector<32xf32>
    %72 = vector.multi_reduction <add>, %71, %cst_32 [1] : vector<32x64xf32> to vector<32xf32>
    %73 = vector.shape_cast %72 : vector<32xf32> to vector<32x1xf32>
    %74 = tpu.reciprocal %73 {approx = true} : vector<32x1xf32> -> vector<32x1xf32>
    %75 = vector.broadcast %74 : vector<32x1xf32> to vector<32x64xf32>
    %76 = arith.mulf %71, %75 : vector<32x64xf32>
    %77 = arith.truncf %76 : vector<32x64xf32> to vector<32x64xbf16>
    %cst_33 = arith.constant dense<0.000000e+00> : vector<32x128xf32>
    %78 = tpu.matmul %77, %65, %cst_33 {dimension_numbers = #tpu.dot_dimension_numbers<[1], [0], [0], [1], [0, 0, 1, 1], [], []>} : vector<32x64xbf16>, vector<64x128xbf16>, vector<32x128xf32> -> vector<32x128xf32>
    %79 = arith.truncf %78 : vector<32x128xf32> to vector<32x128xbf16>
    %80 = vector.extract_strided_slice %45 {offsets = [0, 256], sizes = [32, 128], strides = [1, 1]} : vector<32x512xbf16> to vector<32x128xbf16>
    %c0_34 = arith.constant 0 : index
    %c256 = arith.constant 256 : index
    %81 = vector.load %arg28[%c0_34, %c256] : memref<64x512xbf16, #tpu.memory_space<vmem>>, vector<64x128xbf16>
    %c0_35 = arith.constant 0 : index
    %c256_36 = arith.constant 256 : index
    %82 = vector.load %arg29[%c0_35, %c256_36] : memref<64x512xbf16, #tpu.memory_space<vmem>>, vector<64x128xbf16>
    "tpu.trace_start"() <{level = 10 : i32, message = "qd,kd->qk"}> : () -> ()
    %cst_37 = arith.constant dense<0.000000e+00> : vector<32x64xf32>
    %83 = tpu.matmul %80, %81, %cst_37 {dimension_numbers = #tpu.dot_dimension_numbers<[1], [1], [0], [0], [0, 0, 1, 0], [], []>} : vector<32x128xbf16>, vector<64x128xbf16>, vector<32x64xf32> -> vector<32x64xf32>
    "tpu.trace_stop"() : () -> ()
    %cst_38 = arith.constant dense<0xFF800000> : vector<32xf32>
    %84 = vector.multi_reduction <maximumf>, %83, %cst_38 [1] : vector<32x64xf32> to vector<32xf32>
    %85 = vector.shape_cast %84 : vector<32xf32> to vector<32x1xf32>
    %86 = vector.broadcast %85 : vector<32x1xf32> to vector<32x64xf32>
    %87 = arith.subf %83, %86 : vector<32x64xf32>
    %88 = math.exp %87 : vector<32x64xf32>
    %cst_39 = arith.constant dense<0.000000e+00> : vector<32xf32>
    %89 = vector.multi_reduction <add>, %88, %cst_39 [1] : vector<32x64xf32> to vector<32xf32>
    %90 = vector.shape_cast %89 : vector<32xf32> to vector<32x1xf32>
    %91 = tpu.reciprocal %90 {approx = true} : vector<32x1xf32> -> vector<32x1xf32>
    %92 = vector.broadcast %91 : vector<32x1xf32> to vector<32x64xf32>
    %93 = arith.mulf %88, %92 : vector<32x64xf32>
    %94 = arith.truncf %93 : vector<32x64xf32> to vector<32x64xbf16>
    %cst_40 = arith.constant dense<0.000000e+00> : vector<32x128xf32>
    %95 = tpu.matmul %94, %82, %cst_40 {dimension_numbers = #tpu.dot_dimension_numbers<[1], [0], [0], [1], [0, 0, 1, 1], [], []>} : vector<32x64xbf16>, vector<64x128xbf16>, vector<32x128xf32> -> vector<32x128xf32>
    %96 = arith.truncf %95 : vector<32x128xf32> to vector<32x128xbf16>
    %97 = vector.extract_strided_slice %45 {offsets = [0, 384], sizes = [32, 128], strides = [1, 1]} : vector<32x512xbf16> to vector<32x128xbf16>
    %c0_41 = arith.constant 0 : index
    %c384 = arith.constant 384 : index
    %98 = vector.load %arg28[%c0_41, %c384] : memref<64x512xbf16, #tpu.memory_space<vmem>>, vector<64x128xbf16>
    %c0_42 = arith.constant 0 : index
    %c384_43 = arith.constant 384 : index
    %99 = vector.load %arg29[%c0_42, %c384_43] : memref<64x512xbf16, #tpu.memory_space<vmem>>, vector<64x128xbf16>
    "tpu.trace_start"() <{level = 10 : i32, message = "qd,kd->qk"}> : () -> ()
    %cst_44 = arith.constant dense<0.000000e+00> : vector<32x64xf32>
    %100 = tpu.matmul %97, %98, %cst_44 {dimension_numbers = #tpu.dot_dimension_numbers<[1], [1], [0], [0], [0, 0, 1, 0], [], []>} : vector<32x128xbf16>, vector<64x128xbf16>, vector<32x64xf32> -> vector<32x64xf32>
    "tpu.trace_stop"() : () -> ()
    %cst_45 = arith.constant dense<0xFF800000> : vector<32xf32>
    %101 = vector.multi_reduction <maximumf>, %100, %cst_45 [1] : vector<32x64xf32> to vector<32xf32>
    %102 = vector.shape_cast %101 : vector<32xf32> to vector<32x1xf32>
    %103 = vector.broadcast %102 : vector<32x1xf32> to vector<32x64xf32>
    %104 = arith.subf %100, %103 : vector<32x64xf32>
    %105 = math.exp %104 : vector<32x64xf32>
    %cst_46 = arith.constant dense<0.000000e+00> : vector<32xf32>
    %106 = vector.multi_reduction <add>, %105, %cst_46 [1] : vector<32x64xf32> to vector<32xf32>
    %107 = vector.shape_cast %106 : vector<32xf32> to vector<32x1xf32>
    %108 = tpu.reciprocal %107 {approx = true} : vector<32x1xf32> -> vector<32x1xf32>
    %109 = vector.broadcast %108 : vector<32x1xf32> to vector<32x64xf32>
    %110 = arith.mulf %105, %109 : vector<32x64xf32>
    %111 = arith.truncf %110 : vector<32x64xf32> to vector<32x64xbf16>
    %cst_47 = arith.constant dense<0.000000e+00> : vector<32x128xf32>
    %112 = tpu.matmul %111, %99, %cst_47 {dimension_numbers = #tpu.dot_dimension_numbers<[1], [0], [0], [1], [0, 0, 1, 1], [], []>} : vector<32x64xbf16>, vector<64x128xbf16>, vector<32x128xf32> -> vector<32x128xf32>
    %113 = arith.truncf %112 : vector<32x128xf32> to vector<32x128xbf16>
    %114 = tpu.concatenate %62, %79, %96, %113 in 1 : vector<32x128xbf16>, vector<32x128xbf16>, vector<32x128xbf16>, vector<32x128xbf16> -> vector<32x512xbf16>
    %c0_48 = arith.constant 0 : index
    %c0_49 = arith.constant 0 : index
    %115 = vector.load %arg13[%c0_48, %c0_49] : memref<512x32xbf16, #tpu.memory_space<vmem>>, vector<512x32xbf16>
    %cst_50 = arith.constant dense<0.000000e+00> : vector<32x32xf32>
    %116 = tpu.matmul %114, %115, %cst_50 {dimension_numbers = #tpu.dot_dimension_numbers<[1], [0], [0], [1], [0, 0, 1, 1], [], []>} : vector<32x512xbf16>, vector<512x32xbf16>, vector<32x32xf32> -> vector<32x32xf32>
    %c0_51 = arith.constant 0 : index
    %c0_52 = arith.constant 0 : index
    %117 = vector.load %arg14[%c0_51, %c0_52] : memref<1x32xf32, #tpu.memory_space<vmem>>, vector<1x32xf32>
    %118 = vector.broadcast %117 : vector<1x32xf32> to vector<32x32xf32>
    %119 = arith.addf %116, %118 : vector<32x32xf32>
    %120 = vector.broadcast %6 : vector<1x32xf32> to vector<32x32xf32>
    %121 = arith.mulf %120, %119 : vector<32x32xf32>
    %122 = arith.addf %14, %121 : vector<32x32xf32>
    %123 = arith.truncf %122 : vector<32x32xf32> to vector<32x32xbf16>
    %c0_53 = arith.constant 0 : index
    %c0_54 = arith.constant 0 : index
    %124 = vector.load %arg15[%c0_53, %c0_54] : memref<32x512xbf16, #tpu.memory_space<vmem>>, vector<32x512xbf16>
    %cst_55 = arith.constant dense<0.000000e+00> : vector<32x512xf32>
    %125 = tpu.matmul %123, %124, %cst_55 {dimension_numbers = #tpu.dot_dimension_numbers<[1], [0], [0], [1], [0, 0, 1, 1], [], []>} : vector<32x32xbf16>, vector<32x512xbf16>, vector<32x512xf32> -> vector<32x512xf32>
    %c0_56 = arith.constant 0 : index
    %c0_57 = arith.constant 0 : index
    %126 = vector.load %arg16[%c0_56, %c0_57] : memref<1x512xf32, #tpu.memory_space<vmem>>, vector<1x512xf32>
    %127 = vector.broadcast %126 : vector<1x512xf32> to vector<32x512xf32>
    %128 = arith.addf %125, %127 : vector<32x512xf32>
    %cst_58 = arith.constant 0.353553385 : f32
    %129 = vector.broadcast %cst_58 : f32 to vector<32x512xf32>
    %130 = arith.mulf %128, %129 : vector<32x512xf32>
    %131 = arith.truncf %130 : vector<32x512xf32> to vector<32x512xbf16>
    %132 = vector.extract_strided_slice %131 {offsets = [0, 0], sizes = [32, 128], strides = [1, 1]} : vector<32x512xbf16> to vector<32x128xbf16>
    %c0_59 = arith.constant 0 : index
    %c0_60 = arith.constant 0 : index
    %133 = vector.load %arg30[%c0_59, %c0_60] : memref<8x512xbf16, #tpu.memory_space<vmem>>, vector<8x128xbf16>
    %c0_61 = arith.constant 0 : index
    %c0_62 = arith.constant 0 : index
    %134 = vector.load %arg31[%c0_61, %c0_62] : memref<8x512xbf16, #tpu.memory_space<vmem>>, vector<8x128xbf16>
    "tpu.trace_start"() <{level = 10 : i32, message = "qd,kd->qk"}> : () -> ()
    %cst_63 = arith.constant dense<0.000000e+00> : vector<32x8xf32>
    %135 = tpu.matmul %132, %133, %cst_63 {dimension_numbers = #tpu.dot_dimension_numbers<[1], [1], [0], [0], [0, 0, 1, 0], [], []>} : vector<32x128xbf16>, vector<8x128xbf16>, vector<32x8xf32> -> vector<32x8xf32>
    "tpu.trace_stop"() : () -> ()
    %cst_64 = arith.constant dense<0xFF800000> : vector<32xf32>
    %136 = vector.multi_reduction <maximumf>, %135, %cst_64 [1] : vector<32x8xf32> to vector<32xf32>
    %137 = vector.shape_cast %136 : vector<32xf32> to vector<32x1xf32>
    %138 = vector.broadcast %137 : vector<32x1xf32> to vector<32x8xf32>
    %139 = arith.subf %135, %138 : vector<32x8xf32>
    %140 = math.exp %139 : vector<32x8xf32>
    %cst_65 = arith.constant dense<0.000000e+00> : vector<32xf32>
    %141 = vector.multi_reduction <add>, %140, %cst_65 [1] : vector<32x8xf32> to vector<32xf32>
    %142 = vector.shape_cast %141 : vector<32xf32> to vector<32x1xf32>
    %143 = tpu.reciprocal %142 {approx = true} : vector<32x1xf32> -> vector<32x1xf32>
    %144 = vector.broadcast %143 : vector<32x1xf32> to vector<32x8xf32>
    %145 = arith.mulf %140, %144 : vector<32x8xf32>
    %146 = arith.truncf %145 : vector<32x8xf32> to vector<32x8xbf16>
    %cst_66 = arith.constant dense<0.000000e+00> : vector<32x128xf32>
    %147 = tpu.matmul %146, %134, %cst_66 {dimension_numbers = #tpu.dot_dimension_numbers<[1], [0], [0], [1], [0, 0, 1, 1], [], []>} : vector<32x8xbf16>, vector<8x128xbf16>, vector<32x128xf32> -> vector<32x128xf32>
    %148 = arith.truncf %147 : vector<32x128xf32> to vector<32x128xbf16>
    %149 = vector.extract_strided_slice %131 {offsets = [0, 128], sizes = [32, 128], strides = [1, 1]} : vector<32x512xbf16> to vector<32x128xbf16>
    %c0_67 = arith.constant 0 : index
    %c128_68 = arith.constant 128 : index
    %150 = vector.load %arg30[%c0_67, %c128_68] : memref<8x512xbf16, #tpu.memory_space<vmem>>, vector<8x128xbf16>
    %c0_69 = arith.constant 0 : index
    %c128_70 = arith.constant 128 : index
    %151 = vector.load %arg31[%c0_69, %c128_70] : memref<8x512xbf16, #tpu.memory_space<vmem>>, vector<8x128xbf16>
    "tpu.trace_start"() <{level = 10 : i32, message = "qd,kd->qk"}> : () -> ()
    %cst_71 = arith.constant dense<0.000000e+00> : vector<32x8xf32>
    %152 = tpu.matmul %149, %150, %cst_71 {dimension_numbers = #tpu.dot_dimension_numbers<[1], [1], [0], [0], [0, 0, 1, 0], [], []>} : vector<32x128xbf16>, vector<8x128xbf16>, vector<32x8xf32> -> vector<32x8xf32>
    "tpu.trace_stop"() : () -> ()
    %cst_72 = arith.constant dense<0xFF800000> : vector<32xf32>
    %153 = vector.multi_reduction <maximumf>, %152, %cst_72 [1] : vector<32x8xf32> to vector<32xf32>
    %154 = vector.shape_cast %153 : vector<32xf32> to vector<32x1xf32>
    %155 = vector.broadcast %154 : vector<32x1xf32> to vector<32x8xf32>
    %156 = arith.subf %152, %155 : vector<32x8xf32>
    %157 = math.exp %156 : vector<32x8xf32>
    %cst_73 = arith.constant dense<0.000000e+00> : vector<32xf32>
    %158 = vector.multi_reduction <add>, %157, %cst_73 [1] : vector<32x8xf32> to vector<32xf32>
    %159 = vector.shape_cast %158 : vector<32xf32> to vector<32x1xf32>
    %160 = tpu.reciprocal %159 {approx = true} : vector<32x1xf32> -> vector<32x1xf32>
    %161 = vector.broadcast %160 : vector<32x1xf32> to vector<32x8xf32>
    %162 = arith.mulf %157, %161 : vector<32x8xf32>
    %163 = arith.truncf %162 : vector<32x8xf32> to vector<32x8xbf16>
    %cst_74 = arith.constant dense<0.000000e+00> : vector<32x128xf32>
    %164 = tpu.matmul %163, %151, %cst_74 {dimension_numbers = #tpu.dot_dimension_numbers<[1], [0], [0], [1], [0, 0, 1, 1], [], []>} : vector<32x8xbf16>, vector<8x128xbf16>, vector<32x128xf32> -> vector<32x128xf32>
    %165 = arith.truncf %164 : vector<32x128xf32> to vector<32x128xbf16>
    %166 = vector.extract_strided_slice %131 {offsets = [0, 256], sizes = [32, 128], strides = [1, 1]} : vector<32x512xbf16> to vector<32x128xbf16>
    %c0_75 = arith.constant 0 : index
    %c256_76 = arith.constant 256 : index
    %167 = vector.load %arg30[%c0_75, %c256_76] : memref<8x512xbf16, #tpu.memory_space<vmem>>, vector<8x128xbf16>
    %c0_77 = arith.constant 0 : index
    %c256_78 = arith.constant 256 : index
    %168 = vector.load %arg31[%c0_77, %c256_78] : memref<8x512xbf16, #tpu.memory_space<vmem>>, vector<8x128xbf16>
    "tpu.trace_start"() <{level = 10 : i32, message = "qd,kd->qk"}> : () -> ()
    %cst_79 = arith.constant dense<0.000000e+00> : vector<32x8xf32>
    %169 = tpu.matmul %166, %167, %cst_79 {dimension_numbers = #tpu.dot_dimension_numbers<[1], [1], [0], [0], [0, 0, 1, 0], [], []>} : vector<32x128xbf16>, vector<8x128xbf16>, vector<32x8xf32> -> vector<32x8xf32>
    "tpu.trace_stop"() : () -> ()
    %cst_80 = arith.constant dense<0xFF800000> : vector<32xf32>
    %170 = vector.multi_reduction <maximumf>, %169, %cst_80 [1] : vector<32x8xf32> to vector<32xf32>
    %171 = vector.shape_cast %170 : vector<32xf32> to vector<32x1xf32>
    %172 = vector.broadcast %171 : vector<32x1xf32> to vector<32x8xf32>
    %173 = arith.subf %169, %172 : vector<32x8xf32>
    %174 = math.exp %173 : vector<32x8xf32>
    %cst_81 = arith.constant dense<0.000000e+00> : vector<32xf32>
    %175 = vector.multi_reduction <add>, %174, %cst_81 [1] : vector<32x8xf32> to vector<32xf32>
    %176 = vector.shape_cast %175 : vector<32xf32> to vector<32x1xf32>
    %177 = tpu.reciprocal %176 {approx = true} : vector<32x1xf32> -> vector<32x1xf32>
    %178 = vector.broadcast %177 : vector<32x1xf32> to vector<32x8xf32>
    %179 = arith.mulf %174, %178 : vector<32x8xf32>
    %180 = arith.truncf %179 : vector<32x8xf32> to vector<32x8xbf16>
    %cst_82 = arith.constant dense<0.000000e+00> : vector<32x128xf32>
    %181 = tpu.matmul %180, %168, %cst_82 {dimension_numbers = #tpu.dot_dimension_numbers<[1], [0], [0], [1], [0, 0, 1, 1], [], []>} : vector<32x8xbf16>, vector<8x128xbf16>, vector<32x128xf32> -> vector<32x128xf32>
    %182 = arith.truncf %181 : vector<32x128xf32> to vector<32x128xbf16>
    %183 = vector.extract_strided_slice %131 {offsets = [0, 384], sizes = [32, 128], strides = [1, 1]} : vector<32x512xbf16> to vector<32x128xbf16>
    %c0_83 = arith.constant 0 : index
    %c384_84 = arith.constant 384 : index
    %184 = vector.load %arg30[%c0_83, %c384_84] : memref<8x512xbf16, #tpu.memory_space<vmem>>, vector<8x128xbf16>
    %c0_85 = arith.constant 0 : index
    %c384_86 = arith.constant 384 : index
    %185 = vector.load %arg31[%c0_85, %c384_86] : memref<8x512xbf16, #tpu.memory_space<vmem>>, vector<8x128xbf16>
    "tpu.trace_start"() <{level = 10 : i32, message = "qd,kd->qk"}> : () -> ()
    %cst_87 = arith.constant dense<0.000000e+00> : vector<32x8xf32>
    %186 = tpu.matmul %183, %184, %cst_87 {dimension_numbers = #tpu.dot_dimension_numbers<[1], [1], [0], [0], [0, 0, 1, 0], [], []>} : vector<32x128xbf16>, vector<8x128xbf16>, vector<32x8xf32> -> vector<32x8xf32>
    "tpu.trace_stop"() : () -> ()
    %cst_88 = arith.constant dense<0xFF800000> : vector<32xf32>
    %187 = vector.multi_reduction <maximumf>, %186, %cst_88 [1] : vector<32x8xf32> to vector<32xf32>
    %188 = vector.shape_cast %187 : vector<32xf32> to vector<32x1xf32>
    %189 = vector.broadcast %188 : vector<32x1xf32> to vector<32x8xf32>
    %190 = arith.subf %186, %189 : vector<32x8xf32>
    %191 = math.exp %190 : vector<32x8xf32>
    %cst_89 = arith.constant dense<0.000000e+00> : vector<32xf32>
    %192 = vector.multi_reduction <add>, %191, %cst_89 [1] : vector<32x8xf32> to vector<32xf32>
    %193 = vector.shape_cast %192 : vector<32xf32> to vector<32x1xf32>
    %194 = tpu.reciprocal %193 {approx = true} : vector<32x1xf32> -> vector<32x1xf32>
    %195 = vector.broadcast %194 : vector<32x1xf32> to vector<32x8xf32>
    %196 = arith.mulf %191, %195 : vector<32x8xf32>
    %197 = arith.truncf %196 : vector<32x8xf32> to vector<32x8xbf16>
    %cst_90 = arith.constant dense<0.000000e+00> : vector<32x128xf32>
    %198 = tpu.matmul %197, %185, %cst_90 {dimension_numbers = #tpu.dot_dimension_numbers<[1], [0], [0], [1], [0, 0, 1, 1], [], []>} : vector<32x8xbf16>, vector<8x128xbf16>, vector<32x128xf32> -> vector<32x128xf32>
    %199 = arith.truncf %198 : vector<32x128xf32> to vector<32x128xbf16>
    %200 = tpu.concatenate %148, %165, %182, %199 in 1 : vector<32x128xbf16>, vector<32x128xbf16>, vector<32x128xbf16>, vector<32x128xbf16> -> vector<32x512xbf16>
    %c0_91 = arith.constant 0 : index
    %c0_92 = arith.constant 0 : index
    %201 = vector.load %arg21[%c0_91, %c0_92] : memref<512x32xbf16, #tpu.memory_space<vmem>>, vector<512x32xbf16>
    %cst_93 = arith.constant dense<0.000000e+00> : vector<32x32xf32>
    %202 = tpu.matmul %200, %201, %cst_93 {dimension_numbers = #tpu.dot_dimension_numbers<[1], [0], [0], [1], [0, 0, 1, 1], [], []>} : vector<32x512xbf16>, vector<512x32xbf16>, vector<32x32xf32> -> vector<32x32xf32>
    %c0_94 = arith.constant 0 : index
    %c0_95 = arith.constant 0 : index
    %203 = vector.load %arg22[%c0_94, %c0_95] : memref<1x32xf32, #tpu.memory_space<vmem>>, vector<1x32xf32>
    %204 = vector.broadcast %203 : vector<1x32xf32> to vector<32x32xf32>
    %205 = arith.addf %202, %204 : vector<32x32xf32>
    %206 = arith.addf %122, %205 : vector<32x32xf32>
    %cst_96 = arith.constant dense<0.000000e+00> : vector<32xf32>
    %207 = vector.multi_reduction <add>, %206, %cst_96 [1] : vector<32x32xf32> to vector<32xf32>
    %208 = vector.shape_cast %207 : vector<32xf32> to vector<32x1xf32>
    %cst_97 = arith.constant 3.200000e+01 : f32
    %209 = vector.broadcast %cst_97 : f32 to vector<32x1xf32>
    %210 = arith.divf %208, %209 : vector<32x1xf32>
    %211 = vector.broadcast %210 : vector<32x1xf32> to vector<32x32xf32>
    %212 = arith.subf %206, %211 : vector<32x32xf32>
    %213 = arith.mulf %212, %212 : vector<32x32xf32>
    %cst_98 = arith.constant dense<0.000000e+00> : vector<32xf32>
    %214 = vector.multi_reduction <add>, %213, %cst_98 [1] : vector<32x32xf32> to vector<32xf32>
    %215 = vector.shape_cast %214 : vector<32xf32> to vector<32x1xf32>
    %cst_99 = arith.constant 3.200000e+01 : f32
    %216 = vector.broadcast %cst_99 : f32 to vector<32x1xf32>
    %217 = arith.divf %215, %216 : vector<32x1xf32>
    %cst_100 = arith.constant 9.99999997E-7 : f32
    %218 = vector.broadcast %cst_100 : f32 to vector<32x1xf32>
    %219 = arith.addf %217, %218 : vector<32x1xf32>
    %220 = math.rsqrt %219 : vector<32x1xf32>
    %221 = vector.broadcast %220 : vector<32x1xf32> to vector<32x32xf32>
    %222 = arith.mulf %212, %221 : vector<32x32xf32>
    %cst_101 = arith.constant 1.000000e+00 : f32
    %223 = vector.broadcast %cst_101 : f32 to vector<1x32xf32>
    %224 = arith.addf %223, %8 : vector<1x32xf32>
    %225 = vector.broadcast %224 : vector<1x32xf32> to vector<32x32xf32>
    %226 = arith.mulf %222, %225 : vector<32x32xf32>
    %227 = vector.broadcast %7 : vector<1x32xf32> to vector<32x32xf32>
    %228 = arith.addf %226, %227 : vector<32x32xf32>
    %229 = arith.truncf %228 : vector<32x32xf32> to vector<32x32xbf16>
    %c0_102 = arith.constant 0 : index
    %c0_103 = arith.constant 0 : index
    %230 = vector.load %arg23[%c0_102, %c0_103] : memref<32x128xbf16, #tpu.memory_space<vmem>>, vector<32x128xbf16>
    %cst_104 = arith.constant dense<0.000000e+00> : vector<32x128xf32>
    %231 = tpu.matmul %229, %230, %cst_104 {dimension_numbers = #tpu.dot_dimension_numbers<[1], [0], [0], [1], [0, 0, 1, 1], [], []>} : vector<32x32xbf16>, vector<32x128xbf16>, vector<32x128xf32> -> vector<32x128xf32>
    %c0_105 = arith.constant 0 : index
    %c0_106 = arith.constant 0 : index
    %232 = vector.load %arg24[%c0_105, %c0_106] : memref<1x128xf32, #tpu.memory_space<vmem>>, vector<1x128xf32>
    %233 = vector.broadcast %232 : vector<1x128xf32> to vector<32x128xf32>
    %234 = arith.addf %231, %233 : vector<32x128xf32>
    %cst_107 = arith.constant 5.000000e-01 : f32
    %235 = vector.broadcast %cst_107 : f32 to vector<32x128xf32>
    %236 = arith.mulf %235, %234 : vector<32x128xf32>
    %cst_108 = arith.constant 4.471500e-02 : f32
    %237 = vector.broadcast %cst_108 : f32 to vector<32x128xf32>
    %238 = arith.mulf %237, %234 : vector<32x128xf32>
    %239 = arith.mulf %238, %234 : vector<32x128xf32>
    %240 = arith.mulf %239, %234 : vector<32x128xf32>
    %241 = arith.addf %234, %240 : vector<32x128xf32>
    %cst_109 = arith.constant 0.797884583 : f32
    %242 = vector.broadcast %cst_109 : f32 to vector<32x128xf32>
    %243 = arith.mulf %242, %241 : vector<32x128xf32>
    %244 = math.tanh %243 : vector<32x128xf32>
    %cst_110 = arith.constant 1.000000e+00 : f32
    %245 = vector.broadcast %cst_110 : f32 to vector<32x128xf32>
    %246 = arith.addf %245, %244 : vector<32x128xf32>
    %247 = arith.mulf %236, %246 : vector<32x128xf32>
    %248 = arith.truncf %247 : vector<32x128xf32> to vector<32x128xbf16>
    %c0_111 = arith.constant 0 : index
    %c0_112 = arith.constant 0 : index
    %249 = vector.load %arg25[%c0_111, %c0_112] : memref<128x32xbf16, #tpu.memory_space<vmem>>, vector<128x32xbf16>
    %cst_113 = arith.constant dense<0.000000e+00> : vector<32x32xf32>
    %250 = tpu.matmul %248, %249, %cst_113 {dimension_numbers = #tpu.dot_dimension_numbers<[1], [0], [0], [1], [0, 0, 1, 1], [], []>} : vector<32x128xbf16>, vector<128x32xbf16>, vector<32x32xf32> -> vector<32x32xf32>
    %c0_114 = arith.constant 0 : index
    %c0_115 = arith.constant 0 : index
    %251 = vector.load %arg26[%c0_114, %c0_115] : memref<1x32xf32, #tpu.memory_space<vmem>>, vector<1x32xf32>
    %252 = vector.broadcast %251 : vector<1x32xf32> to vector<32x32xf32>
    %253 = arith.addf %250, %252 : vector<32x32xf32>
    %254 = vector.broadcast %9 : vector<1x32xf32> to vector<32x32xf32>
    %255 = arith.mulf %254, %253 : vector<32x32xf32>
    %256 = arith.addf %206, %255 : vector<32x32xf32>
    %c0_116 = arith.constant 0 : index
    %c0_117 = arith.constant 0 : index
    %c0_118 = arith.constant 0 : index
    %257 = vector.load %arg27[%c0_116, %c0_117, %c0_118] : memref<1x32x32xf32, #tpu.memory_space<vmem>>, vector<1x32x32xf32>
    %258 = vector.shape_cast %257 : vector<1x32x32xf32> to vector<32x32xf32>
    %259 = vector.shape_cast %256 : vector<32x32xf32> to vector<1x32x32xf32>
    tpu.vector_store %arg27[%c0_116, %c0_117, %c0_118], %259 {strides = array<i32>} : memref<1x32x32xf32, #tpu.memory_space<vmem>>, vector<1x32x32xf32>,
    return
  }
  func.func @transform_0(%arg0: i32, %arg1: i32) -> (i32, i32, i32) {
    %c0_i32 = arith.constant 0 : i32
    %c0_i32_0 = arith.constant 0 : i32
    return %arg0, %arg1, %c0_i32 : i32, i32, i32
  }
  func.func @transform_1(%arg0: i32, %arg1: i32) -> (i32, i32, i32) {
    %c0_i32 = arith.constant 0 : i32
    %c0_i32_0 = arith.constant 0 : i32
    %c0_i32_1 = arith.constant 0 : i32
    return %arg0, %c0_i32, %c0_i32_0 : i32, i32, i32
  }
  func.func @transform_2(%arg0: i32, %arg1: i32) -> (i32, i32, i32) {
    %c0_i32 = arith.constant 0 : i32
    %c0_i32_0 = arith.constant 0 : i32
    %c0_i32_1 = arith.constant 0 : i32
    return %arg0, %c0_i32, %c0_i32_0 : i32, i32, i32
  }
  func.func @transform_3(%arg0: i32, %arg1: i32) -> (i32, i32, i32) {
    %c0_i32 = arith.constant 0 : i32
    %c0_i32_0 = arith.constant 0 : i32
    %c0_i32_1 = arith.constant 0 : i32
    return %arg0, %c0_i32, %c0_i32_0 : i32, i32, i32
  }
  func.func @transform_4(%arg0: i32, %arg1: i32) -> (i32, i32) {
    %c0_i32 = arith.constant 0 : i32
    %c0_i32_0 = arith.constant 0 : i32
    %c0_i32_1 = arith.constant 0 : i32
    return %c0_i32, %c0_i32_0 : i32, i32
  }
  func.func @transform_5(%arg0: i32, %arg1: i32) -> (i32, i32) {
    %c0_i32 = arith.constant 0 : i32
    %c0_i32_0 = arith.constant 0 : i32
    %c0_i32_1 = arith.constant 0 : i32
    return %c0_i32, %c0_i32_0 : i32, i32
  }
  func.func @transform_6(%arg0: i32, %arg1: i32) -> (i32, i32) {
    %c0_i32 = arith.constant 0 : i32
    %c0_i32_0 = arith.constant 0 : i32
    %c0_i32_1 = arith.constant 0 : i32
    return %c0_i32, %c0_i32_0 : i32, i32
  }
  func.func @transform_7(%arg0: i32, %arg1: i32) -> (i32, i32) {
    %c0_i32 = arith.constant 0 : i32
    %c0_i32_0 = arith.constant 0 : i32
    %c0_i32_1 = arith.constant 0 : i32
    return %c0_i32, %c0_i32_0 : i32, i32
  }
  func.func @transform_8(%arg0: i32, %arg1: i32) -> (i32, i32) {
    %c0_i32 = arith.constant 0 : i32
    %c0_i32_0 = arith.constant 0 : i32
    %c0_i32_1 = arith.constant 0 : i32
    return %c0_i32, %c0_i32_0 : i32, i32
  }
  func.func @transform_9(%arg0: i32, %arg1: i32) -> (i32, i32) {
    %c0_i32 = arith.constant 0 : i32
    %c0_i32_0 = arith.constant 0 : i32
    %c0_i32_1 = arith.constant 0 : i32
    return %c0_i32, %c0_i32_0 : i32, i32
  }
  func.func @transform_10(%arg0: i32, %arg1: i32) -> (i32, i32) {
    %c0_i32 = arith.constant 0 : i32
    %c0_i32_0 = arith.constant 0 : i32
    %c0_i32_1 = arith.constant 0 : i32
    return %c0_i32, %c0_i32_0 : i32, i32
  }
  func.func @transform_11(%arg0: i32, %arg1: i32) -> (i32, i32) {
    %c0_i32 = arith.constant 0 : i32
    %c0_i32_0 = arith.constant 0 : i32
    %c0_i32_1 = arith.constant 0 : i32
    return %c0_i32, %c0_i32_0 : i32, i32
  }
  func.func @transform_12(%arg0: i32, %arg1: i32) -> (i32, i32) {
    %c0_i32 = arith.constant 0 : i32
    %c0_i32_0 = arith.constant 0 : i32
    %c0_i32_1 = arith.constant 0 : i32
    return %c0_i32, %c0_i32_0 : i32, i32
  }
  func.func @transform_13(%arg0: i32, %arg1: i32) -> (i32, i32) {
    %c0_i32 = arith.constant 0 : i32
    %c0_i32_0 = arith.constant 0 : i32
    %c0_i32_1 = arith.constant 0 : i32
    return %c0_i32, %c0_i32_0 : i32, i32
  }
  func.func @transform_14(%arg0: i32, %arg1: i32) -> (i32, i32) {
    %c0_i32 = arith.constant 0 : i32
    %c0_i32_0 = arith.constant 0 : i32
    %c0_i32_1 = arith.constant 0 : i32
    return %c0_i32, %c0_i32_0 : i32, i32
  }
  func.func @transform_15(%arg0: i32, %arg1: i32) -> (i32, i32) {
    %c0_i32 = arith.constant 0 : i32
    %c0_i32_0 = arith.constant 0 : i32
    %c0_i32_1 = arith.constant 0 : i32
    return %c0_i32, %c0_i32_0 : i32, i32
  }
  func.func @transform_16(%arg0: i32, %arg1: i32) -> (i32, i32) {
    %c0_i32 = arith.constant 0 : i32
    %c0_i32_0 = arith.constant 0 : i32
    %c0_i32_1 = arith.constant 0 : i32
    return %c0_i32, %c0_i32_0 : i32, i32
  }
  func.func @transform_17(%arg0: i32, %arg1: i32) -> (i32, i32) {
    %c0_i32 = arith.constant 0 : i32
    %c0_i32_0 = arith.constant 0 : i32
    %c0_i32_1 = arith.constant 0 : i32
    return %c0_i32, %c0_i32_0 : i32, i32
  }
  func.func @transform_18(%arg0: i32, %arg1: i32) -> (i32, i32) {
    %c0_i32 = arith.constant 0 : i32
    %c0_i32_0 = arith.constant 0 : i32
    %c0_i32_1 = arith.constant 0 : i32
    return %c0_i32, %c0_i32_0 : i32, i32
  }
  func.func @transform_19(%arg0: i32, %arg1: i32) -> (i32, i32) {
    %c0_i32 = arith.constant 0 : i32
    %c0_i32_0 = arith.constant 0 : i32
    %c0_i32_1 = arith.constant 0 : i32
    return %c0_i32, %c0_i32_0 : i32, i32
  }
  func.func @transform_20(%arg0: i32, %arg1: i32) -> (i32, i32) {
    %c0_i32 = arith.constant 0 : i32
    %c0_i32_0 = arith.constant 0 : i32
    %c0_i32_1 = arith.constant 0 : i32
    return %c0_i32, %c0_i32_0 : i32, i32
  }
  func.func @transform_21(%arg0: i32, %arg1: i32) -> (i32, i32) {
    %c0_i32 = arith.constant 0 : i32
    %c0_i32_0 = arith.constant 0 : i32
    %c0_i32_1 = arith.constant 0 : i32
    return %c0_i32, %c0_i32_0 : i32, i32
  }
  func.func @transform_22(%arg0: i32, %arg1: i32) -> (i32, i32) {
    %c0_i32 = arith.constant 0 : i32
    %c0_i32_0 = arith.constant 0 : i32
    %c0_i32_1 = arith.constant 0 : i32
    return %c0_i32, %c0_i32_0 : i32, i32
  }
  func.func @transform_23(%arg0: i32, %arg1: i32) -> (i32, i32) {
    %c0_i32 = arith.constant 0 : i32
    %c0_i32_0 = arith.constant 0 : i32
    %c0_i32_1 = arith.constant 0 : i32
    return %c0_i32, %c0_i32_0 : i32, i32
  }
  func.func @transform_24(%arg0: i32, %arg1: i32) -> (i32, i32) {
    %c0_i32 = arith.constant 0 : i32
    %c0_i32_0 = arith.constant 0 : i32
    %c0_i32_1 = arith.constant 0 : i32
    return %c0_i32, %c0_i32_0 : i32, i32
  }
  func.func @transform_25(%arg0: i32, %arg1: i32) -> (i32, i32, i32) {
    %c0_i32 = arith.constant 0 : i32
    %c0_i32_0 = arith.constant 0 : i32
    return %arg0, %arg1, %c0_i32 : i32, i32, i32
  }
}

</mosaic_0001>

<llo_original>
// kernel: tpu_custom_call.1
$region0: #{tpu_custom_call.1}
  #allocation0 [shape = 'u32[]', space=smem, size = 0x4, offset = 0x4, fixed_abs, tag = 'smem constant byte address 0x4 - core index']
  #allocation1 [shape = 'u32[144,128]{1,0:T(1,128)}', space=vmem, size = 0x12000, scoped, tag = 'internal scratch']
  #allocation2 [shape = 'bf16[64,512]{1,0:T(16,128)(2,1)}', space=vmem, size = 0x10000, scoped, tag = 'scratch operand']
  #allocation3 [shape = 'bf16[64,512]{1,0:T(16,128)(2,1)}', space=vmem, size = 0x10000, scoped, tag = 'scratch operand']
  #allocation4 [shape = 'bf16[8,512]{1,0:T(8,128)(2,1)}', space=vmem, size = 0x2000, scoped, tag = 'scratch operand']
  #allocation5 [shape = 'bf16[8,512]{1,0:T(8,128)(2,1)}', space=vmem, size = 0x2000, scoped, tag = 'scratch operand']
  %s0 = inlined_call_operand.vmem [shape: f32[2,64,32], index: 0, kind: input, shape index: {}]
  %s1 = inlined_call_operand.vmem [shape: f32[2,64,32], index: 1, kind: input, shape index: {}]
  %s2 = inlined_call_operand.vmem [shape: f32[2,8,32], index: 2, kind: input, shape index: {}]
  %s3 = inlined_call_operand.vmem [shape: f32[2,6,32], index: 3, kind: input, shape index: {}]
  %s4 = inlined_call_operand.vmem [shape: f32[6,32], index: 4, kind: input, shape index: {}]
  %s5 = inlined_call_operand.vmem [shape: bf16[32,512], index: 5, kind: input, shape index: {}]
  %s6 = inlined_call_operand.vmem [shape: f32[1,512], index: 6, kind: input, shape index: {}]
  %s7 = inlined_call_operand.vmem [shape: bf16[32,512], index: 7, kind: input, shape index: {}]
  %s8 = inlined_call_operand.vmem [shape: f32[1,512], index: 8, kind: input, shape index: {}]
  %s9 = inlined_call_operand.vmem [shape: bf16[32,512], index: 9, kind: input, shape index: {}]
  %s10 = inlined_call_operand.vmem [shape: f32[1,512], index: 10, kind: input, shape index: {}]
  %s11 = inlined_call_operand.vmem [shape: bf16[512,32], index: 11, kind: input, shape index: {}]
  %s12 = inlined_call_operand.vmem [shape: f32[1,32], index: 12, kind: input, shape index: {}]
  %s13 = inlined_call_operand.vmem [shape: bf16[32,512], index: 13, kind: input, shape index: {}]
  %s14 = inlined_call_operand.vmem [shape: f32[1,512], index: 14, kind: input, shape index: {}]
  %s15 = inlined_call_operand.vmem [shape: bf16[32,512], index: 15, kind: input, shape index: {}]
  %s16 = inlined_call_operand.vmem [shape: f32[1,512], index: 16, kind: input, shape index: {}]
  %s17 = inlined_call_operand.vmem [shape: bf16[32,512], index: 17, kind: input, shape index: {}]
  %s18 = inlined_call_operand.vmem [shape: f32[1,512], index: 18, kind: input, shape index: {}]
  %s19 = inlined_call_operand.vmem [shape: bf16[512,32], index: 19, kind: input, shape index: {}]
  %s20 = inlined_call_operand.vmem [shape: f32[1,32], index: 20, kind: input, shape index: {}]
  %s21 = inlined_call_operand.vmem [shape: bf16[32,128], index: 21, kind: input, shape index: {}]
  %s22 = inlined_call_operand.vmem [shape: f32[1,128], index: 22, kind: input, shape index: {}]
  %s23 = inlined_call_operand.vmem [shape: bf16[128,32], index: 23, kind: input, shape index: {}]
  %s24 = inlined_call_operand.vmem [shape: f32[1,32], index: 24, kind: input, shape index: {}]
  %s25 = inlined_call_operand.vmem [shape: f32[2,64,32], index: 25, kind: output, shape index: {}]
  %s26 = sld [smem:[#allocation0]]
  $region144: #{tpu_custom_call.1} parent=0
    _
  %s28 = ssub.s32 1, %s26
  %s29 = scalar_select 0, %s28, %s26
  loop: start=0, step=1, limit=6
  $region2: #{tpu_custom_call.1} parent=0 // loop_pre_header
    _
  $region3: #{tpu_custom_call.1} parent=0 // loop_header
    %s31 = sphi 0, %s35
    %p32 = scmp.ge.s32.totalorder %s31, 6
    %s38 = sphi 0, %s50
    %s39 = sphi 0, %s46
    %s40 = sphi 0, %s38
    %s41 = sphi 0, %s39
    %s42 = sphi 0, %s40
    %s43 = sphi 0, %s41
    %s55 = sphi 0, %s57
    %s58 = sphi 0, %s55
    %s59 = sphi 0, %s58
    %s75 = sphi 0, %s59
    %s81 = sphi 0, %s83
    %s84 = sphi 0, %s81
    %s85 = sphi 0, %s84
    %s101 = sphi 0, %s85
    %s107 = sphi 0, %s109
    %s110 = sphi 0, %s107
    %s111 = sphi 0, %s110
    %s127 = sphi 0, %s111
    %s133 = sphi 0, %s135
    %s136 = sphi 0, %s133
    %s137 = sphi 0, %s136
    %s153 = sphi 0, %s137
    %s157 = sphi 0, %s157
    %s159 = sphi 0, %s157
    %s160 = sphi 0, %s159
    %s174 = sphi 0, %s160
    %s178 = sphi 0, %s178
    %s180 = sphi 0, %s178
    %s181 = sphi 0, %s180
    %s195 = sphi 0, %s181
    %s199 = sphi 0, %s199
    %s201 = sphi 0, %s199
    %s202 = sphi 0, %s201
    %s216 = sphi 0, %s202
    %s220 = sphi 0, %s220
    %s222 = sphi 0, %s220
    %s223 = sphi 0, %s222
    %s237 = sphi 0, %s223
    %s241 = sphi 0, %s241
    %s243 = sphi 0, %s241
    %s244 = sphi 0, %s243
    %s258 = sphi 0, %s244
    %s262 = sphi 0, %s262
    %s264 = sphi 0, %s262
    %s265 = sphi 0, %s264
    %s279 = sphi 0, %s265
    %s283 = sphi 0, %s283
    %s285 = sphi 0, %s283
    %s286 = sphi 0, %s285
    %s300 = sphi 0, %s286
    %s304 = sphi 0, %s304
    %s306 = sphi 0, %s304
    %s307 = sphi 0, %s306
    %s321 = sphi 0, %s307
    %s325 = sphi 0, %s325
    %s327 = sphi 0, %s325
    %s328 = sphi 0, %s327
    %s342 = sphi 0, %s328
    %s346 = sphi 0, %s346
    %s348 = sphi 0, %s346
    %s349 = sphi 0, %s348
    %s363 = sphi 0, %s349
    %s367 = sphi 0, %s367
    %s369 = sphi 0, %s367
    %s370 = sphi 0, %s369
    %s384 = sphi 0, %s370
    %s388 = sphi 0, %s388
    %s390 = sphi 0, %s388
    %s391 = sphi 0, %s390
    %s405 = sphi 0, %s391
    %s409 = sphi 0, %s409
    %s411 = sphi 0, %s409
    %s412 = sphi 0, %s411
    %s426 = sphi 0, %s412
    %s430 = sphi 0, %s430
    %s432 = sphi 0, %s430
    %s433 = sphi 0, %s432
    %s447 = sphi 0, %s433
    %s451 = sphi 0, %s451
    %s453 = sphi 0, %s451
    %s454 = sphi 0, %s453
    %s468 = sphi 0, %s454
    %s472 = sphi 0, %s472
    %s474 = sphi 0, %s472
    %s475 = sphi 0, %s474
    %s489 = sphi 0, %s475
    %s493 = sphi 0, %s493
    %s495 = sphi 0, %s493
    %s496 = sphi 0, %s495
    %s510 = sphi 0, %s496
    %s514 = sphi 0, %s514
    %s516 = sphi 0, %s514
    %s517 = sphi 0, %s516
    %s531 = sphi 0, %s517
    %s535 = sphi 0, %s535
    %s537 = sphi 0, %s535
    %s538 = sphi 0, %s537
    %s552 = sphi 0, %s538
    %s556 = sphi 0, %s556
    %s558 = sphi 0, %s556
    %s559 = sphi 0, %s558
    %s573 = sphi 0, %s559
    %s577 = sphi 0, %s577
    %s579 = sphi 0, %s577
    %s580 = sphi 0, %s579
    %s594 = sphi 0, %s580
    %s602 = sphi 0, %s604
    %s605 = sphi 0, %s602
    %s606 = sphi 0, %s605
    %s622 = sphi 0, %s606
  $region4: #{tpu_custom_call.1} parent=0 // loop_header_branch
    %34 = sbr.rel (%p32) target = $region8
  $region5: #{tpu_custom_call.1} parent=0 // loop_body
    %s36 = ssub.s32 %s31, 1
    %s37 = ssub.s32 %s31, 2
    %s44 = sadd.s32 1, %s39
    %p45 = scmp.ge.s32.totalorder %s44, 2
    %s46 = scalar_select %p45, 0, %s44
    %s47 = sadd.s32 1, %s38
    %s48 = scalar_select %p45, %s47, %s38
    %p49 = scmp.ge.s32.totalorder %s48, 2
    %s50 = scalar_select %p49, 0, %s48
    %s51 = ssub.s32 %s38, %s50
    %s52 = ssub.s32 %s39, %s46
    %s53 = sor.u32 %s51, %s52
    %p54 = scmp.eq.s32.totalorder %s53, 0
    %s56 = sadd.s32 %s55, 1
    %s57 = scalar_select %p54, %s55, %s56
    %p60 = pneg %p54
    %p61 = scmp.eq.s32.totalorder %s31, 3
    %p62 = por %p60, %p61
    %p63 = scmp.ne.s32.totalorder %s55, %s58
    %p64 = scmp.eq.s32.totalorder %s31, 0
    %p65 = por %p63, %p64
    %p66 = scmp.ne.s32.totalorder %s55, %s58
    %p67 = scmp.eq.s32.totalorder %s36, 3
    %p68 = por %p66, %p67
    %p69 = scmp.ne.s32.totalorder %s58, %s59
    %p70 = scmp.eq.s32.totalorder %s36, 0
    %p71 = por %p69, %p70
    %p72 = scmp.ne.s32.totalorder %s58, %s59
    %p73 = scmp.eq.s32.totalorder %s37, 3
    %p74 = por %p72, %p73
    %p76 = scmp.ne.s32.totalorder %s59, %s75
    %p77 = scmp.eq.s32.totalorder %s37, 0
    %p78 = por %p76, %p77
    %s79 = ssub.s32 %s38, %s50
    %p80 = scmp.eq.s32.totalorder %s79, 0
    %s82 = sadd.s32 %s81, 1
    %s83 = scalar_select %p80, %s81, %s82
    %p86 = pneg %p80
    %p87 = scmp.eq.s32.totalorder %s31, 3
    %p88 = por %p86, %p87
    %p89 = scmp.ne.s32.totalorder %s81, %s84
    %p90 = scmp.eq.s32.totalorder %s31, 0
    %p91 = por %p89, %p90
    %p92 = scmp.ne.s32.totalorder %s81, %s84
    %p93 = scmp.eq.s32.totalorder %s36, 3
    %p94 = por %p92, %p93
    %p95 = scmp.ne.s32.totalorder %s84, %s85
    %p96 = scmp.eq.s32.totalorder %s36, 0
    %p97 = por %p95, %p96
    %p98 = scmp.ne.s32.totalorder %s84, %s85
    %p99 = scmp.eq.s32.totalorder %s37, 3
    %p100 = por %p98, %p99
    %p102 = scmp.ne.s32.totalorder %s85, %s101
    %p103 = scmp.eq.s32.totalorder %s37, 0
    %p104 = por %p102, %p103
    %s105 = ssub.s32 %s38, %s50
    %p106 = scmp.eq.s32.totalorder %s105, 0
    %s108 = sadd.s32 %s107, 1
    %s109 = scalar_select %p106, %s107, %s108
    %p112 = pneg %p106
    %p113 = scmp.eq.s32.totalorder %s31, 3
    %p114 = por %p112, %p113
    %p115 = scmp.ne.s32.totalorder %s107, %s110
    %p116 = scmp.eq.s32.totalorder %s31, 0
    %p117 = por %p115, %p116
    %p118 = scmp.ne.s32.totalorder %s107, %s110
    %p119 = scmp.eq.s32.totalorder %s36, 3
    %p120 = por %p118, %p119
    %p121 = scmp.ne.s32.totalorder %s110, %s111
    %p122 = scmp.eq.s32.totalorder %s36, 0
    %p123 = por %p121, %p122
    %p124 = scmp.ne.s32.totalorder %s110, %s111
    %p125 = scmp.eq.s32.totalorder %s37, 3
    %p126 = por %p124, %p125
    %p128 = scmp.ne.s32.totalorder %s111, %s127
    %p129 = scmp.eq.s32.totalorder %s37, 0
    %p130 = por %p128, %p129
    %s131 = ssub.s32 %s38, %s50
    %p132 = scmp.eq.s32.totalorder %s131, 0
    %s134 = sadd.s32 %s133, 1
    %s135 = scalar_select %p132, %s133, %s134
    %p138 = pneg %p132
    %p139 = scmp.eq.s32.totalorder %s31, 3
    %p140 = por %p138, %p139
    %p141 = scmp.ne.s32.totalorder %s133, %s136
    %p142 = scmp.eq.s32.totalorder %s31, 0
    %p143 = por %p141, %p142
    %p144 = scmp.ne.s32.totalorder %s133, %s136
    %p145 = scmp.eq.s32.totalorder %s36, 3
    %p146 = por %p144, %p145
    %p147 = scmp.ne.s32.totalorder %s136, %s137
    %p148 = scmp.eq.s32.totalorder %s36, 0
    %p149 = por %p147, %p148
    %p150 = scmp.ne.s32.totalorder %s136, %s137
    %p151 = scmp.eq.s32.totalorder %s37, 3
    %p152 = por %p150, %p151
    %p154 = scmp.ne.s32.totalorder %s137, %s153
    %p155 = scmp.eq.s32.totalorder %s37, 0
    %p156 = por %p154, %p155
    %s158 = sadd.s32 %s157, 1
    %p161 = scmp.eq.s32.totalorder %s31, 3
    %p162 = scmp.ne.s32.totalorder %s157, %s159
    %p163 = scmp.eq.s32.totalorder %s31, 0
    %p164 = por %p162, %p163
    %p165 = scmp.ne.s32.totalorder %s157, %s159
    %p166 = scmp.eq.s32.totalorder %s36, 3
    %p167 = por %p165, %p166
    %p168 = scmp.ne.s32.totalorder %s159, %s160
    %p169 = scmp.eq.s32.totalorder %s36, 0
    %p170 = por %p168, %p169
    %p171 = scmp.ne.s32.totalorder %s159, %s160
    %p172 = scmp.eq.s32.totalorder %s37, 3
    %p173 = por %p171, %p172
    %p175 = scmp.ne.s32.totalorder %s160, %s174
    %p176 = scmp.eq.s32.totalorder %s37, 0
    %p177 = por %p175, %p176
    %s179 = sadd.s32 %s178, 1
    %p182 = scmp.eq.s32.totalorder %s31, 3
    %p183 = scmp.ne.s32.totalorder %s178, %s180
    %p184 = scmp.eq.s32.totalorder %s31, 0
    %p185 = por %p183, %p184
    %p186 = scmp.ne.s32.totalorder %s178, %s180
    %p187 = scmp.eq.s32.totalorder %s36, 3
    %p188 = por %p186, %p187
    %p189 = scmp.ne.s32.totalorder %s180, %s181
    %p190 = scmp.eq.s32.totalorder %s36, 0
    %p191 = por %p189, %p190
    %p192 = scmp.ne.s32.totalorder %s180, %s181
    %p193 = scmp.eq.s32.totalorder %s37, 3
    %p194 = por %p192, %p193
    %p196 = scmp.ne.s32.totalorder %s181, %s195
    %p197 = scmp.eq.s32.totalorder %s37, 0
    %p198 = por %p196, %p197
    %s200 = sadd.s32 %s199, 1
    %p203 = scmp.eq.s32.totalorder %s31, 3
    %p204 = scmp.ne.s32.totalorder %s199, %s201
    %p205 = scmp.eq.s32.totalorder %s31, 0
    %p206 = por %p204, %p205
    %p207 = scmp.ne.s32.totalorder %s199, %s201
    %p208 = scmp.eq.s32.totalorder %s36, 3
    %p209 = por %p207, %p208
    %p210 = scmp.ne.s32.totalorder %s201, %s202
    %p211 = scmp.eq.s32.totalorder %s36, 0
    %p212 = por %p210, %p211
    %p213 = scmp.ne.s32.totalorder %s201, %s202
    %p214 = scmp.eq.s32.totalorder %s37, 3
    %p215 = por %p213, %p214
    %p217 = scmp.ne.s32.totalorder %s202, %s216
    %p218 = scmp.eq.s32.totalorder %s37, 0
    %p219 = por %p217, %p218
    %s221 = sadd.s32 %s220, 1
    %p224 = scmp.eq.s32.totalorder %s31, 3
    %p225 = scmp.ne.s32.totalorder %s220, %s222
    %p226 = scmp.eq.s32.totalorder %s31, 0
    %p227 = por %p225, %p226
    %p228 = scmp.ne.s32.totalorder %s220, %s222
    %p229 = scmp.eq.s32.totalorder %s36, 3
    %p230 = por %p228, %p229
    %p231 = scmp.ne.s32.totalorder %s222, %s223
    %p232 = scmp.eq.s32.totalorder %s36, 0
    %p233 = por %p231, %p232
    %p234 = scmp.ne.s32.totalorder %s222, %s223
    %p235 = scmp.eq.s32.totalorder %s37, 3
    %p236 = por %p234, %p235
    %p238 = scmp.ne.s32.totalorder %s223, %s237
    %p239 = scmp.eq.s32.totalorder %s37, 0
    %p240 = por %p238, %p239
    %s242 = sadd.s32 %s241, 1
    %p245 = scmp.eq.s32.totalorder %s31, 3
    %p246 = scmp.ne.s32.totalorder %s241, %s243
    %p247 = scmp.eq.s32.totalorder %s31, 0
    %p248 = por %p246, %p247
    %p249 = scmp.ne.s32.totalorder %s241, %s243
    %p250 = scmp.eq.s32.totalorder %s36, 3
    %p251 = por %p249, %p250
    %p252 = scmp.ne.s32.totalorder %s243, %s244
    %p253 = scmp.eq.s32.totalorder %s36, 0
    %p254 = por %p252, %p253
    %p255 = scmp.ne.s32.totalorder %s243, %s244
    %p256 = scmp.eq.s32.totalorder %s37, 3
    %p257 = por %p255, %p256
    %p259 = scmp.ne.s32.totalorder %s244, %s258
    %p260 = scmp.eq.s32.totalorder %s37, 0
    %p261 = por %p259, %p260
    %s263 = sadd.s32 %s262, 1
    %p266 = scmp.eq.s32.totalorder %s31, 3
    %p267 = scmp.ne.s32.totalorder %s262, %s264
    %p268 = scmp.eq.s32.totalorder %s31, 0
    %p269 = por %p267, %p268
    %p270 = scmp.ne.s32.totalorder %s262, %s264
    %p271 = scmp.eq.s32.totalorder %s36, 3
    %p272 = por %p270, %p271
    %p273 = scmp.ne.s32.totalorder %s264, %s265
    %p274 = scmp.eq.s32.totalorder %s36, 0
    %p275 = por %p273, %p274
    %p276 = scmp.ne.s32.totalorder %s264, %s265
    %p277 = scmp.eq.s32.totalorder %s37, 3
    %p278 = por %p276, %p277
    %p280 = scmp.ne.s32.totalorder %s265, %s279
    %p281 = scmp.eq.s32.totalorder %s37, 0
    %p282 = por %p280, %p281
    %s284 = sadd.s32 %s283, 1
    %p287 = scmp.eq.s32.totalorder %s31, 3
    %p288 = scmp.ne.s32.totalorder %s283, %s285
    %p289 = scmp.eq.s32.totalorder %s31, 0
    %p290 = por %p288, %p289
    %p291 = scmp.ne.s32.totalorder %s283, %s285
    %p292 = scmp.eq.s32.totalorder %s36, 3
    %p293 = por %p291, %p292
    %p294 = scmp.ne.s32.totalorder %s285, %s286
    %p295 = scmp.eq.s32.totalorder %s36, 0
    %p296 = por %p294, %p295
    %p297 = scmp.ne.s32.totalorder %s285, %s286
    %p298 = scmp.eq.s32.totalorder %s37, 3
    %p299 = por %p297, %p298
    %p301 = scmp.ne.s32.totalorder %s286, %s300
    %p302 = scmp.eq.s32.totalorder %s37, 0
    %p303 = por %p301, %p302
    %s305 = sadd.s32 %s304, 1
    %p308 = scmp.eq.s32.totalorder %s31, 3
    %p309 = scmp.ne.s32.totalorder %s304, %s306
    %p310 = scmp.eq.s32.totalorder %s31, 0
    %p311 = por %p309, %p310
    %p312 = scmp.ne.s32.totalorder %s304, %s306
    %p313 = scmp.eq.s32.totalorder %s36, 3
    %p314 = por %p312, %p313
    %p315 = scmp.ne.s32.totalorder %s306, %s307
    %p316 = scmp.eq.s32.totalorder %s36, 0
    %p317 = por %p315, %p316
    %p318 = scmp.ne.s32.totalorder %s306, %s307
    %p319 = scmp.eq.s32.totalorder %s37, 3
    %p320 = por %p318, %p319
    %p322 = scmp.ne.s32.totalorder %s307, %s321
    %p323 = scmp.eq.s32.totalorder %s37, 0
    %p324 = por %p322, %p323
    %s326 = sadd.s32 %s325, 1
    %p329 = scmp.eq.s32.totalorder %s31, 3
    %p330 = scmp.ne.s32.totalorder %s325, %s327
    %p331 = scmp.eq.s32.totalorder %s31, 0
    %p332 = por %p330, %p331
    %p333 = scmp.ne.s32.totalorder %s325, %s327
    %p334 = scmp.eq.s32.totalorder %s36, 3
    %p335 = por %p333, %p334
    %p336 = scmp.ne.s32.totalorder %s327, %s328
    %p337 = scmp.eq.s32.totalorder %s36, 0
    %p338 = por %p336, %p337
    %p339 = scmp.ne.s32.totalorder %s327, %s328
    %p340 = scmp.eq.s32.totalorder %s37, 3
    %p341 = por %p339, %p340
    %p343 = scmp.ne.s32.totalorder %s328, %s342
    %p344 = scmp.eq.s32.totalorder %s37, 0
    %p345 = por %p343, %p344
    %s347 = sadd.s32 %s346, 1
    %p350 = scmp.eq.s32.totalorder %s31, 3
    %p351 = scmp.ne.s32.totalorder %s346, %s348
    %p352 = scmp.eq.s32.totalorder %s31, 0
    %p353 = por %p351, %p352
    %p354 = scmp.ne.s32.totalorder %s346, %s348
    %p355 = scmp.eq.s32.totalorder %s36, 3
    %p356 = por %p354, %p355
    %p357 = scmp.ne.s32.totalorder %s348, %s349
    %p358 = scmp.eq.s32.totalorder %s36, 0
    %p359 = por %p357, %p358
    %p360 = scmp.ne.s32.totalorder %s348, %s349
    %p361 = scmp.eq.s32.totalorder %s37, 3
    %p362 = por %p360, %p361
    %p364 = scmp.ne.s32.totalorder %s349, %s363
    %p365 = scmp.eq.s32.totalorder %s37, 0
    %p366 = por %p364, %p365
    %s368 = sadd.s32 %s367, 1
    %p371 = scmp.eq.s32.totalorder %s31, 3
    %p372 = scmp.ne.s32.totalorder %s367, %s369
    %p373 = scmp.eq.s32.totalorder %s31, 0
    %p374 = por %p372, %p373
    %p375 = scmp.ne.s32.totalorder %s367, %s369
    %p376 = scmp.eq.s32.totalorder %s36, 3
    %p377 = por %p375, %p376
    %p378 = scmp.ne.s32.totalorder %s369, %s370
    %p379 = scmp.eq.s32.totalorder %s36, 0
    %p380 = por %p378, %p379
    %p381 = scmp.ne.s32.totalorder %s369, %s370
    %p382 = scmp.eq.s32.totalorder %s37, 3
    %p383 = por %p381, %p382
    %p385 = scmp.ne.s32.totalorder %s370, %s384
    %p386 = scmp.eq.s32.totalorder %s37, 0
    %p387 = por %p385, %p386
    %s389 = sadd.s32 %s388, 1
    %p392 = scmp.eq.s32.totalorder %s31, 3
    %p393 = scmp.ne.s32.totalorder %s388, %s390
    %p394 = scmp.eq.s32.totalorder %s31, 0
    %p395 = por %p393, %p394
    %p396 = scmp.ne.s32.totalorder %s388, %s390
    %p397 = scmp.eq.s32.totalorder %s36, 3
    %p398 = por %p396, %p397
    %p399 = scmp.ne.s32.totalorder %s390, %s391
    %p400 = scmp.eq.s32.totalorder %s36, 0
    %p401 = por %p399, %p400
    %p402 = scmp.ne.s32.totalorder %s390, %s391
    %p403 = scmp.eq.s32.totalorder %s37, 3
    %p404 = por %p402, %p403
    %p406 = scmp.ne.s32.totalorder %s391, %s405
    %p407 = scmp.eq.s32.totalorder %s37, 0
    %p408 = por %p406, %p407
    %s410 = sadd.s32 %s409, 1
    %p413 = scmp.eq.s32.totalorder %s31, 3
    %p414 = scmp.ne.s32.totalorder %s409, %s411
    %p415 = scmp.eq.s32.totalorder %s31, 0
    %p416 = por %p414, %p415
    %p417 = scmp.ne.s32.totalorder %s409, %s411
    %p418 = scmp.eq.s32.totalorder %s36, 3
    %p419 = por %p417, %p418
    %p420 = scmp.ne.s32.totalorder %s411, %s412
    %p421 = scmp.eq.s32.totalorder %s36, 0
    %p422 = por %p420, %p421
    %p423 = scmp.ne.s32.totalorder %s411, %s412
    %p424 = scmp.eq.s32.totalorder %s37, 3
    %p425 = por %p423, %p424
    %p427 = scmp.ne.s32.totalorder %s412, %s426
    %p428 = scmp.eq.s32.totalorder %s37, 0
    %p429 = por %p427, %p428
    %s431 = sadd.s32 %s430, 1
    %p434 = scmp.eq.s32.totalorder %s31, 3
    %p435 = scmp.ne.s32.totalorder %s430, %s432
    %p436 = scmp.eq.s32.totalorder %s31, 0
    %p437 = por %p435, %p436
    %p438 = scmp.ne.s32.totalorder %s430, %s432
    %p439 = scmp.eq.s32.totalorder %s36, 3
    %p440 = por %p438, %p439
    %p441 = scmp.ne.s32.totalorder %s432, %s433
    %p442 = scmp.eq.s32.totalorder %s36, 0
    %p443 = por %p441, %p442
    %p444 = scmp.ne.s32.totalorder %s432, %s433
    %p445 = scmp.eq.s32.totalorder %s37, 3
    %p446 = por %p444, %p445
    %p448 = scmp.ne.s32.totalorder %s433, %s447
    %p449 = scmp.eq.s32.totalorder %s37, 0
    %p450 = por %p448, %p449
    %s452 = sadd.s32 %s451, 1
    %p455 = scmp.eq.s32.totalorder %s31, 3
    %p456 = scmp.ne.s32.totalorder %s451, %s453
    %p457 = scmp.eq.s32.totalorder %s31, 0
    %p458 = por %p456, %p457
    %p459 = scmp.ne.s32.totalorder %s451, %s453
    %p460 = scmp.eq.s32.totalorder %s36, 3
    %p461 = por %p459, %p460
    %p462 = scmp.ne.s32.totalorder %s453, %s454
    %p463 = scmp.eq.s32.totalorder %s36, 0
    %p464 = por %p462, %p463
    %p465 = scmp.ne.s32.totalorder %s453, %s454
    %p466 = scmp.eq.s32.totalorder %s37, 3
    %p467 = por %p465, %p466
    %p469 = scmp.ne.s32.totalorder %s454, %s468
    %p470 = scmp.eq.s32.totalorder %s37, 0
    %p471 = por %p469, %p470
    %s473 = sadd.s32 %s472, 1
    %p476 = scmp.eq.s32.totalorder %s31, 3
    %p477 = scmp.ne.s32.totalorder %s472, %s474
    %p478 = scmp.eq.s32.totalorder %s31, 0
    %p479 = por %p477, %p478
    %p480 = scmp.ne.s32.totalorder %s472, %s474
    %p481 = scmp.eq.s32.totalorder %s36, 3
    %p482 = por %p480, %p481
    %p483 = scmp.ne.s32.totalorder %s474, %s475
    %p484 = scmp.eq.s32.totalorder %s36, 0
    %p485 = por %p483, %p484
    %p486 = scmp.ne.s32.totalorder %s474, %s475
    %p487 = scmp.eq.s32.totalorder %s37, 3
    %p488 = por %p486, %p487
    %p490 = scmp.ne.s32.totalorder %s475, %s489
    %p491 = scmp.eq.s32.totalorder %s37, 0
    %p492 = por %p490, %p491
    %s494 = sadd.s32 %s493, 1
    %p497 = scmp.eq.s32.totalorder %s31, 3
    %p498 = scmp.ne.s32.totalorder %s493, %s495
    %p499 = scmp.eq.s32.totalorder %s31, 0
    %p500 = por %p498, %p499
    %p501 = scmp.ne.s32.totalorder %s493, %s495
    %p502 = scmp.eq.s32.totalorder %s36, 3
    %p503 = por %p501, %p502
    %p504 = scmp.ne.s32.totalorder %s495, %s496
    %p505 = scmp.eq.s32.totalorder %s36, 0
    %p506 = por %p504, %p505
    %p507 = scmp.ne.s32.totalorder %s495, %s496
    %p508 = scmp.eq.s32.totalorder %s37, 3
    %p509 = por %p507, %p508
    %p511 = scmp.ne.s32.totalorder %s496, %s510
    %p512 = scmp.eq.s32.totalorder %s37, 0
    %p513 = por %p511, %p512
    %s515 = sadd.s32 %s514, 1
    %p518 = scmp.eq.s32.totalorder %s31, 3
    %p519 = scmp.ne.s32.totalorder %s514, %s516
    %p520 = scmp.eq.s32.totalorder %s31, 0
    %p521 = por %p519, %p520
    %p522 = scmp.ne.s32.totalorder %s514, %s516
    %p523 = scmp.eq.s32.totalorder %s36, 3
    %p524 = por %p522, %p523
    %p525 = scmp.ne.s32.totalorder %s516, %s517
    %p526 = scmp.eq.s32.totalorder %s36, 0
    %p527 = por %p525, %p526
    %p528 = scmp.ne.s32.totalorder %s516, %s517
    %p529 = scmp.eq.s32.totalorder %s37, 3
    %p530 = por %p528, %p529
    %p532 = scmp.ne.s32.totalorder %s517, %s531
    %p533 = scmp.eq.s32.totalorder %s37, 0
    %p534 = por %p532, %p533
    %s536 = sadd.s32 %s535, 1
    %p539 = scmp.eq.s32.totalorder %s31, 3
    %p540 = scmp.ne.s32.totalorder %s535, %s537
    %p541 = scmp.eq.s32.totalorder %s31, 0
    %p542 = por %p540, %p541
    %p543 = scmp.ne.s32.totalorder %s535, %s537
    %p544 = scmp.eq.s32.totalorder %s36, 3
    %p545 = por %p543, %p544
    %p546 = scmp.ne.s32.totalorder %s537, %s538
    %p547 = scmp.eq.s32.totalorder %s36, 0
    %p548 = por %p546, %p547
    %p549 = scmp.ne.s32.totalorder %s537, %s538
    %p550 = scmp.eq.s32.totalorder %s37, 3
    %p551 = por %p549, %p550
    %p553 = scmp.ne.s32.totalorder %s538, %s552
    %p554 = scmp.eq.s32.totalorder %s37, 0
    %p555 = por %p553, %p554
    %s557 = sadd.s32 %s556, 1
    %p560 = scmp.eq.s32.totalorder %s31, 3
    %p561 = scmp.ne.s32.totalorder %s556, %s558
    %p562 = scmp.eq.s32.totalorder %s31, 0
    %p563 = por %p561, %p562
    %p564 = scmp.ne.s32.totalorder %s556, %s558
    %p565 = scmp.eq.s32.totalorder %s36, 3
    %p566 = por %p564, %p565
    %p567 = scmp.ne.s32.totalorder %s558, %s559
    %p568 = scmp.eq.s32.totalorder %s36, 0
    %p569 = por %p567, %p568
    %p570 = scmp.ne.s32.totalorder %s558, %s559
    %p571 = scmp.eq.s32.totalorder %s37, 3
    %p572 = por %p570, %p571
    %p574 = scmp.ne.s32.totalorder %s559, %s573
    %p575 = scmp.eq.s32.totalorder %s37, 0
    %p576 = por %p574, %p575
    %s578 = sadd.s32 %s577, 1
    %p581 = scmp.eq.s32.totalorder %s31, 3
    %p582 = scmp.ne.s32.totalorder %s577, %s579
    %p583 = scmp.eq.s32.totalorder %s31, 0
    %p584 = por %p582, %p583
    %p585 = scmp.ne.s32.totalorder %s577, %s579
    %p586 = scmp.eq.s32.totalorder %s36, 3
    %p587 = por %p585, %p586
    %p588 = scmp.ne.s32.totalorder %s579, %s580
    %p589 = scmp.eq.s32.totalorder %s36, 0
    %p590 = por %p588, %p589
    %p591 = scmp.ne.s32.totalorder %s579, %s580
    %p592 = scmp.eq.s32.totalorder %s37, 3
    %p593 = por %p591, %p592
    %p595 = scmp.ne.s32.totalorder %s580, %s594
    %p596 = scmp.eq.s32.totalorder %s37, 0
    %p597 = por %p595, %p596
    %s598 = ssub.s32 %s38, %s50
    %s599 = ssub.s32 %s39, %s46
    %s600 = sor.u32 %s598, %s599
    %p601 = scmp.eq.s32.totalorder %s600, 0
    %s603 = sadd.s32 %s602, 1
    %s604 = scalar_select %p601, %s602, %s603
    %p607 = pneg %p601
    %p608 = scmp.eq.s32.totalorder %s31, 3
    %p609 = por %p607, %p608
    %p610 = scmp.ne.s32.totalorder %s602, %s605
    %p611 = scmp.eq.s32.totalorder %s31, 0
    %p612 = por %p610, %p611
    %p613 = scmp.ne.s32.totalorder %s602, %s605
    %p614 = scmp.eq.s32.totalorder %s36, 3
    %p615 = por %p613, %p614
    %p616 = scmp.ne.s32.totalorder %s605, %s606
    %p617 = scmp.eq.s32.totalorder %s36, 0
    %p618 = por %p616, %p617
    %p619 = scmp.ne.s32.totalorder %s605, %s606
    %p620 = scmp.eq.s32.totalorder %s37, 3
    %p621 = por %p619, %p620
    %p623 = scmp.ne.s32.totalorder %s606, %s622
    %p624 = scmp.eq.s32.totalorder %s37, 0
    %p625 = por %p623, %p624
    %p626 = scmp.le.s32.totalorder 1, %s31
    %p627 = scmp.lt.s32.totalorder %s31, 5
    %p628 = pnand %p626, %p627
    %p629 = pneg %p628
    // Predicated region
    $region9: #{tpu_custom_call.1} parent=5 // pred_check
      _
    $region10: #{tpu_custom_call.1} parent=5 // pred_check_branch
      %631 = sbr.rel (%p628) target = $region12
    $region11: #{tpu_custom_call.1} parent=5 // pred_region
      %s632 = ssub.s32 %s31, 1
      // Predicated region
      $region13: #{tpu_custom_call.1} parent=11 // pred_check
        %p633 = pneg %p170
      $region14: #{tpu_custom_call.1} parent=11 // pred_check_branch
        %635 = sbr.rel (%p633) target = $region16
      $region15: #{tpu_custom_call.1} parent=11 // pred_region
        _
      $region16: #{tpu_custom_call.1} parent=11 // pred_fallthru
        _
      // Predicated region
      $region17: #{tpu_custom_call.1} parent=11 // pred_check
        %p636 = pneg %p191
      $region18: #{tpu_custom_call.1} parent=11 // pred_check_branch
        %638 = sbr.rel (%p636) target = $region20
      $region19: #{tpu_custom_call.1} parent=11 // pred_region
        _
      $region20: #{tpu_custom_call.1} parent=11 // pred_fallthru
        _
      // Predicated region
      $region21: #{tpu_custom_call.1} parent=11 // pred_check
        %p639 = pneg %p212
      $region22: #{tpu_custom_call.1} parent=11 // pred_check_branch
        %641 = sbr.rel (%p639) target = $region24
      $region23: #{tpu_custom_call.1} parent=11 // pred_region
        _
      $region24: #{tpu_custom_call.1} parent=11 // pred_fallthru
        _
      // Predicated region
      $region25: #{tpu_custom_call.1} parent=11 // pred_check
        %p642 = pneg %p233
      $region26: #{tpu_custom_call.1} parent=11 // pred_check_branch
        %644 = sbr.rel (%p642) target = $region28
      $region27: #{tpu_custom_call.1} parent=11 // pred_region
        _
      $region28: #{tpu_custom_call.1} parent=11 // pred_fallthru
        _
      // Predicated region
      $region29: #{tpu_custom_call.1} parent=11 // pred_check
        %p645 = pneg %p254
      $region30: #{tpu_custom_call.1} parent=11 // pred_check_branch
        %647 = sbr.rel (%p645) target = $region32
      $region31: #{tpu_custom_call.1} parent=11 // pred_region
        _
      $region32: #{tpu_custom_call.1} parent=11 // pred_fallthru
        _
      // Predicated region
      $region33: #{tpu_custom_call.1} parent=11 // pred_check
        %p648 = pneg %p275
      $region34: #{tpu_custom_call.1} parent=11 // pred_check_branch
        %650 = sbr.rel (%p648) target = $region36
      $region35: #{tpu_custom_call.1} parent=11 // pred_region
        _
      $region36: #{tpu_custom_call.1} parent=11 // pred_fallthru
        _
      // Predicated region
      $region37: #{tpu_custom_call.1} parent=11 // pred_check
        %p651 = pneg %p296
      $region38: #{tpu_custom_call.1} parent=11 // pred_check_branch
        %653 = sbr.rel (%p651) target = $region40
      $region39: #{tpu_custom_call.1} parent=11 // pred_region
        _
      $region40: #{tpu_custom_call.1} parent=11 // pred_fallthru
        _
      // Predicated region
      $region41: #{tpu_custom_call.1} parent=11 // pred_check
        %p654 = pneg %p317
      $region42: #{tpu_custom_call.1} parent=11 // pred_check_branch
        %656 = sbr.rel (%p654) target = $region44
      $region43: #{tpu_custom_call.1} parent=11 // pred_region
        _
      $region44: #{tpu_custom_call.1} parent=11 // pred_fallthru
        _
      // Predicated region
      $region45: #{tpu_custom_call.1} parent=11 // pred_check
        %p657 = pneg %p338
      $region46: #{tpu_custom_call.1} parent=11 // pred_check_branch
        %659 = sbr.rel (%p657) target = $region48
      $region47: #{tpu_custom_call.1} parent=11 // pred_region
        _
      $region48: #{tpu_custom_call.1} parent=11 // pred_fallthru
        _
      // Predicated region
      $region49: #{tpu_custom_call.1} parent=11 // pred_check
        %p660 = pneg %p359
      $region50: #{tpu_custom_call.1} parent=11 // pred_check_branch
        %662 = sbr.rel (%p660) target = $region52
      $region51: #{tpu_custom_call.1} parent=11 // pred_region
        _
      $region52: #{tpu_custom_call.1} parent=11 // pred_fallthru
        _
      // Predicated region
      $region53: #{tpu_custom_call.1} parent=11 // pred_check
        %p663 = pneg %p380
      $region54: #{tpu_custom_call.1} parent=11 // pred_check_branch
        %665 = sbr.rel (%p663) target = $region56
      $region55: #{tpu_custom_call.1} parent=11 // pred_region
        _
      $region56: #{tpu_custom_call.1} parent=11 // pred_fallthru
        _
      // Predicated region
      $region57: #{tpu_custom_call.1} parent=11 // pred_check
        %p666 = pneg %p401
      $region58: #{tpu_custom_call.1} parent=11 // pred_check_branch
        %668 = sbr.rel (%p666) target = $region60
      $region59: #{tpu_custom_call.1} parent=11 // pred_region
        _
      $region60: #{tpu_custom_call.1} parent=11 // pred_fallthru
        _
      // Predicated region
      $region61: #{tpu_custom_call.1} parent=11 // pred_check
        %p669 = pneg %p422
      $region62: #{tpu_custom_call.1} parent=11 // pred_check_branch
        %671 = sbr.rel (%p669) target = $region64
      $region63: #{tpu_custom_call.1} parent=11 // pred_region
        _
      $region64: #{tpu_custom_call.1} parent=11 // pred_fallthru
        _
      // Predicated region
      $region65: #{tpu_custom_call.1} parent=11 // pred_check
        %p672 = pneg %p443
      $region66: #{tpu_custom_call.1} parent=11 // pred_check_branch
        %674 = sbr.rel (%p672) target = $region68
      $region67: #{tpu_custom_call.1} parent=11 // pred_region
        _
      $region68: #{tpu_custom_call.1} parent=11 // pred_fallthru
        _
      // Predicated region
      $region69: #{tpu_custom_call.1} parent=11 // pred_check
        %p675 = pneg %p464
      $region70: #{tpu_custom_call.1} parent=11 // pred_check_branch
        %677 = sbr.rel (%p675) target = $region72
      $region71: #{tpu_custom_call.1} parent=11 // pred_region
        _
      $region72: #{tpu_custom_call.1} parent=11 // pred_fallthru
        _
      // Predicated region
      $region73: #{tpu_custom_call.1} parent=11 // pred_check
        %p678 = pneg %p485
      $region74: #{tpu_custom_call.1} parent=11 // pred_check_branch
        %680 = sbr.rel (%p678) target = $region76
      $region75: #{tpu_custom_call.1} parent=11 // pred_region
        _
      $region76: #{tpu_custom_call.1} parent=11 // pred_fallthru
        _
      // Predicated region
      $region77: #{tpu_custom_call.1} parent=11 // pred_check
        %p681 = pneg %p506
      $region78: #{tpu_custom_call.1} parent=11 // pred_check_branch
        %683 = sbr.rel (%p681) target = $region80
      $region79: #{tpu_custom_call.1} parent=11 // pred_region
        _
      $region80: #{tpu_custom_call.1} parent=11 // pred_fallthru
        _
      // Predicated region
      $region81: #{tpu_custom_call.1} parent=11 // pred_check
        %p684 = pneg %p527
      $region82: #{tpu_custom_call.1} parent=11 // pred_check_branch
        %686 = sbr.rel (%p684) target = $region84
      $region83: #{tpu_custom_call.1} parent=11 // pred_region
        _
      $region84: #{tpu_custom_call.1} parent=11 // pred_fallthru
        _
      // Predicated region
      $region85: #{tpu_custom_call.1} parent=11 // pred_check
        %p687 = pneg %p548
      $region86: #{tpu_custom_call.1} parent=11 // pred_check_branch
        %689 = sbr.rel (%p687) target = $region88
      $region87: #{tpu_custom_call.1} parent=11 // pred_region
        _
      $region88: #{tpu_custom_call.1} parent=11 // pred_fallthru
        _
      // Predicated region
      $region89: #{tpu_custom_call.1} parent=11 // pred_check
        %p690 = pneg %p569
      $region90: #{tpu_custom_call.1} parent=11 // pred_check_branch
        %692 = sbr.rel (%p690) target = $region92
      $region91: #{tpu_custom_call.1} parent=11 // pred_region
        _
      $region92: #{tpu_custom_call.1} parent=11 // pred_fallthru
        _
      // Predicated region
      $region93: #{tpu_custom_call.1} parent=11 // pred_check
        %p693 = pneg %p590
      $region94: #{tpu_custom_call.1} parent=11 // pred_check_branch
        %695 = sbr.rel (%p693) target = $region96
      $region95: #{tpu_custom_call.1} parent=11 // pred_region
        _
      $region96: #{tpu_custom_call.1} parent=11 // pred_fallthru
        _
    $region12: #{tpu_custom_call.1} parent=5 // pred_fallthru
      _
    %p696 = scmp.lt.s32.totalorder %s31, 4
    // Predicated region
    $region97: #{tpu_custom_call.1} parent=5 // pred_check
      %p697 = pneg %p696
    $region98: #{tpu_custom_call.1} parent=5 // pred_check_branch
      %699 = sbr.rel (%p697) target = $region100
    $region99: #{tpu_custom_call.1} parent=5 // pred_region
      // Predicated region
      $region101: #{tpu_custom_call.1} parent=99 // pred_check
        %p700 = pneg %p65
      $region102: #{tpu_custom_call.1} parent=99 // pred_check_branch
        %702 = sbr.rel (%p700) target = $region104
      $region103: #{tpu_custom_call.1} parent=99 // pred_region
        %s703 = smul.u32 4, %s39
        %p704 = scmp.lt.s32.totalorder %s38, 1
        %s705 = scalar_select %p704, %s38, 1
        %p706 = scmp.lt.s32.totalorder %s703, 7
        %s707 = scalar_select %p706, %s703, 7
        %s708 = smul.addr %s705, 8
        %s709 = sadd.s32 %s707, %s708
        %s710 = smul.addr %s709, 8
        %s711 = scalar_lea.vmem %s0, %s710
        %s712 = smul.u32 4, %s39
      $region104: #{tpu_custom_call.1} parent=99 // pred_fallthru
        _
      // Predicated region
      $region105: #{tpu_custom_call.1} parent=99 // pred_check
        %p713 = pneg %p91
      $region106: #{tpu_custom_call.1} parent=99 // pred_check_branch
        %715 = sbr.rel (%p713) target = $region108
      $region107: #{tpu_custom_call.1} parent=99 // pred_region
        %p716 = scmp.lt.s32.totalorder %s38, 1
        %s717 = scalar_select %p716, %s38, 1
        %s718 = smul.addr %s717, 8
        %s719 = smul.addr %s718, 8
        %s720 = scalar_lea.vmem %s1, %s719
      $region108: #{tpu_custom_call.1} parent=99 // pred_fallthru
        _
      // Predicated region
      $region109: #{tpu_custom_call.1} parent=99 // pred_check
        %p721 = pneg %p117
      $region110: #{tpu_custom_call.1} parent=99 // pred_check_branch
        %723 = sbr.rel (%p721) target = $region112
      $region111: #{tpu_custom_call.1} parent=99 // pred_region
        %p724 = scmp.lt.s32.totalorder %s38, 1
        %s725 = scalar_select %p724, %s38, 1
        %s726 = smul.addr %s725, 8
        %s727 = scalar_lea.vmem %s2, %s726
      $region112: #{tpu_custom_call.1} parent=99 // pred_fallthru
        _
      // Predicated region
      $region113: #{tpu_custom_call.1} parent=99 // pred_check
        %p728 = pneg %p143
      $region114: #{tpu_custom_call.1} parent=99 // pred_check_branch
        %730 = sbr.rel (%p728) target = $region116
      $region115: #{tpu_custom_call.1} parent=99 // pred_region
        %p731 = scmp.lt.s32.totalorder %s38, 1
        %s732 = scalar_select %p731, %s38, 1
        %s733 = smul.addr %s732, 8
        %s734 = scalar_lea.vmem %s3, %s733
      $region116: #{tpu_custom_call.1} parent=99 // pred_fallthru
        _
    $region100: #{tpu_custom_call.1} parent=5 // pred_fallthru
      _
    %p735 = scmp.le.s32.totalorder 1, %s31
    %p736 = scmp.lt.s32.totalorder %s31, 5
    %p737 = pnand %p735, %p736
    %p738 = pneg %p737
    // Predicated region
    $region117: #{tpu_custom_call.1} parent=5 // pred_check
      _
    $region118: #{tpu_custom_call.1} parent=5 // pred_check_branch
      %740 = sbr.rel (%p737) target = $region120
    $region119: #{tpu_custom_call.1} parent=5 // pred_region
      %s741 = ssub.s32 %s31, 1
      %s742 = smul.u32 4, %s41
      %p743 = scmp.lt.s32.totalorder %s40, 1
      %s744 = scalar_select %p743, %s40, 1
      %p745 = scmp.lt.s32.totalorder %s742, 7
      %s746 = scalar_select %p745, %s742, 7
      %s747 = smul.addr %s744, 8
      %s748 = sadd.s32 %s746, %s747
      %s749 = smul.addr %s748, 8
      %s750 = scalar_lea.vmem %s0, %s749
      %p751 = pneg %p71
      %p752 = pneg %p68
      %p753 = scmp.lt.s32.totalorder %s40, 1
      %s754 = scalar_select %p753, %s40, 1
      %s755 = smul.addr %s754, 8
      %s756 = smul.addr %s755, 8
      %s757 = scalar_lea.vmem %s1, %s756
      %p758 = pneg %p97
      %p759 = pneg %p94
      %p760 = scmp.lt.s32.totalorder %s40, 1
      %s761 = scalar_select %p760, %s40, 1
      %s762 = smul.addr %s761, 8
      %s763 = scalar_lea.vmem %s2, %s762
      %p764 = pneg %p123
      %p765 = pneg %p120
      %p766 = scmp.lt.s32.totalorder %s40, 1
      %s767 = scalar_select %p766, %s40, 1
      %s768 = smul.addr %s767, 8
      %s769 = scalar_lea.vmem %s3, %s768
      %p770 = pneg %p149
      %p771 = pneg %p146
      %p772 = pneg %p170
      %p773 = pneg %p167
      %p774 = pneg %p191
      %p775 = pneg %p188
      %p776 = pneg %p212
      %p777 = pneg %p209
      %p778 = pneg %p233
      %p779 = pneg %p230
      %p780 = pneg %p254
      %p781 = pneg %p251
      %p782 = pneg %p275
      %p783 = pneg %p272
      %p784 = pneg %p296
      %p785 = pneg %p293
      %p786 = pneg %p317
      %p787 = pneg %p314
      %p788 = pneg %p338
      %p789 = pneg %p335
      %p790 = pneg %p359
      %p791 = pneg %p356
      %p792 = pneg %p380
      %p793 = pneg %p377
      %p794 = pneg %p401
      %p795 = pneg %p398
      %p796 = pneg %p422
      %p797 = pneg %p419
      %p798 = pneg %p443
      %p799 = pneg %p440
      %p800 = pneg %p464
      %p801 = pneg %p461
      %p802 = pneg %p485
      %p803 = pneg %p482
      %p804 = pneg %p506
      %p805 = pneg %p503
      %p806 = pneg %p527
      %p807 = pneg %p524
      %p808 = pneg %p548
      %p809 = pneg %p545
      %p810 = pneg %p569
      %p811 = pneg %p566
      %p812 = pneg %p590
      %p813 = pneg %p587
      %p814 = pneg %p618
      %p815 = pneg %p615
      %s816 = smul.u32 4, %s41
      %p817 = scmp.lt.s32.totalorder %s40, 1
      %s818 = scalar_select %p817, %s40, 1
      %p819 = scmp.lt.s32.totalorder %s816, 7
      %s820 = scalar_select %p819, %s816, 7
      %s821 = smul.addr %s818, 8
      %s822 = sadd.s32 %s820, %s821
      %s823 = smul.addr %s822, 8
      %s824 = scalar_lea.vmem %s25, %s823
      %s825 = smul.u32 4, %s41
      %p826 = scmp.lt.s32.totalorder %s40, 1
      %s827 = scalar_select %p826, %s40, 1
      %p828 = scmp.lt.s32.totalorder %s825, 7
      %s829 = scalar_select %p828, %s825, 7
      %s830 = smul.addr %s827, 8
      %s831 = sadd.s32 %s829, %s830
      %s832 = smul.addr %s831, 8
      %s833 = scalar_lea.vmem %s0, %s832
      %s834 = smul.u32 4, %s41
      %p835 = scmp.lt.s32.totalorder %s40, 1
      %s836 = scalar_select %p835, %s40, 1
      %s837 = smul.addr %s836, 8
      %s838 = smul.addr %s837, 8
      %s839 = scalar_lea.vmem %s1, %s838
      %p840 = scmp.lt.s32.totalorder %s40, 1
      %s841 = scalar_select %p840, %s40, 1
      %s842 = smul.addr %s841, 8
      %s843 = scalar_lea.vmem %s2, %s842
      %p844 = scmp.lt.s32.totalorder %s40, 1
      %s845 = scalar_select %p844, %s40, 1
      %s846 = smul.addr %s845, 8
      %s847 = scalar_lea.vmem %s3, %s846
      %s848 = smul.u32 4, %s41
      %p849 = scmp.lt.s32.totalorder %s40, 1
      %s850 = scalar_select %p849, %s40, 1
      %p851 = scmp.lt.s32.totalorder %s848, 7
      %s852 = scalar_select %p851, %s848, 7
      %s853 = smul.addr %s850, 8
      %s854 = sadd.s32 %s852, %s853
      %s855 = smul.addr %s854, 8
      %s856 = scalar_lea.vmem %s25, %s855
      %s857 = smul.u32 4, %s41
      %v859 = vld [vmem:[%s4] sm:$0x3f]
      %v860 = vld [vmem:[%s847] sm:$0x3f]
      %v861 = vadd.f32 %v859, %v860
      %p862 = scmp.eq.s32.totalorder %s41, 0
      // Predicated region
      $region121: #{tpu_custom_call.1} parent=119 // pred_check
        %p863 = pneg %p862
      $region122: #{tpu_custom_call.1} parent=119 // pred_check_branch
        %865 = sbr.rel (%p863) target = $region124
      $region123: #{tpu_custom_call.1} parent=119 // pred_region
        %v866 = vld [vmem:[%s843] sm:$0xff]
        %v867 = vpack.c.bf16 %v866, %v866
        %v868 = vld [vmem:[%s15] sm:$0xff]
        %v869 = vld [vmem:[%s15 + $0x8] sm:$0xff]
        %v870 = vld [vmem:[%s15 + $0x10] sm:$0xff]
        %v871 = vld [vmem:[%s15 + $0x18] sm:$0xff]
        %v872 = vld [vmem:[%s15 + $0x20] sm:$0xff]
        %v873 = vld [vmem:[%s15 + $0x28] sm:$0xff]
        %v874 = vld [vmem:[%s15 + $0x30] sm:$0xff]
        %v875 = vld [vmem:[%s15 + $0x38] sm:$0xff]
        %v876 = vld [vmem:[%s16] sm:$0xf]
        %v878 = vlaneseq
        %v879 = vshrl.u32 %v878, 7
        %v880 = vsub.s32 0, %v879
        %v881 = vrot.slane %v876, %v880
        %v882 = vlaneseq
        %v883 = vshrl.u32 %v882, 7
        %v884 = vsub.s32 1, %v883
        %v885 = vrot.slane %v876, %v884
        %v886 = vlaneseq
        %v887 = vshrl.u32 %v886, 7
        %v888 = vsub.s32 2, %v887
        %v889 = vrot.slane %v876, %v888
        %v890 = vlaneseq
        %v891 = vshrl.u32 %v890, 7
        %v892 = vsub.s32 3, %v891
        %v893 = vrot.slane %v876, %v892
        %v906 = vunpack.c.l.b16 %v868
        %v907 = vunpack.c.h.b16 %v868
        %v908 = vunpack.c.l.b16 %v869
        %v909 = vunpack.c.h.b16 %v869
        %v910 = vunpack.c.l.b16 %v870
        %v911 = vunpack.c.h.b16 %v870
        %v912 = vunpack.c.l.b16 %v871
        %v913 = vunpack.c.h.b16 %v871
        %v914 = vunpack.c.l.b16 %v872
        %v915 = vunpack.c.h.b16 %v872
        %v916 = vunpack.c.l.b16 %v873
        %v917 = vunpack.c.h.b16 %v873
        %v918 = vunpack.c.l.b16 %v874
        %v919 = vunpack.c.h.b16 %v874
        %v920 = vunpack.c.l.b16 %v875
        %v921 = vunpack.c.h.b16 %v875
        %v922 = vpack.c.b16 %v910, %v906
        %v923 = vpack.c.b16 %v911, %v907
        %v924 = vpack.c.b16 %v912, %v908
        %v925 = vpack.c.b16 %v913, %v909
        %v926 = vpack.c.b16 %v918, %v914
        %v927 = vpack.c.b16 %v919, %v915
        %v928 = vpack.c.b16 %v920, %v916
        %v929 = vpack.c.b16 %v921, %v917
        %vm938 = vcmask 261120
        %v940 = vsel %vm938, %v867, 0
        %942 = vmatprep.subr.bf16.mxu0 %v923
        %943 = vmatpush1.bf16.msra.mxu0 %v922
        %944 = vmatprep.subr.bf16.mxu0 %v927
        %945 = vmatpush1.bf16.msra.mxu0 %v926
        %946 = vmatprep.subr.bf16.mxu0 0
        %947 = vmatpush1.bf16.msra.mxu0 0
        %948 = vmatprep.subr.bf16.mxu0 0
        %949 = vmatpush1.bf16.msra.mxu0 0
        %950 = vmatprep.subr.bf16.mxu0 0
        %951 = vmatpush1.bf16.msra.mxu0 0
        %952 = vmatprep.subr.bf16.mxu0 0
        %953 = vmatpush1.bf16.msra.mxu0 0
        %954 = vmatprep.subr.bf16.mxu0 0
        %955 = vmatpush1.bf16.msra.mxu0 0
        %956 = vmatprep.subr.bf16.mxu0 0
        %957 = vmatpush1.bf16.msra.mxu0 0
        %958 = vmatprep.subr.bf16.mxu0 0
        %959 = vmatpush1.bf16.msra.mxu0 0
        %960 = vmatprep.subr.bf16.mxu0 0
        %961 = vmatpush1.bf16.msra.mxu0 0
        %962 = vmatprep.subr.bf16.mxu0 0
        %963 = vmatpush1.bf16.msra.mxu0 0
        %964 = vmatprep.subr.bf16.mxu0 0
        %965 = vmatpush1.bf16.msra.mxu0 0
        %966 = vmatprep.subr.bf16.mxu0 0
        %967 = vmatpush1.bf16.msra.mxu0 0
        %968 = vmatprep.subr.bf16.mxu0 0
        %969 = vmatpush1.bf16.msra.mxu0 0
        %970 = vmatprep.subr.bf16.mxu0 0
        %971 = vmatpush1.bf16.msra.mxu0 0
        %972 = vmatprep.subr.bf16.mxu0 0
        %973 = vmatpush1.bf16.msra.mxu0 0
        %974 = vmatprep.mubr.bf16.mxu0 0
        %975 = vmatmul.mubr.bf16.gmra.mrb[0].mxu0 %v940
        %v976 = vpop.f32.mrb[0].mxu0
        %v977 = vadd.f32 %v881, %v976
        %v978 = vpop.f32.mrb[0].mxu0
        %v979 = vadd.f32 %v885, %v978
        %v980 = vpop.f32.mrb[0].mxu0
        %v981 = vpop.f32.mrb[0].mxu0
        %982 = vdwg.mxu0
        %983 = vmatprep.subr.bf16.mxu0 %v925
        %984 = vmatpush1.bf16.msra.mxu0 %v924
        %985 = vmatprep.subr.bf16.mxu0 %v929
        %986 = vmatpush1.bf16.msra.mxu0 %v928
        %987 = vmatprep.subr.bf16.mxu0 0
        %988 = vmatpush1.bf16.msra.mxu0 0
        %989 = vmatprep.subr.bf16.mxu0 0
        %990 = vmatpush1.bf16.msra.mxu0 0
        %991 = vmatprep.subr.bf16.mxu0 0
        %992 = vmatpush1.bf16.msra.mxu0 0
        %993 = vmatprep.subr.bf16.mxu0 0
        %994 = vmatpush1.bf16.msra.mxu0 0
        %995 = vmatprep.subr.bf16.mxu0 0
        %996 = vmatpush1.bf16.msra.mxu0 0
        %997 = vmatprep.subr.bf16.mxu0 0
        %998 = vmatpush1.bf16.msra.mxu0 0
        %999 = vmatprep.subr.bf16.mxu0 0
        %1000 = vmatpush1.bf16.msra.mxu0 0
        %1001 = vmatprep.subr.bf16.mxu0 0
        %1002 = vmatpush1.bf16.msra.mxu0 0
        %1003 = vmatprep.subr.bf16.mxu0 0
        %1004 = vmatpush1.bf16.msra.mxu0 0
        %1005 = vmatprep.subr.bf16.mxu0 0
        %1006 = vmatpush1.bf16.msra.mxu0 0
        %1007 = vmatprep.subr.bf16.mxu0 0
        %1008 = vmatpush1.bf16.msra.mxu0 0
        %1009 = vmatprep.subr.bf16.mxu0 0
        %1010 = vmatpush1.bf16.msra.mxu0 0
        %1011 = vmatprep.subr.bf16.mxu0 0
        %1012 = vmatpush1.bf16.msra.mxu0 0
        %1013 = vmatprep.subr.bf16.mxu0 0
        %1014 = vmatpush1.bf16.msra.mxu0 0
        %1015 = vmatprep.mubr.bf16.mxu0 0
        %1016 = vmatmul.mubr.bf16.gmra.mrb[0].mxu0 %v940
        %v1017 = vpop.f32.mrb[0].mxu0
        %v1018 = vadd.f32 %v889, %v1017
        %v1019 = vpop.f32.mrb[0].mxu0
        %v1020 = vadd.f32 %v893, %v1019
        %v1021 = vpop.f32.mrb[0].mxu0
        %v1022 = vpop.f32.mrb[0].mxu0
        %1023 = vdwg.mxu0
        %v1024 = vpack.c.bf16 %v977, %v977
        %v1025 = vpack.c.bf16 %v979, %v979
        %v1026 = vpack.c.bf16 %v1018, %v1018
        %v1027 = vpack.c.bf16 %v1020, %v1020
        %v1032 = vunpack.c.l.b16 %v1024
        %v1033 = vunpack.c.l.b16 %v1025
        %v1034 = vunpack.c.l.b16 %v1026
        %v1035 = vunpack.c.l.b16 %v1027
        %v1036 = vpack.c.b16 %v1033, %v1032
        %v1037 = vpack.c.b16 %v1035, %v1034
        %1040 = vst [vmem:[#allocation4] sm:$0xff] %v1036
        %1041 = vst [vmem:[#allocation4 + $0x8] sm:$0xff] %v1037
        %v1042 = vld [vmem:[%s17] sm:$0xff]
        %v1043 = vld [vmem:[%s17 + $0x8] sm:$0xff]
        %v1044 = vld [vmem:[%s17 + $0x10] sm:$0xff]
        %v1045 = vld [vmem:[%s17 + $0x18] sm:$0xff]
        %v1046 = vld [vmem:[%s17 + $0x20] sm:$0xff]
        %v1047 = vld [vmem:[%s17 + $0x28] sm:$0xff]
        %v1048 = vld [vmem:[%s17 + $0x30] sm:$0xff]
        %v1049 = vld [vmem:[%s17 + $0x38] sm:$0xff]
        %v1050 = vld [vmem:[%s18] sm:$0xf]
        %v1052 = vlaneseq
        %v1053 = vshrl.u32 %v1052, 7
        %v1054 = vsub.s32 0, %v1053
        %v1055 = vrot.slane %v1050, %v1054
        %v1056 = vlaneseq
        %v1057 = vshrl.u32 %v1056, 7
        %v1058 = vsub.s32 1, %v1057
        %v1059 = vrot.slane %v1050, %v1058
        %v1060 = vlaneseq
        %v1061 = vshrl.u32 %v1060, 7
        %v1062 = vsub.s32 2, %v1061
        %v1063 = vrot.slane %v1050, %v1062
        %v1064 = vlaneseq
        %v1065 = vshrl.u32 %v1064, 7
        %v1066 = vsub.s32 3, %v1065
        %v1067 = vrot.slane %v1050, %v1066
        %v1080 = vunpack.c.l.b16 %v1042
        %v1081 = vunpack.c.h.b16 %v1042
        %v1082 = vunpack.c.l.b16 %v1043
        %v1083 = vunpack.c.h.b16 %v1043
        %v1084 = vunpack.c.l.b16 %v1044
        %v1085 = vunpack.c.h.b16 %v1044
        %v1086 = vunpack.c.l.b16 %v1045
        %v1087 = vunpack.c.h.b16 %v1045
        %v1088 = vunpack.c.l.b16 %v1046
        %v1089 = vunpack.c.h.b16 %v1046
        %v1090 = vunpack.c.l.b16 %v1047
        %v1091 = vunpack.c.h.b16 %v1047
        %v1092 = vunpack.c.l.b16 %v1048
        %v1093 = vunpack.c.h.b16 %v1048
        %v1094 = vunpack.c.l.b16 %v1049
        %v1095 = vunpack.c.h.b16 %v1049
        %v1096 = vpack.c.b16 %v1084, %v1080
        %v1097 = vpack.c.b16 %v1085, %v1081
        %v1098 = vpack.c.b16 %v1086, %v1082
        %v1099 = vpack.c.b16 %v1087, %v1083
        %v1100 = vpack.c.b16 %v1092, %v1088
        %v1101 = vpack.c.b16 %v1093, %v1089
        %v1102 = vpack.c.b16 %v1094, %v1090
        %v1103 = vpack.c.b16 %v1095, %v1091
        %1112 = vmatprep.subr.bf16.mxu0 %v1097
        %1113 = vmatpush1.bf16.msra.mxu0 %v1096
        %1114 = vmatprep.subr.bf16.mxu0 %v1101
        %1115 = vmatpush1.bf16.msra.mxu0 %v1100
        %1116 = vmatprep.subr.bf16.mxu0 0
        %1117 = vmatpush1.bf16.msra.mxu0 0
        %1118 = vmatprep.subr.bf16.mxu0 0
        %1119 = vmatpush1.bf16.msra.mxu0 0
        %1120 = vmatprep.subr.bf16.mxu0 0
        %1121 = vmatpush1.bf16.msra.mxu0 0
        %1122 = vmatprep.subr.bf16.mxu0 0
        %1123 = vmatpush1.bf16.msra.mxu0 0
        %1124 = vmatprep.subr.bf16.mxu0 0
        %1125 = vmatpush1.bf16.msra.mxu0 0
        %1126 = vmatprep.subr.bf16.mxu0 0
        %1127 = vmatpush1.bf16.msra.mxu0 0
        %1128 = vmatprep.subr.bf16.mxu0 0
        %1129 = vmatpush1.bf16.msra.mxu0 0
        %1130 = vmatprep.subr.bf16.mxu0 0
        %1131 = vmatpush1.bf16.msra.mxu0 0
        %1132 = vmatprep.subr.bf16.mxu0 0
        %1133 = vmatpush1.bf16.msra.mxu0 0
        %1134 = vmatprep.subr.bf16.mxu0 0
        %1135 = vmatpush1.bf16.msra.mxu0 0
        %1136 = vmatprep.subr.bf16.mxu0 0
        %1137 = vmatpush1.bf16.msra.mxu0 0
        %1138 = vmatprep.subr.bf16.mxu0 0
        %1139 = vmatpush1.bf16.msra.mxu0 0
        %1140 = vmatprep.subr.bf16.mxu0 0
        %1141 = vmatpush1.bf16.msra.mxu0 0
        %1142 = vmatprep.subr.bf16.mxu0 0
        %1143 = vmatpush1.bf16.msra.mxu0 0
        %1144 = vmatprep.mubr.bf16.mxu0 0
        %1145 = vmatmul.mubr.bf16.gmra.mrb[0].mxu0 %v940
        %v1146 = vpop.f32.mrb[0].mxu0
        %v1147 = vadd.f32 %v1055, %v1146
        %v1148 = vpop.f32.mrb[0].mxu0
        %v1149 = vadd.f32 %v1059, %v1148
        %v1150 = vpop.f32.mrb[0].mxu0
        %v1151 = vpop.f32.mrb[0].mxu0
        %1152 = vdwg.mxu0
        %1153 = vmatprep.subr.bf16.mxu0 %v1099
        %1154 = vmatpush1.bf16.msra.mxu0 %v1098
        %1155 = vmatprep.subr.bf16.mxu0 %v1103
        %1156 = vmatpush1.bf16.msra.mxu0 %v1102
        %1157 = vmatprep.subr.bf16.mxu0 0
        %1158 = vmatpush1.bf16.msra.mxu0 0
        %1159 = vmatprep.subr.bf16.mxu0 0
        %1160 = vmatpush1.bf16.msra.mxu0 0
        %1161 = vmatprep.subr.bf16.mxu0 0
        %1162 = vmatpush1.bf16.msra.mxu0 0
        %1163 = vmatprep.subr.bf16.mxu0 0
        %1164 = vmatpush1.bf16.msra.mxu0 0
        %1165 = vmatprep.subr.bf16.mxu0 0
        %1166 = vmatpush1.bf16.msra.mxu0 0
        %1167 = vmatprep.subr.bf16.mxu0 0
        %1168 = vmatpush1.bf16.msra.mxu0 0
        %1169 = vmatprep.subr.bf16.mxu0 0
        %1170 = vmatpush1.bf16.msra.mxu0 0
        %1171 = vmatprep.subr.bf16.mxu0 0
        %1172 = vmatpush1.bf16.msra.mxu0 0
        %1173 = vmatprep.subr.bf16.mxu0 0
        %1174 = vmatpush1.bf16.msra.mxu0 0
        %1175 = vmatprep.subr.bf16.mxu0 0
        %1176 = vmatpush1.bf16.msra.mxu0 0
        %1177 = vmatprep.subr.bf16.mxu0 0
        %1178 = vmatpush1.bf16.msra.mxu0 0
        %1179 = vmatprep.subr.bf16.mxu0 0
        %1180 = vmatpush1.bf16.msra.mxu0 0
        %1181 = vmatprep.subr.bf16.mxu0 0
        %1182 = vmatpush1.bf16.msra.mxu0 0
        %1183 = vmatprep.subr.bf16.mxu0 0
        %1184 = vmatpush1.bf16.msra.mxu0 0
        %1185 = vmatprep.mubr.bf16.mxu0 0
        %1186 = vmatmul.mubr.bf16.gmra.mrb[0].mxu0 %v940
        %v1187 = vpop.f32.mrb[0].mxu0
        %v1188 = vadd.f32 %v1063, %v1187
        %v1189 = vpop.f32.mrb[0].mxu0
        %v1190 = vadd.f32 %v1067, %v1189
        %v1191 = vpop.f32.mrb[0].mxu0
        %v1192 = vpop.f32.mrb[0].mxu0
        %1193 = vdwg.mxu0
        %v1194 = vpack.c.bf16 %v1147, %v1147
        %v1195 = vpack.c.bf16 %v1149, %v1149
        %v1196 = vpack.c.bf16 %v1188, %v1188
        %v1197 = vpack.c.bf16 %v1190, %v1190
        %v1202 = vunpack.c.l.b16 %v1194
        %v1203 = vunpack.c.l.b16 %v1195
        %v1204 = vunpack.c.l.b16 %v1196
        %v1205 = vunpack.c.l.b16 %v1197
        %v1206 = vpack.c.b16 %v1203, %v1202
        %v1207 = vpack.c.b16 %v1205, %v1204
        %1210 = vst [vmem:[#allocation5] sm:$0xff] %v1206
        %1211 = vst [vmem:[#allocation5 + $0x8] sm:$0xff] %v1207
        loop: start=0, step=1, limit=2
        $region125: #{tpu_custom_call.1} parent=123 // loop_pre_header
          _
        $region126: #{tpu_custom_call.1} parent=123 // loop_header
          %s1213 = sphi 0, %s1217
          %p1214 = scmp.ge.s32.totalorder %s1213, 2
        $region127: #{tpu_custom_call.1} parent=123 // loop_header_branch
          %1216 = sbr.rel (%p1214) target = $region131
        $region128: #{tpu_custom_call.1} parent=123 // loop_body
          %s1218 = smul.u32 %s1213, 32
          %s1219 = scalar_lea.vmem %s839, %s1218
          %v1220 = vld [vmem:[%s1219] sm:$0xff]
          %v1221 = vld [vmem:[%s1219 + $0x8] sm:$0xff]
          %v1222 = vld [vmem:[%s1219 + $0x10] sm:$0xff]
          %v1223 = vld [vmem:[%s1219 + $0x18] sm:$0xff]
          %v1224 = vsel %vm938, %v1220, 0.0
          %1225 = vadd.xlane.f32.xlu0 %v1224
          %v1226 = vpop.xlane.xlu0 %1225
          %v1227 = vsel %vm938, %v1221, 0.0
          %1228 = vadd.xlane.f32.xlu0 %v1227
          %v1229 = vpop.xlane.xlu0 %1228
          %v1230 = vsel %vm938, %v1222, 0.0
          %1231 = vadd.xlane.f32.xlu0 %v1230
          %v1232 = vpop.xlane.xlu0 %1231
          %v1233 = vsel %vm938, %v1223, 0.0
          %1234 = vadd.xlane.f32.xlu0 %v1233
          %v1235 = vpop.xlane.xlu0 %1234
          %v1236 = vrcp.pop 32.0
          %v1237 = vmul.f32 %v1226, %v1236
          %v1238 = vmul.f32 %v1229, %v1236
          %v1239 = vmul.f32 %v1232, %v1236
          %v1240 = vmul.f32 %v1235, %v1236
          %v1241 = vsub.f32 %v1220, %v1237
          %v1242 = vsub.f32 %v1221, %v1238
          %v1243 = vsub.f32 %v1222, %v1239
          %v1244 = vsub.f32 %v1223, %v1240
          %v1245 = vmul.f32 %v1241, %v1241
          %v1246 = vmul.f32 %v1242, %v1242
          %v1247 = vmul.f32 %v1243, %v1243
          %v1248 = vmul.f32 %v1244, %v1244
          %v1249 = vsel %vm938, %v1245, 0.0
          %1250 = vadd.xlane.f32.xlu0 %v1249
          %v1251 = vpop.xlane.xlu0 %1250
          %v1252 = vsel %vm938, %v1246, 0.0
          %1253 = vadd.xlane.f32.xlu0 %v1252
          %v1254 = vpop.xlane.xlu0 %1253
          %v1255 = vsel %vm938, %v1247, 0.0
          %1256 = vadd.xlane.f32.xlu0 %v1255
          %v1257 = vpop.xlane.xlu0 %1256
          %v1258 = vsel %vm938, %v1248, 0.0
          %1259 = vadd.xlane.f32.xlu0 %v1258
          %v1260 = vpop.xlane.xlu0 %1259
          %v1261 = vmul.f32 %v1251, %v1236
          %v1262 = vmul.f32 %v1254, %v1236
          %v1263 = vmul.f32 %v1257, %v1236
          %v1264 = vmul.f32 %v1260, %v1236
          %v1265 = vadd.f32 %v1261, 1e-06
          %v1266 = vadd.f32 %v1262, 1e-06
          %v1267 = vadd.f32 %v1263, 1e-06
          %v1268 = vadd.f32 %v1264, 1e-06
          %v1269 = vrsqrt.pop %v1265
          %v1270 = vrsqrt.pop %v1266
          %v1271 = vrsqrt.pop %v1267
          %v1272 = vrsqrt.pop %v1268
          %v1273 = vmul.f32 %v1241, %v1269
          %v1274 = vmul.f32 %v1242, %v1270
          %v1275 = vmul.f32 %v1243, %v1271
          %v1276 = vmul.f32 %v1244, %v1272
          %v1277 = vadd.f32 %v861, 1.0
          %v1278 = vlaneseq
          %v1279 = vshrl.u32 %v1278, 7
          %v1280 = vsub.s32 1, %v1279
          %v1281 = vrot.slane %v1277, %v1280
          %v1282 = vmul.f32 %v1273, %v1281
          %v1283 = vmul.f32 %v1274, %v1281
          %v1284 = vmul.f32 %v1275, %v1281
          %v1285 = vmul.f32 %v1276, %v1281
          %v1286 = vlaneseq
          %v1287 = vshrl.u32 %v1286, 7
          %v1288 = vsub.s32 0, %v1287
          %v1289 = vrot.slane %v861, %v1288
          %v1290 = vadd.f32 %v1282, %v1289
          %v1291 = vadd.f32 %v1283, %v1289
          %v1292 = vadd.f32 %v1284, %v1289
          %v1293 = vadd.f32 %v1285, %v1289
          %v1294 = vpack.c.bf16 %v1291, %v1290
          %v1295 = vpack.c.bf16 %v1293, %v1292
          %v1296 = vld [vmem:[%s7] sm:$0xff]
          %v1297 = vld [vmem:[%s7 + $0x8] sm:$0xff]
          %v1298 = vld [vmem:[%s7 + $0x10] sm:$0xff]
          %v1299 = vld [vmem:[%s7 + $0x18] sm:$0xff]
          %v1300 = vld [vmem:[%s7 + $0x20] sm:$0xff]
          %v1301 = vld [vmem:[%s7 + $0x28] sm:$0xff]
          %v1302 = vld [vmem:[%s7 + $0x30] sm:$0xff]
          %v1303 = vld [vmem:[%s7 + $0x38] sm:$0xff]
          %v1304 = vld [vmem:[%s8] sm:$0xf]
          %v1306 = vlaneseq
          %v1307 = vshrl.u32 %v1306, 7
          %v1308 = vsub.s32 0, %v1307
          %v1309 = vrot.slane %v1304, %v1308
          %v1310 = vlaneseq
          %v1311 = vshrl.u32 %v1310, 7
          %v1312 = vsub.s32 1, %v1311
          %v1313 = vrot.slane %v1304, %v1312
          %v1314 = vlaneseq
          %v1315 = vshrl.u32 %v1314, 7
          %v1316 = vsub.s32 2, %v1315
          %v1317 = vrot.slane %v1304, %v1316
          %v1318 = vlaneseq
          %v1319 = vshrl.u32 %v1318, 7
          %v1320 = vsub.s32 3, %v1319
          %v1321 = vrot.slane %v1304, %v1320
          %v1334 = vunpack.c.l.b16 %v1296
          %v1335 = vunpack.c.h.b16 %v1296
          %v1336 = vunpack.c.l.b16 %v1297
          %v1337 = vunpack.c.h.b16 %v1297
          %v1338 = vunpack.c.l.b16 %v1298
          %v1339 = vunpack.c.h.b16 %v1298
          %v1340 = vunpack.c.l.b16 %v1299
          %v1341 = vunpack.c.h.b16 %v1299
          %v1342 = vunpack.c.l.b16 %v1300
          %v1343 = vunpack.c.h.b16 %v1300
          %v1344 = vunpack.c.l.b16 %v1301
          %v1345 = vunpack.c.h.b16 %v1301
          %v1346 = vunpack.c.l.b16 %v1302
          %v1347 = vunpack.c.h.b16 %v1302
          %v1348 = vunpack.c.l.b16 %v1303
          %v1349 = vunpack.c.h.b16 %v1303
          %v1350 = vpack.c.b16 %v1338, %v1334
          %v1351 = vpack.c.b16 %v1339, %v1335
          %v1352 = vpack.c.b16 %v1340, %v1336
          %v1353 = vpack.c.b16 %v1341, %v1337
          %v1354 = vpack.c.b16 %v1346, %v1342
          %v1355 = vpack.c.b16 %v1347, %v1343
          %v1356 = vpack.c.b16 %v1348, %v1344
          %v1357 = vpack.c.b16 %v1349, %v1345
          %v1367 = vsel %vm938, %v1294, 0
          %v1370 = vsel %vm938, %v1295, 0
          %1372 = vmatprep.subr.bf16.mxu0 %v1351
          %1373 = vmatpush1.bf16.msra.mxu0 %v1350
          %1374 = vmatprep.subr.bf16.mxu0 %v1355
          %1375 = vmatpush1.bf16.msra.mxu0 %v1354
          %1376 = vmatprep.subr.bf16.mxu0 0
          %1377 = vmatpush1.bf16.msra.mxu0 0
          %1378 = vmatprep.subr.bf16.mxu0 0
          %1379 = vmatpush1.bf16.msra.mxu0 0
          %1380 = vmatprep.subr.bf16.mxu0 0
          %1381 = vmatpush1.bf16.msra.mxu0 0
          %1382 = vmatprep.subr.bf16.mxu0 0
          %1383 = vmatpush1.bf16.msra.mxu0 0
          %1384 = vmatprep.subr.bf16.mxu0 0
          %1385 = vmatpush1.bf16.msra.mxu0 0
          %1386 = vmatprep.subr.bf16.mxu0 0
          %1387 = vmatpush1.bf16.msra.mxu0 0
          %1388 = vmatprep.subr.bf16.mxu0 0
          %1389 = vmatpush1.bf16.msra.mxu0 0
          %1390 = vmatprep.subr.bf16.mxu0 0
          %1391 = vmatpush1.bf16.msra.mxu0 0
          %1392 = vmatprep.subr.bf16.mxu0 0
          %1393 = vmatpush1.bf16.msra.mxu0 0
          %1394 = vmatprep.subr.bf16.mxu0 0
          %1395 = vmatpush1.bf16.msra.mxu0 0
          %1396 = vmatprep.subr.bf16.mxu0 0
          %1397 = vmatpush1.bf16.msra.mxu0 0
          %1398 = vmatprep.subr.bf16.mxu0 0
          %1399 = vmatpush1.bf16.msra.mxu0 0
          %1400 = vmatprep.subr.bf16.mxu0 0
          %1401 = vmatpush1.bf16.msra.mxu0 0
          %1402 = vmatprep.subr.bf16.mxu0 0
          %1403 = vmatpush1.bf16.msra.mxu0 0
          %1404 = vmatprep.mubr.bf16.mxu0 0
          %1405 = vmatmul.mubr.bf16.gmra.mrb[0].mxu0 %v1367
          %v1406 = vpop.f32.mrb[0].mxu0
          %v1407 = vadd.f32 %v1309, %v1406
          %v1408 = vpop.f32.mrb[0].mxu0
          %v1409 = vadd.f32 %v1313, %v1408
          %v1410 = vpop.f32.mrb[0].mxu0
          %v1411 = vadd.f32 %v1309, %v1410
          %v1412 = vpop.f32.mrb[0].mxu0
          %v1413 = vadd.f32 %v1313, %v1412
          %1414 = vmatprep.mubr.bf16.mxu0 0
          %1415 = vmatmul.mubr.bf16.gmra.mrb[0].mxu0 %v1370
          %v1416 = vpop.f32.mrb[0].mxu0
          %v1417 = vadd.f32 %v1309, %v1416
          %v1418 = vpop.f32.mrb[0].mxu0
          %v1419 = vadd.f32 %v1313, %v1418
          %v1420 = vpop.f32.mrb[0].mxu0
          %v1421 = vadd.f32 %v1309, %v1420
          %v1422 = vpop.f32.mrb[0].mxu0
          %v1423 = vadd.f32 %v1313, %v1422
          %1424 = vdwg.mxu0
          %1425 = vmatprep.subr.bf16.mxu0 %v1353
          %1426 = vmatpush1.bf16.msra.mxu0 %v1352
          %1427 = vmatprep.subr.bf16.mxu0 %v1357
          %1428 = vmatpush1.bf16.msra.mxu0 %v1356
          %1429 = vmatprep.subr.bf16.mxu0 0
          %1430 = vmatpush1.bf16.msra.mxu0 0
          %1431 = vmatprep.subr.bf16.mxu0 0
          %1432 = vmatpush1.bf16.msra.mxu0 0
          %1433 = vmatprep.subr.bf16.mxu0 0
          %1434 = vmatpush1.bf16.msra.mxu0 0
          %1435 = vmatprep.subr.bf16.mxu0 0
          %1436 = vmatpush1.bf16.msra.mxu0 0
          %1437 = vmatprep.subr.bf16.mxu0 0
          %1438 = vmatpush1.bf16.msra.mxu0 0
          %1439 = vmatprep.subr.bf16.mxu0 0
          %1440 = vmatpush1.bf16.msra.mxu0 0
          %1441 = vmatprep.subr.bf16.mxu0 0
          %1442 = vmatpush1.bf16.msra.mxu0 0
          %1443 = vmatprep.subr.bf16.mxu0 0
          %1444 = vmatpush1.bf16.msra.mxu0 0
          %1445 = vmatprep.subr.bf16.mxu0 0
          %1446 = vmatpush1.bf16.msra.mxu0 0
          %1447 = vmatprep.subr.bf16.mxu0 0
          %1448 = vmatpush1.bf16.msra.mxu0 0
          %1449 = vmatprep.subr.bf16.mxu0 0
          %1450 = vmatpush1.bf16.msra.mxu0 0
          %1451 = vmatprep.subr.bf16.mxu0 0
          %1452 = vmatpush1.bf16.msra.mxu0 0
          %1453 = vmatprep.subr.bf16.mxu0 0
          %1454 = vmatpush1.bf16.msra.mxu0 0
          %1455 = vmatprep.subr.bf16.mxu0 0
          %1456 = vmatpush1.bf16.msra.mxu0 0
          %1457 = vmatprep.mubr.bf16.mxu0 0
          %1458 = vmatmul.mubr.bf16.gmra.mrb[0].mxu0 %v1367
          %v1459 = vpop.f32.mrb[0].mxu0
          %v1460 = vadd.f32 %v1317, %v1459
          %v1461 = vpop.f32.mrb[0].mxu0
          %v1462 = vadd.f32 %v1321, %v1461
          %v1463 = vpop.f32.mrb[0].mxu0
          %v1464 = vadd.f32 %v1317, %v1463
          %v1465 = vpop.f32.mrb[0].mxu0
          %v1466 = vadd.f32 %v1321, %v1465
          %1467 = vmatprep.mubr.bf16.mxu0 0
          %1468 = vmatmul.mubr.bf16.gmra.mrb[0].mxu0 %v1370
          %v1469 = vpop.f32.mrb[0].mxu0
          %v1470 = vadd.f32 %v1317, %v1469
          %v1471 = vpop.f32.mrb[0].mxu0
          %v1472 = vadd.f32 %v1321, %v1471
          %v1473 = vpop.f32.mrb[0].mxu0
          %v1474 = vadd.f32 %v1317, %v1473
          %v1475 = vpop.f32.mrb[0].mxu0
          %v1476 = vadd.f32 %v1321, %v1475
          %1477 = vdwg.mxu0
          %v1478 = vpack.c.bf16 %v1411, %v1407
          %v1479 = vpack.c.bf16 %v1413, %v1409
          %v1480 = vpack.c.bf16 %v1464, %v1460
          %v1481 = vpack.c.bf16 %v1466, %v1462
          %v1482 = vpack.c.bf16 %v1421, %v1417
          %v1483 = vpack.c.bf16 %v1423, %v1419
          %v1484 = vpack.c.bf16 %v1474, %v1470
          %v1485 = vpack.c.bf16 %v1476, %v1472
          %s1486 = sshra.s32 %s1218, 4
          %s1487 = sand.u32 %s1218, 15
          %s1488 = smul.u32 %s1486, 4
          %s1489 = smul.addr %s1488, 8
          %s1490 = scalar_lea.vmem [#allocation2], %s1489
          %1491 = vst [vmem:[%s1490] sm:$0xff] %v1478
          %1492 = vst [vmem:[%s1490 + $0x8] sm:$0xff] %v1479
          %1493 = vst [vmem:[%s1490 + $0x10] sm:$0xff] %v1480
          %1494 = vst [vmem:[%s1490 + $0x18] sm:$0xff] %v1481
          %1495 = vst [vmem:[%s1490 + $0x20] sm:$0xff] %v1482
          %1496 = vst [vmem:[%s1490 + $0x28] sm:$0xff] %v1483
          %1497 = vst [vmem:[%s1490 + $0x30] sm:$0xff] %v1484
          %1498 = vst [vmem:[%s1490 + $0x38] sm:$0xff] %v1485
          %v1499 = vld [vmem:[%s9] sm:$0xff]
          %v1500 = vld [vmem:[%s9 + $0x8] sm:$0xff]
          %v1501 = vld [vmem:[%s9 + $0x10] sm:$0xff]
          %v1502 = vld [vmem:[%s9 + $0x18] sm:$0xff]
          %v1503 = vld [vmem:[%s9 + $0x20] sm:$0xff]
          %v1504 = vld [vmem:[%s9 + $0x28] sm:$0xff]
          %v1505 = vld [vmem:[%s9 + $0x30] sm:$0xff]
          %v1506 = vld [vmem:[%s9 + $0x38] sm:$0xff]
          %v1507 = vld [vmem:[%s10] sm:$0xf]
          %v1509 = vlaneseq
          %v1510 = vshrl.u32 %v1509, 7
          %v1511 = vsub.s32 0, %v1510
          %v1512 = vrot.slane %v1507, %v1511
          %v1513 = vlaneseq
          %v1514 = vshrl.u32 %v1513, 7
          %v1515 = vsub.s32 1, %v1514
          %v1516 = vrot.slane %v1507, %v1515
          %v1517 = vlaneseq
          %v1518 = vshrl.u32 %v1517, 7
          %v1519 = vsub.s32 2, %v1518
          %v1520 = vrot.slane %v1507, %v1519
          %v1521 = vlaneseq
          %v1522 = vshrl.u32 %v1521, 7
          %v1523 = vsub.s32 3, %v1522
          %v1524 = vrot.slane %v1507, %v1523
          %v1537 = vunpack.c.l.b16 %v1499
          %v1538 = vunpack.c.h.b16 %v1499
          %v1539 = vunpack.c.l.b16 %v1500
          %v1540 = vunpack.c.h.b16 %v1500
          %v1541 = vunpack.c.l.b16 %v1501
          %v1542 = vunpack.c.h.b16 %v1501
          %v1543 = vunpack.c.l.b16 %v1502
          %v1544 = vunpack.c.h.b16 %v1502
          %v1545 = vunpack.c.l.b16 %v1503
          %v1546 = vunpack.c.h.b16 %v1503
          %v1547 = vunpack.c.l.b16 %v1504
          %v1548 = vunpack.c.h.b16 %v1504
          %v1549 = vunpack.c.l.b16 %v1505
          %v1550 = vunpack.c.h.b16 %v1505
          %v1551 = vunpack.c.l.b16 %v1506
          %v1552 = vunpack.c.h.b16 %v1506
          %v1553 = vpack.c.b16 %v1541, %v1537
          %v1554 = vpack.c.b16 %v1542, %v1538
          %v1555 = vpack.c.b16 %v1543, %v1539
          %v1556 = vpack.c.b16 %v1544, %v1540
          %v1557 = vpack.c.b16 %v1549, %v1545
          %v1558 = vpack.c.b16 %v1550, %v1546
          %v1559 = vpack.c.b16 %v1551, %v1547
          %v1560 = vpack.c.b16 %v1552, %v1548
          %1569 = vmatprep.subr.bf16.mxu0 %v1554
          %1570 = vmatpush1.bf16.msra.mxu0 %v1553
          %1571 = vmatprep.subr.bf16.mxu0 %v1558
          %1572 = vmatpush1.bf16.msra.mxu0 %v1557
          %1573 = vmatprep.subr.bf16.mxu0 0
          %1574 = vmatpush1.bf16.msra.mxu0 0
          %1575 = vmatprep.subr.bf16.mxu0 0
          %1576 = vmatpush1.bf16.msra.mxu0 0
          %1577 = vmatprep.subr.bf16.mxu0 0
          %1578 = vmatpush1.bf16.msra.mxu0 0
          %1579 = vmatprep.subr.bf16.mxu0 0
          %1580 = vmatpush1.bf16.msra.mxu0 0
          %1581 = vmatprep.subr.bf16.mxu0 0
          %1582 = vmatpush1.bf16.msra.mxu0 0
          %1583 = vmatprep.subr.bf16.mxu0 0
          %1584 = vmatpush1.bf16.msra.mxu0 0
          %1585 = vmatprep.subr.bf16.mxu0 0
          %1586 = vmatpush1.bf16.msra.mxu0 0
          %1587 = vmatprep.subr.bf16.mxu0 0
          %1588 = vmatpush1.bf16.msra.mxu0 0
          %1589 = vmatprep.subr.bf16.mxu0 0
          %1590 = vmatpush1.bf16.msra.mxu0 0
          %1591 = vmatprep.subr.bf16.mxu0 0
          %1592 = vmatpush1.bf16.msra.mxu0 0
          %1593 = vmatprep.subr.bf16.mxu0 0
          %1594 = vmatpush1.bf16.msra.mxu0 0
          %1595 = vmatprep.subr.bf16.mxu0 0
          %1596 = vmatpush1.bf16.msra.mxu0 0
          %1597 = vmatprep.subr.bf16.mxu0 0
          %1598 = vmatpush1.bf16.msra.mxu0 0
          %1599 = vmatprep.subr.bf16.mxu0 0
          %1600 = vmatpush1.bf16.msra.mxu0 0
          %1601 = vmatprep.mubr.bf16.mxu0 0
          %1602 = vmatmul.mubr.bf16.gmra.mrb[0].mxu0 %v1367
          %v1603 = vpop.f32.mrb[0].mxu0
          %v1604 = vadd.f32 %v1512, %v1603
          %v1605 = vpop.f32.mrb[0].mxu0
          %v1606 = vadd.f32 %v1516, %v1605
          %v1607 = vpop.f32.mrb[0].mxu0
          %v1608 = vadd.f32 %v1512, %v1607
          %v1609 = vpop.f32.mrb[0].mxu0
          %v1610 = vadd.f32 %v1516, %v1609
          %1611 = vmatprep.mubr.bf16.mxu0 0
          %1612 = vmatmul.mubr.bf16.gmra.mrb[0].mxu0 %v1370
          %v1613 = vpop.f32.mrb[0].mxu0
          %v1614 = vadd.f32 %v1512, %v1613
          %v1615 = vpop.f32.mrb[0].mxu0
          %v1616 = vadd.f32 %v1516, %v1615
          %v1617 = vpop.f32.mrb[0].mxu0
          %v1618 = vadd.f32 %v1512, %v1617
          %v1619 = vpop.f32.mrb[0].mxu0
          %v1620 = vadd.f32 %v1516, %v1619
          %1621 = vdwg.mxu0
          %1622 = vmatprep.subr.bf16.mxu0 %v1556
          %1623 = vmatpush1.bf16.msra.mxu0 %v1555
          %1624 = vmatprep.subr.bf16.mxu0 %v1560
          %1625 = vmatpush1.bf16.msra.mxu0 %v1559
          %1626 = vmatprep.subr.bf16.mxu0 0
          %1627 = vmatpush1.bf16.msra.mxu0 0
          %1628 = vmatprep.subr.bf16.mxu0 0
          %1629 = vmatpush1.bf16.msra.mxu0 0
          %1630 = vmatprep.subr.bf16.mxu0 0
          %1631 = vmatpush1.bf16.msra.mxu0 0
          %1632 = vmatprep.subr.bf16.mxu0 0
          %1633 = vmatpush1.bf16.msra.mxu0 0
          %1634 = vmatprep.subr.bf16.mxu0 0
          %1635 = vmatpush1.bf16.msra.mxu0 0
          %1636 = vmatprep.subr.bf16.mxu0 0
          %1637 = vmatpush1.bf16.msra.mxu0 0
          %1638 = vmatprep.subr.bf16.mxu0 0
          %1639 = vmatpush1.bf16.msra.mxu0 0
          %1640 = vmatprep.subr.bf16.mxu0 0
          %1641 = vmatpush1.bf16.msra.mxu0 0
          %1642 = vmatprep.subr.bf16.mxu0 0
          %1643 = vmatpush1.bf16.msra.mxu0 0
          %1644 = vmatprep.subr.bf16.mxu0 0
          %1645 = vmatpush1.bf16.msra.mxu0 0
          %1646 = vmatprep.subr.bf16.mxu0 0
          %1647 = vmatpush1.bf16.msra.mxu0 0
          %1648 = vmatprep.subr.bf16.mxu0 0
          %1649 = vmatpush1.bf16.msra.mxu0 0
          %1650 = vmatprep.subr.bf16.mxu0 0
          %1651 = vmatpush1.bf16.msra.mxu0 0
          %1652 = vmatprep.subr.bf16.mxu0 0
          %1653 = vmatpush1.bf16.msra.mxu0 0
          %1654 = vmatprep.mubr.bf16.mxu0 0
          %1655 = vmatmul.mubr.bf16.gmra.mrb[0].mxu0 %v1367
          %v1656 = vpop.f32.mrb[0].mxu0
          %v1657 = vadd.f32 %v1520, %v1656
          %v1658 = vpop.f32.mrb[0].mxu0
          %v1659 = vadd.f32 %v1524, %v1658
          %v1660 = vpop.f32.mrb[0].mxu0
          %v1661 = vadd.f32 %v1520, %v1660
          %v1662 = vpop.f32.mrb[0].mxu0
          %v1663 = vadd.f32 %v1524, %v1662
          %1664 = vmatprep.mubr.bf16.mxu0 0
          %1665 = vmatmul.mubr.bf16.gmra.mrb[0].mxu0 %v1370
          %v1666 = vpop.f32.mrb[0].mxu0
          %v1667 = vadd.f32 %v1520, %v1666
          %v1668 = vpop.f32.mrb[0].mxu0
          %v1669 = vadd.f32 %v1524, %v1668
          %v1670 = vpop.f32.mrb[0].mxu0
          %v1671 = vadd.f32 %v1520, %v1670
          %v1672 = vpop.f32.mrb[0].mxu0
          %v1673 = vadd.f32 %v1524, %v1672
          %1674 = vdwg.mxu0
          %v1675 = vpack.c.bf16 %v1608, %v1604
          %v1676 = vpack.c.bf16 %v1610, %v1606
          %v1677 = vpack.c.bf16 %v1661, %v1657
          %v1678 = vpack.c.bf16 %v1663, %v1659
          %v1679 = vpack.c.bf16 %v1618, %v1614
          %v1680 = vpack.c.bf16 %v1620, %v1616
          %v1681 = vpack.c.bf16 %v1671, %v1667
          %v1682 = vpack.c.bf16 %v1673, %v1669
          %s1683 = smul.addr %s1488, 8
          %s1684 = scalar_lea.vmem [#allocation3], %s1683
          %1685 = vst [vmem:[%s1684] sm:$0xff] %v1675
          %1686 = vst [vmem:[%s1684 + $0x8] sm:$0xff] %v1676
          %1687 = vst [vmem:[%s1684 + $0x10] sm:$0xff] %v1677
          %1688 = vst [vmem:[%s1684 + $0x18] sm:$0xff] %v1678
          %1689 = vst [vmem:[%s1684 + $0x20] sm:$0xff] %v1679
          %1690 = vst [vmem:[%s1684 + $0x28] sm:$0xff] %v1680
          %1691 = vst [vmem:[%s1684 + $0x30] sm:$0xff] %v1681
          %1692 = vst [vmem:[%s1684 + $0x38] sm:$0xff] %v1682
        $region129: #{tpu_custom_call.1} parent=123 // loop_footer
          %s1217 = sadd.s32 1, %s1213
        $region130: #{tpu_custom_call.1} parent=123 // loop_footer_branch
          %1212 = sbr.rel target = $region126
        $region131: #{tpu_custom_call.1} parent=123 // loop_exit
          _
      $region124: #{tpu_custom_call.1} parent=119 // pred_fallthru
        _
      %v1693 = vld [vmem:[%s833] sm:$0xff]
      %v1694 = vld [vmem:[%s833 + $0x8] sm:$0xff]
      %v1695 = vld [vmem:[%s833 + $0x10] sm:$0xff]
      %v1696 = vld [vmem:[%s833 + $0x18] sm:$0xff]
      %vm1697 = vcmask 261120
      %v1698 = vsel %vm1697, %v1693, 0.0
      %1699 = vadd.xlane.f32.xlu0 %v1698
      %v1700 = vpop.xlane.xlu0 %1699
      %v1701 = vsel %vm1697, %v1694, 0.0
      %1702 = vadd.xlane.f32.xlu0 %v1701
      %v1703 = vpop.xlane.xlu0 %1702
      %v1704 = vsel %vm1697, %v1695, 0.0
      %1705 = vadd.xlane.f32.xlu0 %v1704
      %v1706 = vpop.xlane.xlu0 %1705
      %v1707 = vsel %vm1697, %v1696, 0.0
      %1708 = vadd.xlane.f32.xlu0 %v1707
      %v1709 = vpop.xlane.xlu0 %1708
      %v1710 = vrcp.pop 32.0
      %v1711 = vmul.f32 %v1700, %v1710
      %v1712 = vmul.f32 %v1703, %v1710
      %v1713 = vmul.f32 %v1706, %v1710
      %v1714 = vmul.f32 %v1709, %v1710
      %v1715 = vsub.f32 %v1693, %v1711
      %v1716 = vsub.f32 %v1694, %v1712
      %v1717 = vsub.f32 %v1695, %v1713
      %v1718 = vsub.f32 %v1696, %v1714
      %v1719 = vmul.f32 %v1715, %v1715
      %v1720 = vmul.f32 %v1716, %v1716
      %v1721 = vmul.f32 %v1717, %v1717
      %v1722 = vmul.f32 %v1718, %v1718
      %v1723 = vsel %vm1697, %v1719, 0.0
      %1724 = vadd.xlane.f32.xlu0 %v1723
      %v1725 = vpop.xlane.xlu0 %1724
      %v1726 = vsel %vm1697, %v1720, 0.0
      %1727 = vadd.xlane.f32.xlu0 %v1726
      %v1728 = vpop.xlane.xlu0 %1727
      %v1729 = vsel %vm1697, %v1721, 0.0
      %1730 = vadd.xlane.f32.xlu0 %v1729
      %v1731 = vpop.xlane.xlu0 %1730
      %v1732 = vsel %vm1697, %v1722, 0.0
      %1733 = vadd.xlane.f32.xlu0 %v1732
      %v1734 = vpop.xlane.xlu0 %1733
      %v1735 = vmul.f32 %v1725, %v1710
      %v1736 = vmul.f32 %v1728, %v1710
      %v1737 = vmul.f32 %v1731, %v1710
      %v1738 = vmul.f32 %v1734, %v1710
      %v1739 = vadd.f32 %v1735, 1e-06
      %v1740 = vadd.f32 %v1736, 1e-06
      %v1741 = vadd.f32 %v1737, 1e-06
      %v1742 = vadd.f32 %v1738, 1e-06
      %v1743 = vrsqrt.pop %v1739
      %v1744 = vrsqrt.pop %v1740
      %v1745 = vrsqrt.pop %v1741
      %v1746 = vrsqrt.pop %v1742
      %v1747 = vmul.f32 %v1715, %v1743
      %v1748 = vmul.f32 %v1716, %v1744
      %v1749 = vmul.f32 %v1717, %v1745
      %v1750 = vmul.f32 %v1718, %v1746
      %v1751 = vadd.f32 %v861, 1.0
      %v1752 = vlaneseq
      %v1753 = vshrl.u32 %v1752, 7
      %v1754 = vsub.s32 1, %v1753
      %v1755 = vrot.slane %v1751, %v1754
      %v1756 = vmul.f32 %v1747, %v1755
      %v1757 = vmul.f32 %v1748, %v1755
      %v1758 = vmul.f32 %v1749, %v1755
      %v1759 = vmul.f32 %v1750, %v1755
      %v1760 = vlaneseq
      %v1761 = vshrl.u32 %v1760, 7
      %v1762 = vsub.s32 0, %v1761
      %v1763 = vrot.slane %v861, %v1762
      %v1764 = vadd.f32 %v1756, %v1763
      %v1765 = vadd.f32 %v1757, %v1763
      %v1766 = vadd.f32 %v1758, %v1763
      %v1767 = vadd.f32 %v1759, %v1763
      %v1768 = vpack.c.bf16 %v1765, %v1764
      %v1769 = vpack.c.bf16 %v1767, %v1766
      %v1770 = vld [vmem:[%s5] sm:$0xff]
      %v1771 = vld [vmem:[%s5 + $0x8] sm:$0xff]
      %v1772 = vld [vmem:[%s5 + $0x10] sm:$0xff]
      %v1773 = vld [vmem:[%s5 + $0x18] sm:$0xff]
      %v1774 = vld [vmem:[%s5 + $0x20] sm:$0xff]
      %v1775 = vld [vmem:[%s5 + $0x28] sm:$0xff]
      %v1776 = vld [vmem:[%s5 + $0x30] sm:$0xff]
      %v1777 = vld [vmem:[%s5 + $0x38] sm:$0xff]
      %v1778 = vld [vmem:[%s6] sm:$0xf]
      %v1780 = vlaneseq
      %v1781 = vshrl.u32 %v1780, 7
      %v1782 = vsub.s32 0, %v1781
      %v1783 = vrot.slane %v1778, %v1782
      %v1784 = vlaneseq
      %v1785 = vshrl.u32 %v1784, 7
      %v1786 = vsub.s32 1, %v1785
      %v1787 = vrot.slane %v1778, %v1786
      %v1788 = vlaneseq
      %v1789 = vshrl.u32 %v1788, 7
      %v1790 = vsub.s32 2, %v1789
      %v1791 = vrot.slane %v1778, %v1790
      %v1792 = vlaneseq
      %v1793 = vshrl.u32 %v1792, 7
      %v1794 = vsub.s32 3, %v1793
      %v1795 = vrot.slane %v1778, %v1794
      %v1808 = vunpack.c.l.b16 %v1770
      %v1809 = vunpack.c.h.b16 %v1770
      %v1810 = vunpack.c.l.b16 %v1771
      %v1811 = vunpack.c.h.b16 %v1771
      %v1812 = vunpack.c.l.b16 %v1772
      %v1813 = vunpack.c.h.b16 %v1772
      %v1814 = vunpack.c.l.b16 %v1773
      %v1815 = vunpack.c.h.b16 %v1773
      %v1816 = vunpack.c.l.b16 %v1774
      %v1817 = vunpack.c.h.b16 %v1774
      %v1818 = vunpack.c.l.b16 %v1775
      %v1819 = vunpack.c.h.b16 %v1775
      %v1820 = vunpack.c.l.b16 %v1776
      %v1821 = vunpack.c.h.b16 %v1776
      %v1822 = vunpack.c.l.b16 %v1777
      %v1823 = vunpack.c.h.b16 %v1777
      %v1824 = vpack.c.b16 %v1812, %v1808
      %v1825 = vpack.c.b16 %v1813, %v1809
      %v1826 = vpack.c.b16 %v1814, %v1810
      %v1827 = vpack.c.b16 %v1815, %v1811
      %v1828 = vpack.c.b16 %v1820, %v1816
      %v1829 = vpack.c.b16 %v1821, %v1817
      %v1830 = vpack.c.b16 %v1822, %v1818
      %v1831 = vpack.c.b16 %v1823, %v1819
      %v1841 = vsel %vm1697, %v1768, 0
      %v1844 = vsel %vm1697, %v1769, 0
      %1846 = vmatprep.subr.bf16.mxu0 %v1825
      %1847 = vmatpush1.bf16.msra.mxu0 %v1824
      %1848 = vmatprep.subr.bf16.mxu0 %v1829
      %1849 = vmatpush1.bf16.msra.mxu0 %v1828
      %1850 = vmatprep.subr.bf16.mxu0 0
      %1851 = vmatpush1.bf16.msra.mxu0 0
      %1852 = vmatprep.subr.bf16.mxu0 0
      %1853 = vmatpush1.bf16.msra.mxu0 0
      %1854 = vmatprep.subr.bf16.mxu0 0
      %1855 = vmatpush1.bf16.msra.mxu0 0
      %1856 = vmatprep.subr.bf16.mxu0 0
      %1857 = vmatpush1.bf16.msra.mxu0 0
      %1858 = vmatprep.subr.bf16.mxu0 0
      %1859 = vmatpush1.bf16.msra.mxu0 0
      %1860 = vmatprep.subr.bf16.mxu0 0
      %1861 = vmatpush1.bf16.msra.mxu0 0
      %1862 = vmatprep.subr.bf16.mxu0 0
      %1863 = vmatpush1.bf16.msra.mxu0 0
      %1864 = vmatprep.subr.bf16.mxu0 0
      %1865 = vmatpush1.bf16.msra.mxu0 0
      %1866 = vmatprep.subr.bf16.mxu0 0
      %1867 = vmatpush1.bf16.msra.mxu0 0
      %1868 = vmatprep.subr.bf16.mxu0 0
      %1869 = vmatpush1.bf16.msra.mxu0 0
      %1870 = vmatprep.subr.bf16.mxu0 0
      %1871 = vmatpush1.bf16.msra.mxu0 0
      %1872 = vmatprep.subr.bf16.mxu0 0
      %1873 = vmatpush1.bf16.msra.mxu0 0
      %1874 = vmatprep.subr.bf16.mxu0 0
      %1875 = vmatpush1.bf16.msra.mxu0 0
      %1876 = vmatprep.subr.bf16.mxu0 0
      %1877 = vmatpush1.bf16.msra.mxu0 0
      %1878 = vmatprep.mubr.bf16.mxu0 0
      %1879 = vmatmul.mubr.bf16.gmra.mrb[0].mxu0 %v1841
      %v1880 = vpop.f32.mrb[0].mxu0
      %v1881 = vadd.f32 %v1783, %v1880
      %v1882 = vpop.f32.mrb[0].mxu0
      %v1883 = vadd.f32 %v1787, %v1882
      %v1884 = vpop.f32.mrb[0].mxu0
      %v1885 = vadd.f32 %v1783, %v1884
      %v1886 = vpop.f32.mrb[0].mxu0
      %v1887 = vadd.f32 %v1787, %v1886
      %1888 = vmatprep.mubr.bf16.mxu0 0
      %1889 = vmatmul.mubr.bf16.gmra.mrb[0].mxu0 %v1844
      %v1890 = vpop.f32.mrb[0].mxu0
      %v1891 = vadd.f32 %v1783, %v1890
      %v1892 = vpop.f32.mrb[0].mxu0
      %v1893 = vadd.f32 %v1787, %v1892
      %v1894 = vpop.f32.mrb[0].mxu0
      %v1895 = vadd.f32 %v1783, %v1894
      %v1896 = vpop.f32.mrb[0].mxu0
      %v1897 = vadd.f32 %v1787, %v1896
      %1898 = vdwg.mxu0
      %1899 = vmatprep.subr.bf16.mxu0 %v1827
      %1900 = vmatpush1.bf16.msra.mxu0 %v1826
      %1901 = vmatprep.subr.bf16.mxu0 %v1831
      %1902 = vmatpush1.bf16.msra.mxu0 %v1830
      %1903 = vmatprep.subr.bf16.mxu0 0
      %1904 = vmatpush1.bf16.msra.mxu0 0
      %1905 = vmatprep.subr.bf16.mxu0 0
      %1906 = vmatpush1.bf16.msra.mxu0 0
      %1907 = vmatprep.subr.bf16.mxu0 0
      %1908 = vmatpush1.bf16.msra.mxu0 0
      %1909 = vmatprep.subr.bf16.mxu0 0
      %1910 = vmatpush1.bf16.msra.mxu0 0
      %1911 = vmatprep.subr.bf16.mxu0 0
      %1912 = vmatpush1.bf16.msra.mxu0 0
      %1913 = vmatprep.subr.bf16.mxu0 0
      %1914 = vmatpush1.bf16.msra.mxu0 0
      %1915 = vmatprep.subr.bf16.mxu0 0
      %1916 = vmatpush1.bf16.msra.mxu0 0
      %1917 = vmatprep.subr.bf16.mxu0 0
      %1918 = vmatpush1.bf16.msra.mxu0 0
      %1919 = vmatprep.subr.bf16.mxu0 0
      %1920 = vmatpush1.bf16.msra.mxu0 0
      %1921 = vmatprep.subr.bf16.mxu0 0
      %1922 = vmatpush1.bf16.msra.mxu0 0
      %1923 = vmatprep.subr.bf16.mxu0 0
      %1924 = vmatpush1.bf16.msra.mxu0 0
      %1925 = vmatprep.subr.bf16.mxu0 0
      %1926 = vmatpush1.bf16.msra.mxu0 0
      %1927 = vmatprep.subr.bf16.mxu0 0
      %1928 = vmatpush1.bf16.msra.mxu0 0
      %1929 = vmatprep.subr.bf16.mxu0 0
      %1930 = vmatpush1.bf16.msra.mxu0 0
      %1931 = vmatprep.mubr.bf16.mxu0 0
      %1932 = vmatmul.mubr.bf16.gmra.mrb[0].mxu0 %v1841
      %v1933 = vpop.f32.mrb[0].mxu0
      %v1934 = vadd.f32 %v1791, %v1933
      %v1935 = vpop.f32.mrb[0].mxu0
      %v1936 = vadd.f32 %v1795, %v1935
      %v1937 = vpop.f32.mrb[0].mxu0
      %v1938 = vadd.f32 %v1791, %v1937
      %v1939 = vpop.f32.mrb[0].mxu0
      %v1940 = vadd.f32 %v1795, %v1939
      %1941 = vmatprep.mubr.bf16.mxu0 0
      %1942 = vmatmul.mubr.bf16.gmra.mrb[0].mxu0 %v1844
      %v1943 = vpop.f32.mrb[0].mxu0
      %v1944 = vadd.f32 %v1791, %v1943
      %v1945 = vpop.f32.mrb[0].mxu0
      %v1946 = vadd.f32 %v1795, %v1945
      %v1947 = vpop.f32.mrb[0].mxu0
      %v1948 = vadd.f32 %v1791, %v1947
      %v1949 = vpop.f32.mrb[0].mxu0
      %v1950 = vadd.f32 %v1795, %v1949
      %1951 = vdwg.mxu0
      %v1952 = vmul.f32 %v1881, 0.35355338
      %v1953 = vmul.f32 %v1883, 0.35355338
      %v1954 = vmul.f32 %v1934, 0.35355338
      %v1955 = vmul.f32 %v1936, 0.35355338
      %v1956 = vmul.f32 %v1885, 0.35355338
      %v1957 = vmul.f32 %v1887, 0.35355338
      %v1958 = vmul.f32 %v1938, 0.35355338
      %v1959 = vmul.f32 %v1940, 0.35355338
      %v1960 = vmul.f32 %v1891, 0.35355338
      %v1961 = vmul.f32 %v1893, 0.35355338
      %v1962 = vmul.f32 %v1944, 0.35355338
      %v1963 = vmul.f32 %v1946, 0.35355338
      %v1964 = vmul.f32 %v1895, 0.35355338
      %v1965 = vmul.f32 %v1897, 0.35355338
      %v1966 = vmul.f32 %v1948, 0.35355338
      %v1967 = vmul.f32 %v1950, 0.35355338
      %v1968 = vpack.c.bf16 %v1956, %v1952
      %v1969 = vpack.c.bf16 %v1957, %v1953
      %v1970 = vpack.c.bf16 %v1958, %v1954
      %v1971 = vpack.c.bf16 %v1959, %v1955
      %v1972 = vpack.c.bf16 %v1964, %v1960
      %v1973 = vpack.c.bf16 %v1965, %v1961
      %v1974 = vpack.c.bf16 %v1966, %v1962
      %v1975 = vpack.c.bf16 %v1967, %v1963
      %v1976 = vld [vmem:[#allocation2] sm:$0xff]
      %v1977 = vld [vmem:[#allocation2 + $0x20] sm:$0xff]
      %v1978 = vld [vmem:[#allocation2 + $0x40] sm:$0xff]
      %v1979 = vld [vmem:[#allocation2 + $0x60] sm:$0xff]
      %v1980 = vld [vmem:[#allocation3] sm:$0xff]
      %v1981 = vld [vmem:[#allocation3 + $0x20] sm:$0xff]
      %v1982 = vld [vmem:[#allocation3 + $0x40] sm:$0xff]
      %v1983 = vld [vmem:[#allocation3 + $0x60] sm:$0xff]
      %1984 = vmatprep.subr.bf16.mxu0 0
      %1985 = vmatpush1.bf16.xpose.msra.mxu0 %v1976
      %1986 = vmatprep.subr.bf16.mxu0 0
      %1987 = vmatpush1.bf16.xpose.msra.mxu0 %v1977
      %1988 = vmatprep.subr.bf16.mxu0 0
      %1989 = vmatpush1.bf16.xpose.msra.mxu0 %v1978
      %1990 = vmatprep.subr.bf16.mxu0 0
      %1991 = vmatpush1.bf16.xpose.msra.mxu0 %v1979
      %1992 = vmatprep.subr.bf16.mxu0 0
      %1993 = vmatpush1.bf16.xpose.msra.mxu0 0
      %1994 = vmatprep.subr.bf16.mxu0 0
      %1995 = vmatpush1.bf16.xpose.msra.mxu0 0
      %1996 = vmatprep.subr.bf16.mxu0 0
      %1997 = vmatpush1.bf16.xpose.msra.mxu0 0
      %1998 = vmatprep.subr.bf16.mxu0 0
      %1999 = vmatpush1.bf16.xpose.msra.mxu0 0
      %2000 = vmatprep.subr.bf16.mxu0 0
      %2001 = vmatpush1.bf16.xpose.msra.mxu0 0
      %2002 = vmatprep.subr.bf16.mxu0 0
      %2003 = vmatpush1.bf16.xpose.msra.mxu0 0
      %2004 = vmatprep.subr.bf16.mxu0 0
      %2005 = vmatpush1.bf16.xpose.msra.mxu0 0
      %2006 = vmatprep.subr.bf16.mxu0 0
      %2007 = vmatpush1.bf16.xpose.msra.mxu0 0
      %2008 = vmatprep.subr.bf16.mxu0 0
      %2009 = vmatpush1.bf16.xpose.msra.mxu0 0
      %2010 = vmatprep.subr.bf16.mxu0 0
      %2011 = vmatpush1.bf16.xpose.msra.mxu0 0
      %2012 = vmatprep.subr.bf16.mxu0 0
      %2013 = vmatpush1.bf16.xpose.msra.mxu0 0
      %2014 = vmatprep.subr.bf16.mxu0 0
      %2015 = vmatpush1.bf16.xpose.msra.mxu0 0
      %2016 = vmatprep.mubr.bf16.mxu0 0
      %2017 = vmatmul.mubr.bf16.gmra.mrb[0].mxu0 %v1968
      %v2018 = vpop.f32.mrb[0].mxu0
      %v2019 = vadd.f32 0.0, %v2018
      %v2020 = vpop.f32.mrb[0].mxu0
      %v2021 = vpop.f32.mrb[0].mxu0
      %v2022 = vadd.f32 0.0, %v2021
      %v2023 = vpop.f32.mrb[0].mxu0
      %2024 = vmatprep.mubr.bf16.mxu0 0
      %2025 = vmatmul.mubr.bf16.gmra.mrb[0].mxu0 %v1972
      %v2026 = vpop.f32.mrb[0].mxu0
      %v2027 = vadd.f32 0.0, %v2026
      %v2028 = vpop.f32.mrb[0].mxu0
      %v2029 = vpop.f32.mrb[0].mxu0
      %v2030 = vadd.f32 0.0, %v2029
      %v2031 = vpop.f32.mrb[0].mxu0
      %2032 = vdwg.mxu0
      %vm2033 = vcmask 523264
      %v2034 = vsel %vm2033, %v2019, -inf
      %2035 = vmax.xlane.f32.xlu0 %v2034
      %v2036 = vpop.xlane.xlu0 %2035
      %v2037 = vsel %vm2033, %v2022, -inf
      %2038 = vmax.xlane.f32.xlu0 %v2037
      %v2039 = vpop.xlane.xlu0 %2038
      %v2040 = vsel %vm2033, %v2027, -inf
      %2041 = vmax.xlane.f32.xlu0 %v2040
      %v2042 = vpop.xlane.xlu0 %2041
      %v2043 = vsel %vm2033, %v2030, -inf
      %2044 = vmax.xlane.f32.xlu0 %v2043
      %v2045 = vpop.xlane.xlu0 %2044
      %v2046 = vsub.f32 %v2019, %v2036
      %v2047 = vsub.f32 %v2022, %v2039
      %v2048 = vsub.f32 %v2027, %v2042
      %v2049 = vsub.f32 %v2030, %v2045
      %v2050 = vmul.f32 %v2046, 1.442695
      %v2051 = vpow.pop %v2050
      %v2052 = vmul.f32 %v2047, 1.442695
      %v2053 = vpow.pop %v2052
      %v2054 = vmul.f32 %v2048, 1.442695
      %v2055 = vpow.pop %v2054
      %v2056 = vmul.f32 %v2049, 1.442695
      %v2057 = vpow.pop %v2056
      %v2058 = vsel %vm2033, %v2051, 0.0
      %2059 = vadd.xlane.f32.xlu0 %v2058
      %v2060 = vpop.xlane.xlu0 %2059
      %v2061 = vsel %vm2033, %v2053, 0.0
      %2062 = vadd.xlane.f32.xlu0 %v2061
      %v2063 = vpop.xlane.xlu0 %2062
      %v2064 = vsel %vm2033, %v2055, 0.0
      %2065 = vadd.xlane.f32.xlu0 %v2064
      %v2066 = vpop.xlane.xlu0 %2065
      %v2067 = vsel %vm2033, %v2057, 0.0
      %2068 = vadd.xlane.f32.xlu0 %v2067
      %v2069 = vpop.xlane.xlu0 %2068
      %v2070 = vrcp.pop %v2060
      %v2071 = vrcp.pop %v2063
      %v2072 = vrcp.pop %v2066
      %v2073 = vrcp.pop %v2069
      %v2074 = vmul.f32 %v2051, %v2070
      %v2075 = vmul.f32 %v2053, %v2071
      %v2076 = vmul.f32 %v2055, %v2072
      %v2077 = vmul.f32 %v2057, %v2073
      %v2078 = vpack.c.bf16 %v2075, %v2074
      %v2079 = vpack.c.bf16 %v2077, %v2076
      %v2081 = vsel %vm2033, %v2078, 0
      %v2084 = vsel %vm2033, %v2079, 0
      %2086 = vmatprep.subr.bf16.mxu0 0
      %2087 = vmatpush1.bf16.msra.mxu0 %v1980
      %2088 = vmatprep.subr.bf16.mxu0 0
      %2089 = vmatpush1.bf16.msra.mxu0 %v1981
      %2090 = vmatprep.subr.bf16.mxu0 0
      %2091 = vmatpush1.bf16.msra.mxu0 %v1982
      %2092 = vmatprep.subr.bf16.mxu0 0
      %2093 = vmatpush1.bf16.msra.mxu0 %v1983
      %2094 = vmatprep.subr.bf16.mxu0 0
      %2095 = vmatpush1.bf16.msra.mxu0 0
      %2096 = vmatprep.subr.bf16.mxu0 0
      %2097 = vmatpush1.bf16.msra.mxu0 0
      %2098 = vmatprep.subr.bf16.mxu0 0
      %2099 = vmatpush1.bf16.msra.mxu0 0
      %2100 = vmatprep.subr.bf16.mxu0 0
      %2101 = vmatpush1.bf16.msra.mxu0 0
      %2102 = vmatprep.subr.bf16.mxu0 0
      %2103 = vmatpush1.bf16.msra.mxu0 0
      %2104 = vmatprep.subr.bf16.mxu0 0
      %2105 = vmatpush1.bf16.msra.mxu0 0
      %2106 = vmatprep.subr.bf16.mxu0 0
      %2107 = vmatpush1.bf16.msra.mxu0 0
      %2108 = vmatprep.subr.bf16.mxu0 0
      %2109 = vmatpush1.bf16.msra.mxu0 0
      %2110 = vmatprep.subr.bf16.mxu0 0
      %2111 = vmatpush1.bf16.msra.mxu0 0
      %2112 = vmatprep.subr.bf16.mxu0 0
      %2113 = vmatpush1.bf16.msra.mxu0 0
      %2114 = vmatprep.subr.bf16.mxu0 0
      %2115 = vmatpush1.bf16.msra.mxu0 0
      %2116 = vmatprep.subr.bf16.mxu0 0
      %2117 = vmatpush1.bf16.msra.mxu0 0
      %2118 = vmatprep.mubr.bf16.mxu0 0
      %2119 = vmatmul.mubr.bf16.gmra.mrb[0].mxu0 %v2081
      %v2120 = vpop.f32.mrb[0].mxu0
      %v2121 = vadd.f32 0.0, %v2120
      %v2122 = vpop.f32.mrb[0].mxu0
      %v2123 = vpop.f32.mrb[0].mxu0
      %v2124 = vadd.f32 0.0, %v2123
      %v2125 = vpop.f32.mrb[0].mxu0
      %2126 = vmatprep.mubr.bf16.mxu0 0
      %2127 = vmatmul.mubr.bf16.gmra.mrb[0].mxu0 %v2084
      %v2128 = vpop.f32.mrb[0].mxu0
      %v2129 = vadd.f32 0.0, %v2128
      %v2130 = vpop.f32.mrb[0].mxu0
      %v2131 = vpop.f32.mrb[0].mxu0
      %v2132 = vadd.f32 0.0, %v2131
      %v2133 = vpop.f32.mrb[0].mxu0
      %2134 = vdwg.mxu0
      %v2135 = vpack.c.bf16 %v2124, %v2121
      %v2136 = vpack.c.bf16 %v2132, %v2129
      %v2137 = vld [vmem:[#allocation2 + $0x8] sm:$0xff]
      %v2138 = vld [vmem:[#allocation2 + $0x28] sm:$0xff]
      %v2139 = vld [vmem:[#allocation2 + $0x48] sm:$0xff]
      %v2140 = vld [vmem:[#allocation2 + $0x68] sm:$0xff]
      %v2141 = vld [vmem:[#allocation3 + $0x8] sm:$0xff]
      %v2142 = vld [vmem:[#allocation3 + $0x28] sm:$0xff]
      %v2143 = vld [vmem:[#allocation3 + $0x48] sm:$0xff]
      %v2144 = vld [vmem:[#allocation3 + $0x68] sm:$0xff]
      %2145 = vmatprep.subr.bf16.mxu0 0
      %2146 = vmatpush1.bf16.xpose.msra.mxu0 %v2137
      %2147 = vmatprep.subr.bf16.mxu0 0
      %2148 = vmatpush1.bf16.xpose.msra.mxu0 %v2138
      %2149 = vmatprep.subr.bf16.mxu0 0
      %2150 = vmatpush1.bf16.xpose.msra.mxu0 %v2139
      %2151 = vmatprep.subr.bf16.mxu0 0
      %2152 = vmatpush1.bf16.xpose.msra.mxu0 %v2140
      %2153 = vmatprep.subr.bf16.mxu0 0
      %2154 = vmatpush1.bf16.xpose.msra.mxu0 0
      %2155 = vmatprep.subr.bf16.mxu0 0
      %2156 = vmatpush1.bf16.xpose.msra.mxu0 0
      %2157 = vmatprep.subr.bf16.mxu0 0
      %2158 = vmatpush1.bf16.xpose.msra.mxu0 0
      %2159 = vmatprep.subr.bf16.mxu0 0
      %2160 = vmatpush1.bf16.xpose.msra.mxu0 0
      %2161 = vmatprep.subr.bf16.mxu0 0
      %2162 = vmatpush1.bf16.xpose.msra.mxu0 0
      %2163 = vmatprep.subr.bf16.mxu0 0
      %2164 = vmatpush1.bf16.xpose.msra.mxu0 0
      %2165 = vmatprep.subr.bf16.mxu0 0
      %2166 = vmatpush1.bf16.xpose.msra.mxu0 0
      %2167 = vmatprep.subr.bf16.mxu0 0
      %2168 = vmatpush1.bf16.xpose.msra.mxu0 0
      %2169 = vmatprep.subr.bf16.mxu0 0
      %2170 = vmatpush1.bf16.xpose.msra.mxu0 0
      %2171 = vmatprep.subr.bf16.mxu0 0
      %2172 = vmatpush1.bf16.xpose.msra.mxu0 0
      %2173 = vmatprep.subr.bf16.mxu0 0
      %2174 = vmatpush1.bf16.xpose.msra.mxu0 0
      %2175 = vmatprep.subr.bf16.mxu0 0
      %2176 = vmatpush1.bf16.xpose.msra.mxu0 0
      %2177 = vmatprep.mubr.bf16.mxu0 0
      %2178 = vmatmul.mubr.bf16.gmra.mrb[0].mxu0 %v1969
      %v2179 = vpop.f32.mrb[0].mxu0
      %v2180 = vadd.f32 0.0, %v2179
      %v2181 = vpop.f32.mrb[0].mxu0
      %v2182 = vpop.f32.mrb[0].mxu0
      %v2183 = vadd.f32 0.0, %v2182
      %v2184 = vpop.f32.mrb[0].mxu0
      %2185 = vmatprep.mubr.bf16.mxu0 0
      %2186 = vmatmul.mubr.bf16.gmra.mrb[0].mxu0 %v1973
      %v2187 = vpop.f32.mrb[0].mxu0
      %v2188 = vadd.f32 0.0, %v2187
      %v2189 = vpop.f32.mrb[0].mxu0
      %v2190 = vpop.f32.mrb[0].mxu0
      %v2191 = vadd.f32 0.0, %v2190
      %v2192 = vpop.f32.mrb[0].mxu0
      %2193 = vdwg.mxu0
      %v2194 = vsel %vm2033, %v2180, -inf
      %2195 = vmax.xlane.f32.xlu0 %v2194
      %v2196 = vpop.xlane.xlu0 %2195
      %v2197 = vsel %vm2033, %v2183, -inf
      %2198 = vmax.xlane.f32.xlu0 %v2197
      %v2199 = vpop.xlane.xlu0 %2198
      %v2200 = vsel %vm2033, %v2188, -inf
      %2201 = vmax.xlane.f32.xlu0 %v2200
      %v2202 = vpop.xlane.xlu0 %2201
      %v2203 = vsel %vm2033, %v2191, -inf
      %2204 = vmax.xlane.f32.xlu0 %v2203
      %v2205 = vpop.xlane.xlu0 %2204
      %v2206 = vsub.f32 %v2180, %v2196
      %v2207 = vsub.f32 %v2183, %v2199
      %v2208 = vsub.f32 %v2188, %v2202
      %v2209 = vsub.f32 %v2191, %v2205
      %v2210 = vmul.f32 %v2206, 1.442695
      %v2211 = vpow.pop %v2210
      %v2212 = vmul.f32 %v2207, 1.442695
      %v2213 = vpow.pop %v2212
      %v2214 = vmul.f32 %v2208, 1.442695
      %v2215 = vpow.pop %v2214
      %v2216 = vmul.f32 %v2209, 1.442695
      %v2217 = vpow.pop %v2216
      %v2218 = vsel %vm2033, %v2211, 0.0
      %2219 = vadd.xlane.f32.xlu0 %v2218
      %v2220 = vpop.xlane.xlu0 %2219
      %v2221 = vsel %vm2033, %v2213, 0.0
      %2222 = vadd.xlane.f32.xlu0 %v2221
      %v2223 = vpop.xlane.xlu0 %2222
      %v2224 = vsel %vm2033, %v2215, 0.0
      %2225 = vadd.xlane.f32.xlu0 %v2224
      %v2226 = vpop.xlane.xlu0 %2225
      %v2227 = vsel %vm2033, %v2217, 0.0
      %2228 = vadd.xlane.f32.xlu0 %v2227
      %v2229 = vpop.xlane.xlu0 %2228
      %v2230 = vrcp.pop %v2220
      %v2231 = vrcp.pop %v2223
      %v2232 = vrcp.pop %v2226
      %v2233 = vrcp.pop %v2229
      %v2234 = vmul.f32 %v2211, %v2230
      %v2235 = vmul.f32 %v2213, %v2231
      %v2236 = vmul.f32 %v2215, %v2232
      %v2237 = vmul.f32 %v2217, %v2233
      %v2238 = vpack.c.bf16 %v2235, %v2234
      %v2239 = vpack.c.bf16 %v2237, %v2236
      %v2241 = vsel %vm2033, %v2238, 0
      %v2244 = vsel %vm2033, %v2239, 0
      %2246 = vmatprep.subr.bf16.mxu0 0
      %2247 = vmatpush1.bf16.msra.mxu0 %v2141
      %2248 = vmatprep.subr.bf16.mxu0 0
      %2249 = vmatpush1.bf16.msra.mxu0 %v2142
      %2250 = vmatprep.subr.bf16.mxu0 0
      %2251 = vmatpush1.bf16.msra.mxu0 %v2143
      %2252 = vmatprep.subr.bf16.mxu0 0
      %2253 = vmatpush1.bf16.msra.mxu0 %v2144
      %2254 = vmatprep.subr.bf16.mxu0 0
      %2255 = vmatpush1.bf16.msra.mxu0 0
      %2256 = vmatprep.subr.bf16.mxu0 0
      %2257 = vmatpush1.bf16.msra.mxu0 0
      %2258 = vmatprep.subr.bf16.mxu0 0
      %2259 = vmatpush1.bf16.msra.mxu0 0
      %2260 = vmatprep.subr.bf16.mxu0 0
      %2261 = vmatpush1.bf16.msra.mxu0 0
      %2262 = vmatprep.subr.bf16.mxu0 0
      %2263 = vmatpush1.bf16.msra.mxu0 0
      %2264 = vmatprep.subr.bf16.mxu0 0
      %2265 = vmatpush1.bf16.msra.mxu0 0
      %2266 = vmatprep.subr.bf16.mxu0 0
      %2267 = vmatpush1.bf16.msra.mxu0 0
      %2268 = vmatprep.subr.bf16.mxu0 0
      %2269 = vmatpush1.bf16.msra.mxu0 0
      %2270 = vmatprep.subr.bf16.mxu0 0
      %2271 = vmatpush1.bf16.msra.mxu0 0
      %2272 = vmatprep.subr.bf16.mxu0 0
      %2273 = vmatpush1.bf16.msra.mxu0 0
      %2274 = vmatprep.subr.bf16.mxu0 0
      %2275 = vmatpush1.bf16.msra.mxu0 0
      %2276 = vmatprep.subr.bf16.mxu0 0
      %2277 = vmatpush1.bf16.msra.mxu0 0
      %2278 = vmatprep.mubr.bf16.mxu0 0
      %2279 = vmatmul.mubr.bf16.gmra.mrb[0].mxu0 %v2241
      %v2280 = vpop.f32.mrb[0].mxu0
      %v2281 = vadd.f32 0.0, %v2280
      %v2282 = vpop.f32.mrb[0].mxu0
      %v2283 = vpop.f32.mrb[0].mxu0
      %v2284 = vadd.f32 0.0, %v2283
      %v2285 = vpop.f32.mrb[0].mxu0
      %2286 = vmatprep.mubr.bf16.mxu0 0
      %2287 = vmatmul.mubr.bf16.gmra.mrb[0].mxu0 %v2244
      %v2288 = vpop.f32.mrb[0].mxu0
      %v2289 = vadd.f32 0.0, %v2288
      %v2290 = vpop.f32.mrb[0].mxu0
      %v2291 = vpop.f32.mrb[0].mxu0
      %v2292 = vadd.f32 0.0, %v2291
      %v2293 = vpop.f32.mrb[0].mxu0
      %2294 = vdwg.mxu0
      %v2295 = vpack.c.bf16 %v2284, %v2281
      %v2296 = vpack.c.bf16 %v2292, %v2289
      %v2297 = vld [vmem:[#allocation2 + $0x10] sm:$0xff]
      %v2298 = vld [vmem:[#allocation2 + $0x30] sm:$0xff]
      %v2299 = vld [vmem:[#allocation2 + $0x50] sm:$0xff]
      %v2300 = vld [vmem:[#allocation2 + $0x70] sm:$0xff]
      %v2301 = vld [vmem:[#allocation3 + $0x10] sm:$0xff]
      %v2302 = vld [vmem:[#allocation3 + $0x30] sm:$0xff]
      %v2303 = vld [vmem:[#allocation3 + $0x50] sm:$0xff]
      %v2304 = vld [vmem:[#allocation3 + $0x70] sm:$0xff]
      %2305 = vmatprep.subr.bf16.mxu0 0
      %2306 = vmatpush1.bf16.xpose.msra.mxu0 %v2297
      %2307 = vmatprep.subr.bf16.mxu0 0
      %2308 = vmatpush1.bf16.xpose.msra.mxu0 %v2298
      %2309 = vmatprep.subr.bf16.mxu0 0
      %2310 = vmatpush1.bf16.xpose.msra.mxu0 %v2299
      %2311 = vmatprep.subr.bf16.mxu0 0
      %2312 = vmatpush1.bf16.xpose.msra.mxu0 %v2300
      %2313 = vmatprep.subr.bf16.mxu0 0
      %2314 = vmatpush1.bf16.xpose.msra.mxu0 0
      %2315 = vmatprep.subr.bf16.mxu0 0
      %2316 = vmatpush1.bf16.xpose.msra.mxu0 0
      %2317 = vmatprep.subr.bf16.mxu0 0
      %2318 = vmatpush1.bf16.xpose.msra.mxu0 0
      %2319 = vmatprep.subr.bf16.mxu0 0
      %2320 = vmatpush1.bf16.xpose.msra.mxu0 0
      %2321 = vmatprep.subr.bf16.mxu0 0
      %2322 = vmatpush1.bf16.xpose.msra.mxu0 0
      %2323 = vmatprep.subr.bf16.mxu0 0
      %2324 = vmatpush1.bf16.xpose.msra.mxu0 0
      %2325 = vmatprep.subr.bf16.mxu0 0
      %2326 = vmatpush1.bf16.xpose.msra.mxu0 0
      %2327 = vmatprep.subr.bf16.mxu0 0
      %2328 = vmatpush1.bf16.xpose.msra.mxu0 0
      %2329 = vmatprep.subr.bf16.mxu0 0
      %2330 = vmatpush1.bf16.xpose.msra.mxu0 0
      %2331 = vmatprep.subr.bf16.mxu0 0
      %2332 = vmatpush1.bf16.xpose.msra.mxu0 0
      %2333 = vmatprep.subr.bf16.mxu0 0
      %2334 = vmatpush1.bf16.xpose.msra.mxu0 0
      %2335 = vmatprep.subr.bf16.mxu0 0
      %2336 = vmatpush1.bf16.xpose.msra.mxu0 0
      %2337 = vmatprep.mubr.bf16.mxu0 0
      %2338 = vmatmul.mubr.bf16.gmra.mrb[0].mxu0 %v1970
      %v2339 = vpop.f32.mrb[0].mxu0
      %v2340 = vadd.f32 0.0, %v2339
      %v2341 = vpop.f32.mrb[0].mxu0
      %v2342 = vpop.f32.mrb[0].mxu0
      %v2343 = vadd.f32 0.0, %v2342
      %v2344 = vpop.f32.mrb[0].mxu0
      %2345 = vmatprep.mubr.bf16.mxu0 0
      %2346 = vmatmul.mubr.bf16.gmra.mrb[0].mxu0 %v1974
      %v2347 = vpop.f32.mrb[0].mxu0
      %v2348 = vadd.f32 0.0, %v2347
      %v2349 = vpop.f32.mrb[0].mxu0
      %v2350 = vpop.f32.mrb[0].mxu0
      %v2351 = vadd.f32 0.0, %v2350
      %v2352 = vpop.f32.mrb[0].mxu0
      %2353 = vdwg.mxu0
      %v2354 = vsel %vm2033, %v2340, -inf
      %2355 = vmax.xlane.f32.xlu0 %v2354
      %v2356 = vpop.xlane.xlu0 %2355
      %v2357 = vsel %vm2033, %v2343, -inf
      %2358 = vmax.xlane.f32.xlu0 %v2357
      %v2359 = vpop.xlane.xlu0 %2358
      %v2360 = vsel %vm2033, %v2348, -inf
      %2361 = vmax.xlane.f32.xlu0 %v2360
      %v2362 = vpop.xlane.xlu0 %2361
      %v2363 = vsel %vm2033, %v2351, -inf
      %2364 = vmax.xlane.f32.xlu0 %v2363
      %v2365 = vpop.xlane.xlu0 %2364
      %v2366 = vsub.f32 %v2340, %v2356
      %v2367 = vsub.f32 %v2343, %v2359
      %v2368 = vsub.f32 %v2348, %v2362
      %v2369 = vsub.f32 %v2351, %v2365
      %v2370 = vmul.f32 %v2366, 1.442695
      %v2371 = vpow.pop %v2370
      %v2372 = vmul.f32 %v2367, 1.442695
      %v2373 = vpow.pop %v2372
      %v2374 = vmul.f32 %v2368, 1.442695
      %v2375 = vpow.pop %v2374
      %v2376 = vmul.f32 %v2369, 1.442695
      %v2377 = vpow.pop %v2376
      %v2378 = vsel %vm2033, %v2371, 0.0
      %2379 = vadd.xlane.f32.xlu0 %v2378
      %v2380 = vpop.xlane.xlu0 %2379
      %v2381 = vsel %vm2033, %v2373, 0.0
      %2382 = vadd.xlane.f32.xlu0 %v2381
      %v2383 = vpop.xlane.xlu0 %2382
      %v2384 = vsel %vm2033, %v2375, 0.0
      %2385 = vadd.xlane.f32.xlu0 %v2384
      %v2386 = vpop.xlane.xlu0 %2385
      %v2387 = vsel %vm2033, %v2377, 0.0
      %2388 = vadd.xlane.f32.xlu0 %v2387
      %v2389 = vpop.xlane.xlu0 %2388
      %v2390 = vrcp.pop %v2380
      %v2391 = vrcp.pop %v2383
      %v2392 = vrcp.pop %v2386
      %v2393 = vrcp.pop %v2389
      %v2394 = vmul.f32 %v2371, %v2390
      %v2395 = vmul.f32 %v2373, %v2391
      %v2396 = vmul.f32 %v2375, %v2392
      %v2397 = vmul.f32 %v2377, %v2393
      %v2398 = vpack.c.bf16 %v2395, %v2394
      %v2399 = vpack.c.bf16 %v2397, %v2396
      %v2401 = vsel %vm2033, %v2398, 0
      %v2404 = vsel %vm2033, %v2399, 0
      %2406 = vmatprep.subr.bf16.mxu0 0
      %2407 = vmatpush1.bf16.msra.mxu0 %v2301
      %2408 = vmatprep.subr.bf16.mxu0 0
      %2409 = vmatpush1.bf16.msra.mxu0 %v2302
      %2410 = vmatprep.subr.bf16.mxu0 0
      %2411 = vmatpush1.bf16.msra.mxu0 %v2303
      %2412 = vmatprep.subr.bf16.mxu0 0
      %2413 = vmatpush1.bf16.msra.mxu0 %v2304
      %2414 = vmatprep.subr.bf16.mxu0 0
      %2415 = vmatpush1.bf16.msra.mxu0 0
      %2416 = vmatprep.subr.bf16.mxu0 0
      %2417 = vmatpush1.bf16.msra.mxu0 0
      %2418 = vmatprep.subr.bf16.mxu0 0
      %2419 = vmatpush1.bf16.msra.mxu0 0
      %2420 = vmatprep.subr.bf16.mxu0 0
      %2421 = vmatpush1.bf16.msra.mxu0 0
      %2422 = vmatprep.subr.bf16.mxu0 0
      %2423 = vmatpush1.bf16.msra.mxu0 0
      %2424 = vmatprep.subr.bf16.mxu0 0
      %2425 = vmatpush1.bf16.msra.mxu0 0
      %2426 = vmatprep.subr.bf16.mxu0 0
      %2427 = vmatpush1.bf16.msra.mxu0 0
      %2428 = vmatprep.subr.bf16.mxu0 0
      %2429 = vmatpush1.bf16.msra.mxu0 0
      %2430 = vmatprep.subr.bf16.mxu0 0
      %2431 = vmatpush1.bf16.msra.mxu0 0
      %2432 = vmatprep.subr.bf16.mxu0 0
      %2433 = vmatpush1.bf16.msra.mxu0 0
      %2434 = vmatprep.subr.bf16.mxu0 0
      %2435 = vmatpush1.bf16.msra.mxu0 0
      %2436 = vmatprep.subr.bf16.mxu0 0
      %2437 = vmatpush1.bf16.msra.mxu0 0
      %2438 = vmatprep.mubr.bf16.mxu0 0
      %2439 = vmatmul.mubr.bf16.gmra.mrb[0].mxu0 %v2401
      %v2440 = vpop.f32.mrb[0].mxu0
      %v2441 = vadd.f32 0.0, %v2440
      %v2442 = vpop.f32.mrb[0].mxu0
      %v2443 = vpop.f32.mrb[0].mxu0
      %v2444 = vadd.f32 0.0, %v2443
      %v2445 = vpop.f32.mrb[0].mxu0
      %2446 = vmatprep.mubr.bf16.mxu0 0
      %2447 = vmatmul.mubr.bf16.gmra.mrb[0].mxu0 %v2404
      %v2448 = vpop.f32.mrb[0].mxu0
      %v2449 = vadd.f32 0.0, %v2448
      %v2450 = vpop.f32.mrb[0].mxu0
      %v2451 = vpop.f32.mrb[0].mxu0
      %v2452 = vadd.f32 0.0, %v2451
      %v2453 = vpop.f32.mrb[0].mxu0
      %2454 = vdwg.mxu0
      %v2455 = vpack.c.bf16 %v2444, %v2441
      %v2456 = vpack.c.bf16 %v2452, %v2449
      %v2457 = vld [vmem:[#allocation2 + $0x18] sm:$0xff]
      %v2458 = vld [vmem:[#allocation2 + $0x38] sm:$0xff]
      %v2459 = vld [vmem:[#allocation2 + $0x58] sm:$0xff]
      %v2460 = vld [vmem:[#allocation2 + $0x78] sm:$0xff]
      %v2461 = vld [vmem:[#allocation3 + $0x18] sm:$0xff]
      %v2462 = vld [vmem:[#allocation3 + $0x38] sm:$0xff]
      %v2463 = vld [vmem:[#allocation3 + $0x58] sm:$0xff]
      %v2464 = vld [vmem:[#allocation3 + $0x78] sm:$0xff]
      %2465 = vmatprep.subr.bf16.mxu0 0
      %2466 = vmatpush1.bf16.xpose.msra.mxu0 %v2457
      %2467 = vmatprep.subr.bf16.mxu0 0
      %2468 = vmatpush1.bf16.xpose.msra.mxu0 %v2458
      %2469 = vmatprep.subr.bf16.mxu0 0
      %2470 = vmatpush1.bf16.xpose.msra.mxu0 %v2459
      %2471 = vmatprep.subr.bf16.mxu0 0
      %2472 = vmatpush1.bf16.xpose.msra.mxu0 %v2460
      %2473 = vmatprep.subr.bf16.mxu0 0
      %2474 = vmatpush1.bf16.xpose.msra.mxu0 0
      %2475 = vmatprep.subr.bf16.mxu0 0
      %2476 = vmatpush1.bf16.xpose.msra.mxu0 0
      %2477 = vmatprep.subr.bf16.mxu0 0
      %2478 = vmatpush1.bf16.xpose.msra.mxu0 0
      %2479 = vmatprep.subr.bf16.mxu0 0
      %2480 = vmatpush1.bf16.xpose.msra.mxu0 0
      %2481 = vmatprep.subr.bf16.mxu0 0
      %2482 = vmatpush1.bf16.xpose.msra.mxu0 0
      %2483 = vmatprep.subr.bf16.mxu0 0
      %2484 = vmatpush1.bf16.xpose.msra.mxu0 0
      %2485 = vmatprep.subr.bf16.mxu0 0
      %2486 = vmatpush1.bf16.xpose.msra.mxu0 0
      %2487 = vmatprep.subr.bf16.mxu0 0
      %2488 = vmatpush1.bf16.xpose.msra.mxu0 0
      %2489 = vmatprep.subr.bf16.mxu0 0
      %2490 = vmatpush1.bf16.xpose.msra.mxu0 0
      %2491 = vmatprep.subr.bf16.mxu0 0
      %2492 = vmatpush1.bf16.xpose.msra.mxu0 0
      %2493 = vmatprep.subr.bf16.mxu0 0
      %2494 = vmatpush1.bf16.xpose.msra.mxu0 0
      %2495 = vmatprep.subr.bf16.mxu0 0
      %2496 = vmatpush1.bf16.xpose.msra.mxu0 0
      %2497 = vmatprep.mubr.bf16.mxu0 0
      %2498 = vmatmul.mubr.bf16.gmra.mrb[0].mxu0 %v1971
      %v2499 = vpop.f32.mrb[0].mxu0
      %v2500 = vadd.f32 0.0, %v2499
      %v2501 = vpop.f32.mrb[0].mxu0
      %v2502 = vpop.f32.mrb[0].mxu0
      %v2503 = vadd.f32 0.0, %v2502
      %v2504 = vpop.f32.mrb[0].mxu0
      %2505 = vmatprep.mubr.bf16.mxu0 0
      %2506 = vmatmul.mubr.bf16.gmra.mrb[0].mxu0 %v1975
      %v2507 = vpop.f32.mrb[0].mxu0
      %v2508 = vadd.f32 0.0, %v2507
      %v2509 = vpop.f32.mrb[0].mxu0
      %v2510 = vpop.f32.mrb[0].mxu0
      %v2511 = vadd.f32 0.0, %v2510
      %v2512 = vpop.f32.mrb[0].mxu0
      %2513 = vdwg.mxu0
      %v2514 = vsel %vm2033, %v2500, -inf
      %2515 = vmax.xlane.f32.xlu0 %v2514
      %v2516 = vpop.xlane.xlu0 %2515
      %v2517 = vsel %vm2033, %v2503, -inf
      %2518 = vmax.xlane.f32.xlu0 %v2517
      %v2519 = vpop.xlane.xlu0 %2518
      %v2520 = vsel %vm2033, %v2508, -inf
      %2521 = vmax.xlane.f32.xlu0 %v2520
      %v2522 = vpop.xlane.xlu0 %2521
      %v2523 = vsel %vm2033, %v2511, -inf
      %2524 = vmax.xlane.f32.xlu0 %v2523
      %v2525 = vpop.xlane.xlu0 %2524
      %v2526 = vsub.f32 %v2500, %v2516
      %v2527 = vsub.f32 %v2503, %v2519
      %v2528 = vsub.f32 %v2508, %v2522
      %v2529 = vsub.f32 %v2511, %v2525
      %v2530 = vmul.f32 %v2526, 1.442695
      %v2531 = vpow.pop %v2530
      %v2532 = vmul.f32 %v2527, 1.442695
      %v2533 = vpow.pop %v2532
      %v2534 = vmul.f32 %v2528, 1.442695
      %v2535 = vpow.pop %v2534
      %v2536 = vmul.f32 %v2529, 1.442695
      %v2537 = vpow.pop %v2536
      %v2538 = vsel %vm2033, %v2531, 0.0
      %2539 = vadd.xlane.f32.xlu0 %v2538
      %v2540 = vpop.xlane.xlu0 %2539
      %v2541 = vsel %vm2033, %v2533, 0.0
      %2542 = vadd.xlane.f32.xlu0 %v2541
      %v2543 = vpop.xlane.xlu0 %2542
      %v2544 = vsel %vm2033, %v2535, 0.0
      %2545 = vadd.xlane.f32.xlu0 %v2544
      %v2546 = vpop.xlane.xlu0 %2545
      %v2547 = vsel %vm2033, %v2537, 0.0
      %2548 = vadd.xlane.f32.xlu0 %v2547
      %v2549 = vpop.xlane.xlu0 %2548
      %v2550 = vrcp.pop %v2540
      %v2551 = vrcp.pop %v2543
      %v2552 = vrcp.pop %v2546
      %v2553 = vrcp.pop %v2549
      %v2554 = vmul.f32 %v2531, %v2550
      %v2555 = vmul.f32 %v2533, %v2551
      %v2556 = vmul.f32 %v2535, %v2552
      %v2557 = vmul.f32 %v2537, %v2553
      %v2558 = vpack.c.bf16 %v2555, %v2554
      %v2559 = vpack.c.bf16 %v2557, %v2556
      %v2561 = vsel %vm2033, %v2558, 0
      %v2564 = vsel %vm2033, %v2559, 0
      %2566 = vmatprep.subr.bf16.mxu0 0
      %2567 = vmatpush1.bf16.msra.mxu0 %v2461
      %2568 = vmatprep.subr.bf16.mxu0 0
      %2569 = vmatpush1.bf16.msra.mxu0 %v2462
      %2570 = vmatprep.subr.bf16.mxu0 0
      %2571 = vmatpush1.bf16.msra.mxu0 %v2463
      %2572 = vmatprep.subr.bf16.mxu0 0
      %2573 = vmatpush1.bf16.msra.mxu0 %v2464
      %2574 = vmatprep.subr.bf16.mxu0 0
      %2575 = vmatpush1.bf16.msra.mxu0 0
      %2576 = vmatprep.subr.bf16.mxu0 0
      %2577 = vmatpush1.bf16.msra.mxu0 0
      %2578 = vmatprep.subr.bf16.mxu0 0
      %2579 = vmatpush1.bf16.msra.mxu0 0
      %2580 = vmatprep.subr.bf16.mxu0 0
      %2581 = vmatpush1.bf16.msra.mxu0 0
      %2582 = vmatprep.subr.bf16.mxu0 0
      %2583 = vmatpush1.bf16.msra.mxu0 0
      %2584 = vmatprep.subr.bf16.mxu0 0
      %2585 = vmatpush1.bf16.msra.mxu0 0
      %2586 = vmatprep.subr.bf16.mxu0 0
      %2587 = vmatpush1.bf16.msra.mxu0 0
      %2588 = vmatprep.subr.bf16.mxu0 0
      %2589 = vmatpush1.bf16.msra.mxu0 0
      %2590 = vmatprep.subr.bf16.mxu0 0
      %2591 = vmatpush1.bf16.msra.mxu0 0
      %2592 = vmatprep.subr.bf16.mxu0 0
      %2593 = vmatpush1.bf16.msra.mxu0 0
      %2594 = vmatprep.subr.bf16.mxu0 0
      %2595 = vmatpush1.bf16.msra.mxu0 0
      %2596 = vmatprep.subr.bf16.mxu0 0
      %2597 = vmatpush1.bf16.msra.mxu0 0
      %2598 = vmatprep.mubr.bf16.mxu0 0
      %2599 = vmatmul.mubr.bf16.gmra.mrb[0].mxu0 %v2561
      %v2600 = vpop.f32.mrb[0].mxu0
      %v2601 = vadd.f32 0.0, %v2600
      %v2602 = vpop.f32.mrb[0].mxu0
      %v2603 = vpop.f32.mrb[0].mxu0
      %v2604 = vadd.f32 0.0, %v2603
      %v2605 = vpop.f32.mrb[0].mxu0
      %2606 = vmatprep.mubr.bf16.mxu0 0
      %2607 = vmatmul.mubr.bf16.gmra.mrb[0].mxu0 %v2564
      %v2608 = vpop.f32.mrb[0].mxu0
      %v2609 = vadd.f32 0.0, %v2608
      %v2610 = vpop.f32.mrb[0].mxu0
      %v2611 = vpop.f32.mrb[0].mxu0
      %v2612 = vadd.f32 0.0, %v2611
      %v2613 = vpop.f32.mrb[0].mxu0
      %2614 = vdwg.mxu0
      %v2615 = vpack.c.bf16 %v2604, %v2601
      %v2616 = vpack.c.bf16 %v2612, %v2609
      %v2617 = vld [vmem:[%s11] sm:$0xf]
      %v2618 = vld [vmem:[%s11 + $0x4] sm:$0xf]
      %v2619 = vld [vmem:[%s11 + $0x8] sm:$0xf]
      %v2620 = vld [vmem:[%s11 + $0xc] sm:$0xf]
      %v2621 = vld [vmem:[%s11 + $0x10] sm:$0xf]
      %v2622 = vld [vmem:[%s11 + $0x14] sm:$0xf]
      %v2623 = vld [vmem:[%s11 + $0x18] sm:$0xf]
      %v2624 = vld [vmem:[%s11 + $0x1c] sm:$0xf]
      %v2625 = vld [vmem:[%s11 + $0x20] sm:$0xf]
      %v2626 = vld [vmem:[%s11 + $0x24] sm:$0xf]
      %v2627 = vld [vmem:[%s11 + $0x28] sm:$0xf]
      %v2628 = vld [vmem:[%s11 + $0x2c] sm:$0xf]
      %v2629 = vld [vmem:[%s11 + $0x30] sm:$0xf]
      %v2630 = vld [vmem:[%s11 + $0x34] sm:$0xf]
      %v2631 = vld [vmem:[%s11 + $0x38] sm:$0xf]
      %v2632 = vld [vmem:[%s11 + $0x3c] sm:$0xf]
      %v2633 = vld [vmem:[%s11 + $0x40] sm:$0xf]
      %v2634 = vld [vmem:[%s11 + $0x44] sm:$0xf]
      %v2635 = vld [vmem:[%s11 + $0x48] sm:$0xf]
      %v2636 = vld [vmem:[%s11 + $0x4c] sm:$0xf]
      %v2637 = vld [vmem:[%s11 + $0x50] sm:$0xf]
      %v2638 = vld [vmem:[%s11 + $0x54] sm:$0xf]
      %v2639 = vld [vmem:[%s11 + $0x58] sm:$0xf]
      %v2640 = vld [vmem:[%s11 + $0x5c] sm:$0xf]
      %v2641 = vld [vmem:[%s11 + $0x60] sm:$0xf]
      %v2642 = vld [vmem:[%s11 + $0x64] sm:$0xf]
      %v2643 = vld [vmem:[%s11 + $0x68] sm:$0xf]
      %v2644 = vld [vmem:[%s11 + $0x6c] sm:$0xf]
      %v2645 = vld [vmem:[%s11 + $0x70] sm:$0xf]
      %v2646 = vld [vmem:[%s11 + $0x74] sm:$0xf]
      %v2647 = vld [vmem:[%s11 + $0x78] sm:$0xf]
      %v2648 = vld [vmem:[%s11 + $0x7c] sm:$0xf]
      %v2649 = vld [vmem:[%s11 + $0x80] sm:$0xf]
      %v2650 = vld [vmem:[%s11 + $0x84] sm:$0xf]
      %v2651 = vld [vmem:[%s11 + $0x88] sm:$0xf]
      %v2652 = vld [vmem:[%s11 + $0x8c] sm:$0xf]
      %v2653 = vld [vmem:[%s11 + $0x90] sm:$0xf]
      %v2654 = vld [vmem:[%s11 + $0x94] sm:$0xf]
      %v2655 = vld [vmem:[%s11 + $0x98] sm:$0xf]
      %v2656 = vld [vmem:[%s11 + $0x9c] sm:$0xf]
      %v2657 = vld [vmem:[%s11 + $0xa0] sm:$0xf]
      %v2658 = vld [vmem:[%s11 + $0xa4] sm:$0xf]
      %v2659 = vld [vmem:[%s11 + $0xa8] sm:$0xf]
      %v2660 = vld [vmem:[%s11 + $0xac] sm:$0xf]
      %v2661 = vld [vmem:[%s11 + $0xb0] sm:$0xf]
      %v2662 = vld [vmem:[%s11 + $0xb4] sm:$0xf]
      %v2663 = vld [vmem:[%s11 + $0xb8] sm:$0xf]
      %v2664 = vld [vmem:[%s11 + $0xbc] sm:$0xf]
      %v2665 = vld [vmem:[%s11 + $0xc0] sm:$0xf]
      %v2666 = vld [vmem:[%s11 + $0xc4] sm:$0xf]
      %v2667 = vld [vmem:[%s11 + $0xc8] sm:$0xf]
      %v2668 = vld [vmem:[%s11 + $0xcc] sm:$0xf]
      %v2669 = vld [vmem:[%s11 + $0xd0] sm:$0xf]
      %v2670 = vld [vmem:[%s11 + $0xd4] sm:$0xf]
      %v2671 = vld [vmem:[%s11 + $0xd8] sm:$0xf]
      %v2672 = vld [vmem:[%s11 + $0xdc] sm:$0xf]
      %v2673 = vld [vmem:[%s11 + $0xe0] sm:$0xf]
      %v2674 = vld [vmem:[%s11 + $0xe4] sm:$0xf]
      %v2675 = vld [vmem:[%s11 + $0xe8] sm:$0xf]
      %v2676 = vld [vmem:[%s11 + $0xec] sm:$0xf]
      %v2677 = vld [vmem:[%s11 + $0xf0] sm:$0xf]
      %v2678 = vld [vmem:[%s11 + $0xf4] sm:$0xf]
      %v2679 = vld [vmem:[%s11 + $0xf8] sm:$0xf]
      %v2680 = vld [vmem:[%s11 + $0xfc] sm:$0xf]
      %v2681 = vld [vmem:[%s12] sm:$0x1]
      %v2683 = vlaneseq
      %v2684 = vshrl.u32 %v2683, 7
      %v2685 = vsub.s32 0, %v2684
      %v2686 = vrot.slane %v2681, %v2685
      %v2752 = vunpack.c.l.b16 %v2617
      %v2753 = vunpack.c.l.b16 %v2618
      %v2754 = vunpack.c.l.b16 %v2619
      %v2755 = vunpack.c.l.b16 %v2620
      %v2756 = vunpack.c.l.b16 %v2621
      %v2757 = vunpack.c.l.b16 %v2622
      %v2758 = vunpack.c.l.b16 %v2623
      %v2759 = vunpack.c.l.b16 %v2624
      %v2760 = vunpack.c.l.b16 %v2625
      %v2761 = vunpack.c.l.b16 %v2626
      %v2762 = vunpack.c.l.b16 %v2627
      %v2763 = vunpack.c.l.b16 %v2628
      %v2764 = vunpack.c.l.b16 %v2629
      %v2765 = vunpack.c.l.b16 %v2630
      %v2766 = vunpack.c.l.b16 %v2631
      %v2767 = vunpack.c.l.b16 %v2632
      %v2768 = vunpack.c.l.b16 %v2633
      %v2769 = vunpack.c.l.b16 %v2634
      %v2770 = vunpack.c.l.b16 %v2635
      %v2771 = vunpack.c.l.b16 %v2636
      %v2772 = vunpack.c.l.b16 %v2637
      %v2773 = vunpack.c.l.b16 %v2638
      %v2774 = vunpack.c.l.b16 %v2639
      %v2775 = vunpack.c.l.b16 %v2640
      %v2776 = vunpack.c.l.b16 %v2641
      %v2777 = vunpack.c.l.b16 %v2642
      %v2778 = vunpack.c.l.b16 %v2643
      %v2779 = vunpack.c.l.b16 %v2644
      %v2780 = vunpack.c.l.b16 %v2645
      %v2781 = vunpack.c.l.b16 %v2646
      %v2782 = vunpack.c.l.b16 %v2647
      %v2783 = vunpack.c.l.b16 %v2648
      %v2784 = vunpack.c.l.b16 %v2649
      %v2785 = vunpack.c.l.b16 %v2650
      %v2786 = vunpack.c.l.b16 %v2651
      %v2787 = vunpack.c.l.b16 %v2652
      %v2788 = vunpack.c.l.b16 %v2653
      %v2789 = vunpack.c.l.b16 %v2654
      %v2790 = vunpack.c.l.b16 %v2655
      %v2791 = vunpack.c.l.b16 %v2656
      %v2792 = vunpack.c.l.b16 %v2657
      %v2793 = vunpack.c.l.b16 %v2658
      %v2794 = vunpack.c.l.b16 %v2659
      %v2795 = vunpack.c.l.b16 %v2660
      %v2796 = vunpack.c.l.b16 %v2661
      %v2797 = vunpack.c.l.b16 %v2662
      %v2798 = vunpack.c.l.b16 %v2663
      %v2799 = vunpack.c.l.b16 %v2664
      %v2800 = vunpack.c.l.b16 %v2665
      %v2801 = vunpack.c.l.b16 %v2666
      %v2802 = vunpack.c.l.b16 %v2667
      %v2803 = vunpack.c.l.b16 %v2668
      %v2804 = vunpack.c.l.b16 %v2669
      %v2805 = vunpack.c.l.b16 %v2670
      %v2806 = vunpack.c.l.b16 %v2671
      %v2807 = vunpack.c.l.b16 %v2672
      %v2808 = vunpack.c.l.b16 %v2673
      %v2809 = vunpack.c.l.b16 %v2674
      %v2810 = vunpack.c.l.b16 %v2675
      %v2811 = vunpack.c.l.b16 %v2676
      %v2812 = vunpack.c.l.b16 %v2677
      %v2813 = vunpack.c.l.b16 %v2678
      %v2814 = vunpack.c.l.b16 %v2679
      %v2815 = vunpack.c.l.b16 %v2680
      %v2816 = vpack.c.b16 %v2753, %v2752
      %v2817 = vpack.c.b16 %v2755, %v2754
      %v2818 = vpack.c.b16 %v2757, %v2756
      %v2819 = vpack.c.b16 %v2759, %v2758
      %v2820 = vpack.c.b16 %v2761, %v2760
      %v2821 = vpack.c.b16 %v2763, %v2762
      %v2822 = vpack.c.b16 %v2765, %v2764
      %v2823 = vpack.c.b16 %v2767, %v2766
      %v2824 = vpack.c.b16 %v2769, %v2768
      %v2825 = vpack.c.b16 %v2771, %v2770
      %v2826 = vpack.c.b16 %v2773, %v2772
      %v2827 = vpack.c.b16 %v2775, %v2774
      %v2828 = vpack.c.b16 %v2777, %v2776
      %v2829 = vpack.c.b16 %v2779, %v2778
      %v2830 = vpack.c.b16 %v2781, %v2780
      %v2831 = vpack.c.b16 %v2783, %v2782
      %v2832 = vpack.c.b16 %v2785, %v2784
      %v2833 = vpack.c.b16 %v2787, %v2786
      %v2834 = vpack.c.b16 %v2789, %v2788
      %v2835 = vpack.c.b16 %v2791, %v2790
      %v2836 = vpack.c.b16 %v2793, %v2792
      %v2837 = vpack.c.b16 %v2795, %v2794
      %v2838 = vpack.c.b16 %v2797, %v2796
      %v2839 = vpack.c.b16 %v2799, %v2798
      %v2840 = vpack.c.b16 %v2801, %v2800
      %v2841 = vpack.c.b16 %v2803, %v2802
      %v2842 = vpack.c.b16 %v2805, %v2804
      %v2843 = vpack.c.b16 %v2807, %v2806
      %v2844 = vpack.c.b16 %v2809, %v2808
      %v2845 = vpack.c.b16 %v2811, %v2810
      %v2846 = vpack.c.b16 %v2813, %v2812
      %v2847 = vpack.c.b16 %v2815, %v2814
      %2880 = vmatprep.subr.bf16.mxu0 0
      %2881 = vmatpush1.bf16.msra.mxu0 %v2816
      %2882 = vmatprep.subr.bf16.mxu0 0
      %2883 = vmatpush1.bf16.msra.mxu0 %v2817
      %2884 = vmatprep.subr.bf16.mxu0 0
      %2885 = vmatpush1.bf16.msra.mxu0 %v2818
      %2886 = vmatprep.subr.bf16.mxu0 0
      %2887 = vmatpush1.bf16.msra.mxu0 %v2819
      %2888 = vmatprep.subr.bf16.mxu0 0
      %2889 = vmatpush1.bf16.msra.mxu0 %v2820
      %2890 = vmatprep.subr.bf16.mxu0 0
      %2891 = vmatpush1.bf16.msra.mxu0 %v2821
      %2892 = vmatprep.subr.bf16.mxu0 0
      %2893 = vmatpush1.bf16.msra.mxu0 %v2822
      %2894 = vmatprep.subr.bf16.mxu0 0
      %2895 = vmatpush1.bf16.msra.mxu0 %v2823
      %2896 = vmatprep.subr.bf16.mxu0 0
      %2897 = vmatpush1.bf16.msra.mxu0 %v2824
      %2898 = vmatprep.subr.bf16.mxu0 0
      %2899 = vmatpush1.bf16.msra.mxu0 %v2825
      %2900 = vmatprep.subr.bf16.mxu0 0
      %2901 = vmatpush1.bf16.msra.mxu0 %v2826
      %2902 = vmatprep.subr.bf16.mxu0 0
      %2903 = vmatpush1.bf16.msra.mxu0 %v2827
      %2904 = vmatprep.subr.bf16.mxu0 0
      %2905 = vmatpush1.bf16.msra.mxu0 %v2828
      %2906 = vmatprep.subr.bf16.mxu0 0
      %2907 = vmatpush1.bf16.msra.mxu0 %v2829
      %2908 = vmatprep.subr.bf16.mxu0 0
      %2909 = vmatpush1.bf16.msra.mxu0 %v2830
      %2910 = vmatprep.subr.bf16.mxu0 0
      %2911 = vmatpush1.bf16.msra.mxu0 %v2831
      %2912 = vmatprep.mubr.bf16.mxu0 %v2295
      %2913 = vmatmul.mubr.bf16.gmra.mrb[0].mxu0 %v2135
      %v2914 = vpop.f32.mrb[0].mxu0
      %v2915 = vadd.f32 %v2686, %v2914
      %v2916 = vpop.f32.mrb[0].mxu0
      %v2917 = vpop.f32.mrb[0].mxu0
      %v2918 = vadd.f32 %v2686, %v2917
      %v2919 = vpop.f32.mrb[0].mxu0
      %2920 = vmatprep.mubr.bf16.mxu0 %v2296
      %2921 = vmatmul.mubr.bf16.gmra.mrb[0].mxu0 %v2136
      %v2922 = vpop.f32.mrb[0].mxu0
      %v2923 = vadd.f32 %v2686, %v2922
      %v2924 = vpop.f32.mrb[0].mxu0
      %v2925 = vpop.f32.mrb[0].mxu0
      %v2926 = vadd.f32 %v2686, %v2925
      %v2927 = vpop.f32.mrb[0].mxu0
      %2928 = vdwg.mxu0
      %2929 = vmatprep.subr.bf16.mxu0 0
      %2930 = vmatpush1.bf16.msra.mxu0 %v2832
      %2931 = vmatprep.subr.bf16.mxu0 0
      %2932 = vmatpush1.bf16.msra.mxu0 %v2833
      %2933 = vmatprep.subr.bf16.mxu0 0
      %2934 = vmatpush1.bf16.msra.mxu0 %v2834
      %2935 = vmatprep.subr.bf16.mxu0 0
      %2936 = vmatpush1.bf16.msra.mxu0 %v2835
      %2937 = vmatprep.subr.bf16.mxu0 0
      %2938 = vmatpush1.bf16.msra.mxu0 %v2836
      %2939 = vmatprep.subr.bf16.mxu0 0
      %2940 = vmatpush1.bf16.msra.mxu0 %v2837
      %2941 = vmatprep.subr.bf16.mxu0 0
      %2942 = vmatpush1.bf16.msra.mxu0 %v2838
      %2943 = vmatprep.subr.bf16.mxu0 0
      %2944 = vmatpush1.bf16.msra.mxu0 %v2839
      %2945 = vmatprep.subr.bf16.mxu0 0
      %2946 = vmatpush1.bf16.msra.mxu0 %v2840
      %2947 = vmatprep.subr.bf16.mxu0 0
      %2948 = vmatpush1.bf16.msra.mxu0 %v2841
      %2949 = vmatprep.subr.bf16.mxu0 0
      %2950 = vmatpush1.bf16.msra.mxu0 %v2842
      %2951 = vmatprep.subr.bf16.mxu0 0
      %2952 = vmatpush1.bf16.msra.mxu0 %v2843
      %2953 = vmatprep.subr.bf16.mxu0 0
      %2954 = vmatpush1.bf16.msra.mxu0 %v2844
      %2955 = vmatprep.subr.bf16.mxu0 0
      %2956 = vmatpush1.bf16.msra.mxu0 %v2845
      %2957 = vmatprep.subr.bf16.mxu0 0
      %2958 = vmatpush1.bf16.msra.mxu0 %v2846
      %2959 = vmatprep.subr.bf16.mxu0 0
      %2960 = vmatpush1.bf16.msra.mxu0 %v2847
      %2961 = vmatprep.mubr.bf16.mxu0 %v2615
      %2962 = vmatmul.mubr.bf16.gmra.mrb[0].mxu0 %v2455
      %v2963 = vpop.f32.mrb[0].mxu0
      %v2964 = vadd.f32 %v2915, %v2963
      %v2965 = vpop.f32.mrb[0].mxu0
      %v2966 = vpop.f32.mrb[0].mxu0
      %v2967 = vadd.f32 %v2918, %v2966
      %v2968 = vpop.f32.mrb[0].mxu0
      %2969 = vmatprep.mubr.bf16.mxu0 %v2616
      %2970 = vmatmul.mubr.bf16.gmra.mrb[0].mxu0 %v2456
      %v2971 = vpop.f32.mrb[0].mxu0
      %v2972 = vadd.f32 %v2923, %v2971
      %v2973 = vpop.f32.mrb[0].mxu0
      %v2974 = vpop.f32.mrb[0].mxu0
      %v2975 = vadd.f32 %v2926, %v2974
      %v2976 = vpop.f32.mrb[0].mxu0
      %2977 = vdwg.mxu0
      %v2978 = vlaneseq
      %v2979 = vshrl.u32 %v2978, 7
      %v2980 = vsub.s32 2, %v2979
      %v2981 = vrot.slane %v861, %v2980
      %v2982 = vmul.f32 %v2981, %v2964
      %v2983 = vmul.f32 %v2981, %v2967
      %v2984 = vmul.f32 %v2981, %v2972
      %v2985 = vmul.f32 %v2981, %v2975
      %v2986 = vadd.f32 %v1693, %v2982
      %v2987 = vadd.f32 %v1694, %v2983
      %v2988 = vadd.f32 %v1695, %v2984
      %v2989 = vadd.f32 %v1696, %v2985
      %v2990 = vpack.c.bf16 %v2987, %v2986
      %v2991 = vpack.c.bf16 %v2989, %v2988
      %v2992 = vld [vmem:[%s13] sm:$0xff]
      %v2993 = vld [vmem:[%s13 + $0x8] sm:$0xff]
      %v2994 = vld [vmem:[%s13 + $0x10] sm:$0xff]
      %v2995 = vld [vmem:[%s13 + $0x18] sm:$0xff]
      %v2996 = vld [vmem:[%s13 + $0x20] sm:$0xff]
      %v2997 = vld [vmem:[%s13 + $0x28] sm:$0xff]
      %v2998 = vld [vmem:[%s13 + $0x30] sm:$0xff]
      %v2999 = vld [vmem:[%s13 + $0x38] sm:$0xff]
      %v3000 = vld [vmem:[%s14] sm:$0xf]
      %v3002 = vlaneseq
      %v3003 = vshrl.u32 %v3002, 7
      %v3004 = vsub.s32 0, %v3003
      %v3005 = vrot.slane %v3000, %v3004
      %v3006 = vlaneseq
      %v3007 = vshrl.u32 %v3006, 7
      %v3008 = vsub.s32 1, %v3007
      %v3009 = vrot.slane %v3000, %v3008
      %v3010 = vlaneseq
      %v3011 = vshrl.u32 %v3010, 7
      %v3012 = vsub.s32 2, %v3011
      %v3013 = vrot.slane %v3000, %v3012
      %v3014 = vlaneseq
      %v3015 = vshrl.u32 %v3014, 7
      %v3016 = vsub.s32 3, %v3015
      %v3017 = vrot.slane %v3000, %v3016
      %v3030 = vunpack.c.l.b16 %v2992
      %v3031 = vunpack.c.h.b16 %v2992
      %v3032 = vunpack.c.l.b16 %v2993
      %v3033 = vunpack.c.h.b16 %v2993
      %v3034 = vunpack.c.l.b16 %v2994
      %v3035 = vunpack.c.h.b16 %v2994
      %v3036 = vunpack.c.l.b16 %v2995
      %v3037 = vunpack.c.h.b16 %v2995
      %v3038 = vunpack.c.l.b16 %v2996
      %v3039 = vunpack.c.h.b16 %v2996
      %v3040 = vunpack.c.l.b16 %v2997
      %v3041 = vunpack.c.h.b16 %v2997
      %v3042 = vunpack.c.l.b16 %v2998
      %v3043 = vunpack.c.h.b16 %v2998
      %v3044 = vunpack.c.l.b16 %v2999
      %v3045 = vunpack.c.h.b16 %v2999
      %v3046 = vpack.c.b16 %v3034, %v3030
      %v3047 = vpack.c.b16 %v3035, %v3031
      %v3048 = vpack.c.b16 %v3036, %v3032
      %v3049 = vpack.c.b16 %v3037, %v3033
      %v3050 = vpack.c.b16 %v3042, %v3038
      %v3051 = vpack.c.b16 %v3043, %v3039
      %v3052 = vpack.c.b16 %v3044, %v3040
      %v3053 = vpack.c.b16 %v3045, %v3041
      %v3063 = vsel %vm1697, %v2990, 0
      %v3066 = vsel %vm1697, %v2991, 0
      %3068 = vmatprep.subr.bf16.mxu0 %v3047
      %3069 = vmatpush1.bf16.msra.mxu0 %v3046
      %3070 = vmatprep.subr.bf16.mxu0 %v3051
      %3071 = vmatpush1.bf16.msra.mxu0 %v3050
      %3072 = vmatprep.subr.bf16.mxu0 0
      %3073 = vmatpush1.bf16.msra.mxu0 0
      %3074 = vmatprep.subr.bf16.mxu0 0
      %3075 = vmatpush1.bf16.msra.mxu0 0
      %3076 = vmatprep.subr.bf16.mxu0 0
      %3077 = vmatpush1.bf16.msra.mxu0 0
      %3078 = vmatprep.subr.bf16.mxu0 0
      %3079 = vmatpush1.bf16.msra.mxu0 0
      %3080 = vmatprep.subr.bf16.mxu0 0
      %3081 = vmatpush1.bf16.msra.mxu0 0
      %3082 = vmatprep.subr.bf16.mxu0 0
      %3083 = vmatpush1.bf16.msra.mxu0 0
      %3084 = vmatprep.subr.bf16.mxu0 0
      %3085 = vmatpush1.bf16.msra.mxu0 0
      %3086 = vmatprep.subr.bf16.mxu0 0
      %3087 = vmatpush1.bf16.msra.mxu0 0
      %3088 = vmatprep.subr.bf16.mxu0 0
      %3089 = vmatpush1.bf16.msra.mxu0 0
      %3090 = vmatprep.subr.bf16.mxu0 0
      %3091 = vmatpush1.bf16.msra.mxu0 0
      %3092 = vmatprep.subr.bf16.mxu0 0
      %3093 = vmatpush1.bf16.msra.mxu0 0
      %3094 = vmatprep.subr.bf16.mxu0 0
      %3095 = vmatpush1.bf16.msra.mxu0 0
      %3096 = vmatprep.subr.bf16.mxu0 0
      %3097 = vmatpush1.bf16.msra.mxu0 0
      %3098 = vmatprep.subr.bf16.mxu0 0
      %3099 = vmatpush1.bf16.msra.mxu0 0
      %3100 = vmatprep.mubr.bf16.mxu0 0
      %3101 = vmatmul.mubr.bf16.gmra.mrb[0].mxu0 %v3063
      %v3102 = vpop.f32.mrb[0].mxu0
      %v3103 = vadd.f32 %v3005, %v3102
      %v3104 = vpop.f32.mrb[0].mxu0
      %v3105 = vadd.f32 %v3009, %v3104
      %v3106 = vpop.f32.mrb[0].mxu0
      %v3107 = vadd.f32 %v3005, %v3106
      %v3108 = vpop.f32.mrb[0].mxu0
      %v3109 = vadd.f32 %v3009, %v3108
      %3110 = vmatprep.mubr.bf16.mxu0 0
      %3111 = vmatmul.mubr.bf16.gmra.mrb[0].mxu0 %v3066
      %v3112 = vpop.f32.mrb[0].mxu0
      %v3113 = vadd.f32 %v3005, %v3112
      %v3114 = vpop.f32.mrb[0].mxu0
      %v3115 = vadd.f32 %v3009, %v3114
      %v3116 = vpop.f32.mrb[0].mxu0
      %v3117 = vadd.f32 %v3005, %v3116
      %v3118 = vpop.f32.mrb[0].mxu0
      %v3119 = vadd.f32 %v3009, %v3118
      %3120 = vdwg.mxu0
      %3121 = vmatprep.subr.bf16.mxu0 %v3049
      %3122 = vmatpush1.bf16.msra.mxu0 %v3048
      %3123 = vmatprep.subr.bf16.mxu0 %v3053
      %3124 = vmatpush1.bf16.msra.mxu0 %v3052
      %3125 = vmatprep.subr.bf16.mxu0 0
      %3126 = vmatpush1.bf16.msra.mxu0 0
      %3127 = vmatprep.subr.bf16.mxu0 0
      %3128 = vmatpush1.bf16.msra.mxu0 0
      %3129 = vmatprep.subr.bf16.mxu0 0
      %3130 = vmatpush1.bf16.msra.mxu0 0
      %3131 = vmatprep.subr.bf16.mxu0 0
      %3132 = vmatpush1.bf16.msra.mxu0 0
      %3133 = vmatprep.subr.bf16.mxu0 0
      %3134 = vmatpush1.bf16.msra.mxu0 0
      %3135 = vmatprep.subr.bf16.mxu0 0
      %3136 = vmatpush1.bf16.msra.mxu0 0
      %3137 = vmatprep.subr.bf16.mxu0 0
      %3138 = vmatpush1.bf16.msra.mxu0 0
      %3139 = vmatprep.subr.bf16.mxu0 0
      %3140 = vmatpush1.bf16.msra.mxu0 0
      %3141 = vmatprep.subr.bf16.mxu0 0
      %3142 = vmatpush1.bf16.msra.mxu0 0
      %3143 = vmatprep.subr.bf16.mxu0 0
      %3144 = vmatpush1.bf16.msra.mxu0 0
      %3145 = vmatprep.subr.bf16.mxu0 0
      %3146 = vmatpush1.bf16.msra.mxu0 0
      %3147 = vmatprep.subr.bf16.mxu0 0
      %3148 = vmatpush1.bf16.msra.mxu0 0
      %3149 = vmatprep.subr.bf16.mxu0 0
      %3150 = vmatpush1.bf16.msra.mxu0 0
      %3151 = vmatprep.subr.bf16.mxu0 0
      %3152 = vmatpush1.bf16.msra.mxu0 0
      %3153 = vmatprep.mubr.bf16.mxu0 0
      %3154 = vmatmul.mubr.bf16.gmra.mrb[0].mxu0 %v3063
      %v3155 = vpop.f32.mrb[0].mxu0
      %v3156 = vadd.f32 %v3013, %v3155
      %v3157 = vpop.f32.mrb[0].mxu0
      %v3158 = vadd.f32 %v3017, %v3157
      %v3159 = vpop.f32.mrb[0].mxu0
      %v3160 = vadd.f32 %v3013, %v3159
      %v3161 = vpop.f32.mrb[0].mxu0
      %v3162 = vadd.f32 %v3017, %v3161
      %3163 = vmatprep.mubr.bf16.mxu0 0
      %3164 = vmatmul.mubr.bf16.gmra.mrb[0].mxu0 %v3066
      %v3165 = vpop.f32.mrb[0].mxu0
      %v3166 = vadd.f32 %v3013, %v3165
      %v3167 = vpop.f32.mrb[0].mxu0
      %v3168 = vadd.f32 %v3017, %v3167
      %v3169 = vpop.f32.mrb[0].mxu0
      %v3170 = vadd.f32 %v3013, %v3169
      %v3171 = vpop.f32.mrb[0].mxu0
      %v3172 = vadd.f32 %v3017, %v3171
      %3173 = vdwg.mxu0
      %v3174 = vmul.f32 %v3103, 0.35355338
      %v3175 = vmul.f32 %v3105, 0.35355338
      %v3176 = vmul.f32 %v3156, 0.35355338
      %v3177 = vmul.f32 %v3158, 0.35355338
      %v3178 = vmul.f32 %v3107, 0.35355338
      %v3179 = vmul.f32 %v3109, 0.35355338
      %v3180 = vmul.f32 %v3160, 0.35355338
      %v3181 = vmul.f32 %v3162, 0.35355338
      %v3182 = vmul.f32 %v3113, 0.35355338
      %v3183 = vmul.f32 %v3115, 0.35355338
      %v3184 = vmul.f32 %v3166, 0.35355338
      %v3185 = vmul.f32 %v3168, 0.35355338
      %v3186 = vmul.f32 %v3117, 0.35355338
      %v3187 = vmul.f32 %v3119, 0.35355338
      %v3188 = vmul.f32 %v3170, 0.35355338
      %v3189 = vmul.f32 %v3172, 0.35355338
      %v3190 = vpack.c.bf16 %v3178, %v3174
      %v3191 = vpack.c.bf16 %v3179, %v3175
      %v3192 = vpack.c.bf16 %v3180, %v3176
      %v3193 = vpack.c.bf16 %v3181, %v3177
      %v3194 = vpack.c.bf16 %v3186, %v3182
      %v3195 = vpack.c.bf16 %v3187, %v3183
      %v3196 = vpack.c.bf16 %v3188, %v3184
      %v3197 = vpack.c.bf16 %v3189, %v3185
      %v3198 = vld [vmem:[#allocation4] sm:$0xf]
      %v3199 = vld [vmem:[#allocation5] sm:$0xf]
      %3200 = vmatprep.subr.bf16.mxu0 0
      %3201 = vmatpush1.bf16.xpose.msra.mxu0 %v3198
      %3202 = vmatprep.subr.bf16.mxu0 0
      %3203 = vmatpush1.bf16.xpose.msra.mxu0 0
      %3204 = vmatprep.subr.bf16.mxu0 0
      %3205 = vmatpush1.bf16.xpose.msra.mxu0 0
      %3206 = vmatprep.subr.bf16.mxu0 0
      %3207 = vmatpush1.bf16.xpose.msra.mxu0 0
      %3208 = vmatprep.subr.bf16.mxu0 0
      %3209 = vmatpush1.bf16.xpose.msra.mxu0 0
      %3210 = vmatprep.subr.bf16.mxu0 0
      %3211 = vmatpush1.bf16.xpose.msra.mxu0 0
      %3212 = vmatprep.subr.bf16.mxu0 0
      %3213 = vmatpush1.bf16.xpose.msra.mxu0 0
      %3214 = vmatprep.subr.bf16.mxu0 0
      %3215 = vmatpush1.bf16.xpose.msra.mxu0 0
      %3216 = vmatprep.subr.bf16.mxu0 0
      %3217 = vmatpush1.bf16.xpose.msra.mxu0 0
      %3218 = vmatprep.subr.bf16.mxu0 0
      %3219 = vmatpush1.bf16.xpose.msra.mxu0 0
      %3220 = vmatprep.subr.bf16.mxu0 0
      %3221 = vmatpush1.bf16.xpose.msra.mxu0 0
      %3222 = vmatprep.subr.bf16.mxu0 0
      %3223 = vmatpush1.bf16.xpose.msra.mxu0 0
      %3224 = vmatprep.subr.bf16.mxu0 0
      %3225 = vmatpush1.bf16.xpose.msra.mxu0 0
      %3226 = vmatprep.subr.bf16.mxu0 0
      %3227 = vmatpush1.bf16.xpose.msra.mxu0 0
      %3228 = vmatprep.subr.bf16.mxu0 0
      %3229 = vmatpush1.bf16.xpose.msra.mxu0 0
      %3230 = vmatprep.subr.bf16.mxu0 0
      %3231 = vmatpush1.bf16.xpose.msra.mxu0 0
      %3232 = vmatprep.mubr.bf16.mxu0 0
      %3233 = vmatmul.mubr.bf16.gmra.mrb[0].mxu0 %v3190
      %v3234 = vpop.f32.mrb[0].mxu0
      %v3235 = vadd.f32 0.0, %v3234
      %v3236 = vpop.f32.mrb[0].mxu0
      %v3237 = vpop.f32.mrb[0].mxu0
      %v3238 = vadd.f32 0.0, %v3237
      %v3239 = vpop.f32.mrb[0].mxu0
      %3240 = vmatprep.mubr.bf16.mxu0 0
      %3241 = vmatmul.mubr.bf16.gmra.mrb[0].mxu0 %v3194
      %v3242 = vpop.f32.mrb[0].mxu0
      %v3243 = vadd.f32 0.0, %v3242
      %v3244 = vpop.f32.mrb[0].mxu0
      %v3245 = vpop.f32.mrb[0].mxu0
      %v3246 = vadd.f32 0.0, %v3245
      %v3247 = vpop.f32.mrb[0].mxu0
      %3248 = vdwg.mxu0
      %vm3249 = vcmask 64512
      %v3250 = vsel %vm3249, %v3235, -inf
      %3251 = vmax.xlane.f32.xlu0 %v3250
      %v3252 = vpop.xlane.xlu0 %3251
      %v3253 = vsel %vm3249, %v3238, -inf
      %3254 = vmax.xlane.f32.xlu0 %v3253
      %v3255 = vpop.xlane.xlu0 %3254
      %v3256 = vsel %vm3249, %v3243, -inf
      %3257 = vmax.xlane.f32.xlu0 %v3256
      %v3258 = vpop.xlane.xlu0 %3257
      %v3259 = vsel %vm3249, %v3246, -inf
      %3260 = vmax.xlane.f32.xlu0 %v3259
      %v3261 = vpop.xlane.xlu0 %3260
      %v3262 = vsub.f32 %v3235, %v3252
      %v3263 = vsub.f32 %v3238, %v3255
      %v3264 = vsub.f32 %v3243, %v3258
      %v3265 = vsub.f32 %v3246, %v3261
      %v3266 = vmul.f32 %v3262, 1.442695
      %v3267 = vpow.pop %v3266
      %v3268 = vmul.f32 %v3263, 1.442695
      %v3269 = vpow.pop %v3268
      %v3270 = vmul.f32 %v3264, 1.442695
      %v3271 = vpow.pop %v3270
      %v3272 = vmul.f32 %v3265, 1.442695
      %v3273 = vpow.pop %v3272
      %v3274 = vsel %vm3249, %v3267, 0.0
      %3275 = vadd.xlane.f32.xlu0 %v3274
      %v3276 = vpop.xlane.xlu0 %3275
      %v3277 = vsel %vm3249, %v3269, 0.0
      %3278 = vadd.xlane.f32.xlu0 %v3277
      %v3279 = vpop.xlane.xlu0 %3278
      %v3280 = vsel %vm3249, %v3271, 0.0
      %3281 = vadd.xlane.f32.xlu0 %v3280
      %v3282 = vpop.xlane.xlu0 %3281
      %v3283 = vsel %vm3249, %v3273, 0.0
      %3284 = vadd.xlane.f32.xlu0 %v3283
      %v3285 = vpop.xlane.xlu0 %3284
      %v3286 = vrcp.pop %v3276
      %v3287 = vrcp.pop %v3279
      %v3288 = vrcp.pop %v3282
      %v3289 = vrcp.pop %v3285
      %v3290 = vmul.f32 %v3267, %v3286
      %v3291 = vmul.f32 %v3269, %v3287
      %v3292 = vmul.f32 %v3271, %v3288
      %v3293 = vmul.f32 %v3273, %v3289
      %v3294 = vpack.c.bf16 %v3291, %v3290
      %v3295 = vpack.c.bf16 %v3293, %v3292
      %v3297 = vsel %vm3249, %v3294, 0
      %v3300 = vsel %vm3249, %v3295, 0
      %vm3302 = vcmask 1043456
      %v3304 = vsel %vm3302, %v3199, 0
      %3306 = vmatprep.subr.bf16.mxu0 0
      %3307 = vmatpush1.bf16.msra.mxu0 %v3304
      %3308 = vmatprep.subr.bf16.mxu0 0
      %3309 = vmatpush1.bf16.msra.mxu0 0
      %3310 = vmatprep.subr.bf16.mxu0 0
      %3311 = vmatpush1.bf16.msra.mxu0 0
      %3312 = vmatprep.subr.bf16.mxu0 0
      %3313 = vmatpush1.bf16.msra.mxu0 0
      %3314 = vmatprep.subr.bf16.mxu0 0
      %3315 = vmatpush1.bf16.msra.mxu0 0
      %3316 = vmatprep.subr.bf16.mxu0 0
      %3317 = vmatpush1.bf16.msra.mxu0 0
      %3318 = vmatprep.subr.bf16.mxu0 0
      %3319 = vmatpush1.bf16.msra.mxu0 0
      %3320 = vmatprep.subr.bf16.mxu0 0
      %3321 = vmatpush1.bf16.msra.mxu0 0
      %3322 = vmatprep.subr.bf16.mxu0 0
      %3323 = vmatpush1.bf16.msra.mxu0 0
      %3324 = vmatprep.subr.bf16.mxu0 0
      %3325 = vmatpush1.bf16.msra.mxu0 0
      %3326 = vmatprep.subr.bf16.mxu0 0
      %3327 = vmatpush1.bf16.msra.mxu0 0
      %3328 = vmatprep.subr.bf16.mxu0 0
      %3329 = vmatpush1.bf16.msra.mxu0 0
      %3330 = vmatprep.subr.bf16.mxu0 0
      %3331 = vmatpush1.bf16.msra.mxu0 0
      %3332 = vmatprep.subr.bf16.mxu0 0
      %3333 = vmatpush1.bf16.msra.mxu0 0
      %3334 = vmatprep.subr.bf16.mxu0 0
      %3335 = vmatpush1.bf16.msra.mxu0 0
      %3336 = vmatprep.subr.bf16.mxu0 0
      %3337 = vmatpush1.bf16.msra.mxu0 0
      %3338 = vmatprep.mubr.bf16.mxu0 0
      %3339 = vmatmul.mubr.bf16.gmra.mrb[0].mxu0 %v3297
      %v3340 = vpop.f32.mrb[0].mxu0
      %v3341 = vadd.f32 0.0, %v3340
      %v3342 = vpop.f32.mrb[0].mxu0
      %v3343 = vpop.f32.mrb[0].mxu0
      %v3344 = vadd.f32 0.0, %v3343
      %v3345 = vpop.f32.mrb[0].mxu0
      %3346 = vmatprep.mubr.bf16.mxu0 0
      %3347 = vmatmul.mubr.bf16.gmra.mrb[0].mxu0 %v3300
      %v3348 = vpop.f32.mrb[0].mxu0
      %v3349 = vadd.f32 0.0, %v3348
      %v3350 = vpop.f32.mrb[0].mxu0
      %v3351 = vpop.f32.mrb[0].mxu0
      %v3352 = vadd.f32 0.0, %v3351
      %v3353 = vpop.f32.mrb[0].mxu0
      %3354 = vdwg.mxu0
      %v3355 = vpack.c.bf16 %v3344, %v3341
      %v3356 = vpack.c.bf16 %v3352, %v3349
      %v3357 = vld [vmem:[#allocation4 + $0x4] sm:$0xf]
      %v3358 = vld [vmem:[#allocation5 + $0x4] sm:$0xf]
      %3359 = vmatprep.subr.bf16.mxu0 0
      %3360 = vmatpush1.bf16.xpose.msra.mxu0 %v3357
      %3361 = vmatprep.subr.bf16.mxu0 0
      %3362 = vmatpush1.bf16.xpose.msra.mxu0 0
      %3363 = vmatprep.subr.bf16.mxu0 0
      %3364 = vmatpush1.bf16.xpose.msra.mxu0 0
      %3365 = vmatprep.subr.bf16.mxu0 0
      %3366 = vmatpush1.bf16.xpose.msra.mxu0 0
      %3367 = vmatprep.subr.bf16.mxu0 0
      %3368 = vmatpush1.bf16.xpose.msra.mxu0 0
      %3369 = vmatprep.subr.bf16.mxu0 0
      %3370 = vmatpush1.bf16.xpose.msra.mxu0 0
      %3371 = vmatprep.subr.bf16.mxu0 0
      %3372 = vmatpush1.bf16.xpose.msra.mxu0 0
      %3373 = vmatprep.subr.bf16.mxu0 0
      %3374 = vmatpush1.bf16.xpose.msra.mxu0 0
      %3375 = vmatprep.subr.bf16.mxu0 0
      %3376 = vmatpush1.bf16.xpose.msra.mxu0 0
      %3377 = vmatprep.subr.bf16.mxu0 0
      %3378 = vmatpush1.bf16.xpose.msra.mxu0 0
      %3379 = vmatprep.subr.bf16.mxu0 0
      %3380 = vmatpush1.bf16.xpose.msra.mxu0 0
      %3381 = vmatprep.subr.bf16.mxu0 0
      %3382 = vmatpush1.bf16.xpose.msra.mxu0 0
      %3383 = vmatprep.subr.bf16.mxu0 0
      %3384 = vmatpush1.bf16.xpose.msra.mxu0 0
      %3385 = vmatprep.subr.bf16.mxu0 0
      %3386 = vmatpush1.bf16.xpose.msra.mxu0 0
      %3387 = vmatprep.subr.bf16.mxu0 0
      %3388 = vmatpush1.bf16.xpose.msra.mxu0 0
      %3389 = vmatprep.subr.bf16.mxu0 0
      %3390 = vmatpush1.bf16.xpose.msra.mxu0 0
      %3391 = vmatprep.mubr.bf16.mxu0 0
      %3392 = vmatmul.mubr.bf16.gmra.mrb[0].mxu0 %v3191
      %v3393 = vpop.f32.mrb[0].mxu0
      %v3394 = vadd.f32 0.0, %v3393
      %v3395 = vpop.f32.mrb[0].mxu0
      %v3396 = vpop.f32.mrb[0].mxu0
      %v3397 = vadd.f32 0.0, %v3396
      %v3398 = vpop.f32.mrb[0].mxu0
      %3399 = vmatprep.mubr.bf16.mxu0 0
      %3400 = vmatmul.mubr.bf16.gmra.mrb[0].mxu0 %v3195
      %v3401 = vpop.f32.mrb[0].mxu0
      %v3402 = vadd.f32 0.0, %v3401
      %v3403 = vpop.f32.mrb[0].mxu0
      %v3404 = vpop.f32.mrb[0].mxu0
      %v3405 = vadd.f32 0.0, %v3404
      %v3406 = vpop.f32.mrb[0].mxu0
      %3407 = vdwg.mxu0
      %v3408 = vsel %vm3249, %v3394, -inf
      %3409 = vmax.xlane.f32.xlu0 %v3408
      %v3410 = vpop.xlane.xlu0 %3409
      %v3411 = vsel %vm3249, %v3397, -inf
      %3412 = vmax.xlane.f32.xlu0 %v3411
      %v3413 = vpop.xlane.xlu0 %3412
      %v3414 = vsel %vm3249, %v3402, -inf
      %3415 = vmax.xlane.f32.xlu0 %v3414
      %v3416 = vpop.xlane.xlu0 %3415
      %v3417 = vsel %vm3249, %v3405, -inf
      %3418 = vmax.xlane.f32.xlu0 %v3417
      %v3419 = vpop.xlane.xlu0 %3418
      %v3420 = vsub.f32 %v3394, %v3410
      %v3421 = vsub.f32 %v3397, %v3413
      %v3422 = vsub.f32 %v3402, %v3416
      %v3423 = vsub.f32 %v3405, %v3419
      %v3424 = vmul.f32 %v3420, 1.442695
      %v3425 = vpow.pop %v3424
      %v3426 = vmul.f32 %v3421, 1.442695
      %v3427 = vpow.pop %v3426
      %v3428 = vmul.f32 %v3422, 1.442695
      %v3429 = vpow.pop %v3428
      %v3430 = vmul.f32 %v3423, 1.442695
      %v3431 = vpow.pop %v3430
      %v3432 = vsel %vm3249, %v3425, 0.0
      %3433 = vadd.xlane.f32.xlu0 %v3432
      %v3434 = vpop.xlane.xlu0 %3433
      %v3435 = vsel %vm3249, %v3427, 0.0
      %3436 = vadd.xlane.f32.xlu0 %v3435
      %v3437 = vpop.xlane.xlu0 %3436
      %v3438 = vsel %vm3249, %v3429, 0.0
      %3439 = vadd.xlane.f32.xlu0 %v3438
      %v3440 = vpop.xlane.xlu0 %3439
      %v3441 = vsel %vm3249, %v3431, 0.0
      %3442 = vadd.xlane.f32.xlu0 %v3441
      %v3443 = vpop.xlane.xlu0 %3442
      %v3444 = vrcp.pop %v3434
      %v3445 = vrcp.pop %v3437
      %v3446 = vrcp.pop %v3440
      %v3447 = vrcp.pop %v3443
      %v3448 = vmul.f32 %v3425, %v3444
      %v3449 = vmul.f32 %v3427, %v3445
      %v3450 = vmul.f32 %v3429, %v3446
      %v3451 = vmul.f32 %v3431, %v3447
      %v3452 = vpack.c.bf16 %v3449, %v3448
      %v3453 = vpack.c.bf16 %v3451, %v3450
      %v3455 = vsel %vm3249, %v3452, 0
      %v3458 = vsel %vm3249, %v3453, 0
      %v3461 = vsel %vm3302, %v3358, 0
      %3463 = vmatprep.subr.bf16.mxu0 0
      %3464 = vmatpush1.bf16.msra.mxu0 %v3461
      %3465 = vmatprep.subr.bf16.mxu0 0
      %3466 = vmatpush1.bf16.msra.mxu0 0
      %3467 = vmatprep.subr.bf16.mxu0 0
      %3468 = vmatpush1.bf16.msra.mxu0 0
      %3469 = vmatprep.subr.bf16.mxu0 0
      %3470 = vmatpush1.bf16.msra.mxu0 0
      %3471 = vmatprep.subr.bf16.mxu0 0
      %3472 = vmatpush1.bf16.msra.mxu0 0
      %3473 = vmatprep.subr.bf16.mxu0 0
      %3474 = vmatpush1.bf16.msra.mxu0 0
      %3475 = vmatprep.subr.bf16.mxu0 0
      %3476 = vmatpush1.bf16.msra.mxu0 0
      %3477 = vmatprep.subr.bf16.mxu0 0
      %3478 = vmatpush1.bf16.msra.mxu0 0
      %3479 = vmatprep.subr.bf16.mxu0 0
      %3480 = vmatpush1.bf16.msra.mxu0 0
      %3481 = vmatprep.subr.bf16.mxu0 0
      %3482 = vmatpush1.bf16.msra.mxu0 0
      %3483 = vmatprep.subr.bf16.mxu0 0
      %3484 = vmatpush1.bf16.msra.mxu0 0
      %3485 = vmatprep.subr.bf16.mxu0 0
      %3486 = vmatpush1.bf16.msra.mxu0 0
      %3487 = vmatprep.subr.bf16.mxu0 0
      %3488 = vmatpush1.bf16.msra.mxu0 0
      %3489 = vmatprep.subr.bf16.mxu0 0
      %3490 = vmatpush1.bf16.msra.mxu0 0
      %3491 = vmatprep.subr.bf16.mxu0 0
      %3492 = vmatpush1.bf16.msra.mxu0 0
      %3493 = vmatprep.subr.bf16.mxu0 0
      %3494 = vmatpush1.bf16.msra.mxu0 0
      %3495 = vmatprep.mubr.bf16.mxu0 0
      %3496 = vmatmul.mubr.bf16.gmra.mrb[0].mxu0 %v3455
      %v3497 = vpop.f32.mrb[0].mxu0
      %v3498 = vadd.f32 0.0, %v3497
      %v3499 = vpop.f32.mrb[0].mxu0
      %v3500 = vpop.f32.mrb[0].mxu0
      %v3501 = vadd.f32 0.0, %v3500
      %v3502 = vpop.f32.mrb[0].mxu0
      %3503 = vmatprep.mubr.bf16.mxu0 0
      %3504 = vmatmul.mubr.bf16.gmra.mrb[0].mxu0 %v3458
      %v3505 = vpop.f32.mrb[0].mxu0
      %v3506 = vadd.f32 0.0, %v3505
      %v3507 = vpop.f32.mrb[0].mxu0
      %v3508 = vpop.f32.mrb[0].mxu0
      %v3509 = vadd.f32 0.0, %v3508
      %v3510 = vpop.f32.mrb[0].mxu0
      %3511 = vdwg.mxu0
      %v3512 = vpack.c.bf16 %v3501, %v3498
      %v3513 = vpack.c.bf16 %v3509, %v3506
      %v3514 = vld [vmem:[#allocation4 + $0x8] sm:$0xf]
      %v3515 = vld [vmem:[#allocation5 + $0x8] sm:$0xf]
      %3516 = vmatprep.subr.bf16.mxu0 0
      %3517 = vmatpush1.bf16.xpose.msra.mxu0 %v3514
      %3518 = vmatprep.subr.bf16.mxu0 0
      %3519 = vmatpush1.bf16.xpose.msra.mxu0 0
      %3520 = vmatprep.subr.bf16.mxu0 0
      %3521 = vmatpush1.bf16.xpose.msra.mxu0 0
      %3522 = vmatprep.subr.bf16.mxu0 0
      %3523 = vmatpush1.bf16.xpose.msra.mxu0 0
      %3524 = vmatprep.subr.bf16.mxu0 0
      %3525 = vmatpush1.bf16.xpose.msra.mxu0 0
      %3526 = vmatprep.subr.bf16.mxu0 0
      %3527 = vmatpush1.bf16.xpose.msra.mxu0 0
      %3528 = vmatprep.subr.bf16.mxu0 0
      %3529 = vmatpush1.bf16.xpose.msra.mxu0 0
      %3530 = vmatprep.subr.bf16.mxu0 0
      %3531 = vmatpush1.bf16.xpose.msra.mxu0 0
      %3532 = vmatprep.subr.bf16.mxu0 0
      %3533 = vmatpush1.bf16.xpose.msra.mxu0 0
      %3534 = vmatprep.subr.bf16.mxu0 0
      %3535 = vmatpush1.bf16.xpose.msra.mxu0 0
      %3536 = vmatprep.subr.bf16.mxu0 0
      %3537 = vmatpush1.bf16.xpose.msra.mxu0 0
      %3538 = vmatprep.subr.bf16.mxu0 0
      %3539 = vmatpush1.bf16.xpose.msra.mxu0 0
      %3540 = vmatprep.subr.bf16.mxu0 0
      %3541 = vmatpush1.bf16.xpose.msra.mxu0 0
      %3542 = vmatprep.subr.bf16.mxu0 0
      %3543 = vmatpush1.bf16.xpose.msra.mxu0 0
      %3544 = vmatprep.subr.bf16.mxu0 0
      %3545 = vmatpush1.bf16.xpose.msra.mxu0 0
      %3546 = vmatprep.subr.bf16.mxu0 0
      %3547 = vmatpush1.bf16.xpose.msra.mxu0 0
      %3548 = vmatprep.mubr.bf16.mxu0 0
      %3549 = vmatmul.mubr.bf16.gmra.mrb[0].mxu0 %v3192
      %v3550 = vpop.f32.mrb[0].mxu0
      %v3551 = vadd.f32 0.0, %v3550
      %v3552 = vpop.f32.mrb[0].mxu0
      %v3553 = vpop.f32.mrb[0].mxu0
      %v3554 = vadd.f32 0.0, %v3553
      %v3555 = vpop.f32.mrb[0].mxu0
      %3556 = vmatprep.mubr.bf16.mxu0 0
      %3557 = vmatmul.mubr.bf16.gmra.mrb[0].mxu0 %v3196
      %v3558 = vpop.f32.mrb[0].mxu0
      %v3559 = vadd.f32 0.0, %v3558
      %v3560 = vpop.f32.mrb[0].mxu0
      %v3561 = vpop.f32.mrb[0].mxu0
      %v3562 = vadd.f32 0.0, %v3561
      %v3563 = vpop.f32.mrb[0].mxu0
      %3564 = vdwg.mxu0
      %v3565 = vsel %vm3249, %v3551, -inf
      %3566 = vmax.xlane.f32.xlu0 %v3565
      %v3567 = vpop.xlane.xlu0 %3566
      %v3568 = vsel %vm3249, %v3554, -inf
      %3569 = vmax.xlane.f32.xlu0 %v3568
      %v3570 = vpop.xlane.xlu0 %3569
      %v3571 = vsel %vm3249, %v3559, -inf
      %3572 = vmax.xlane.f32.xlu0 %v3571
      %v3573 = vpop.xlane.xlu0 %3572
      %v3574 = vsel %vm3249, %v3562, -inf
      %3575 = vmax.xlane.f32.xlu0 %v3574
      %v3576 = vpop.xlane.xlu0 %3575
      %v3577 = vsub.f32 %v3551, %v3567
      %v3578 = vsub.f32 %v3554, %v3570
      %v3579 = vsub.f32 %v3559, %v3573
      %v3580 = vsub.f32 %v3562, %v3576
      %v3581 = vmul.f32 %v3577, 1.442695
      %v3582 = vpow.pop %v3581
      %v3583 = vmul.f32 %v3578, 1.442695
      %v3584 = vpow.pop %v3583
      %v3585 = vmul.f32 %v3579, 1.442695
      %v3586 = vpow.pop %v3585
      %v3587 = vmul.f32 %v3580, 1.442695
      %v3588 = vpow.pop %v3587
      %v3589 = vsel %vm3249, %v3582, 0.0
      %3590 = vadd.xlane.f32.xlu0 %v3589
      %v3591 = vpop.xlane.xlu0 %3590
      %v3592 = vsel %vm3249, %v3584, 0.0
      %3593 = vadd.xlane.f32.xlu0 %v3592
      %v3594 = vpop.xlane.xlu0 %3593
      %v3595 = vsel %vm3249, %v3586, 0.0
      %3596 = vadd.xlane.f32.xlu0 %v3595
      %v3597 = vpop.xlane.xlu0 %3596
      %v3598 = vsel %vm3249, %v3588, 0.0
      %3599 = vadd.xlane.f32.xlu0 %v3598
      %v3600 = vpop.xlane.xlu0 %3599
      %v3601 = vrcp.pop %v3591
      %v3602 = vrcp.pop %v3594
      %v3603 = vrcp.pop %v3597
      %v3604 = vrcp.pop %v3600
      %v3605 = vmul.f32 %v3582, %v3601
      %v3606 = vmul.f32 %v3584, %v3602
      %v3607 = vmul.f32 %v3586, %v3603
      %v3608 = vmul.f32 %v3588, %v3604
      %v3609 = vpack.c.bf16 %v3606, %v3605
      %v3610 = vpack.c.bf16 %v3608, %v3607
      %v3612 = vsel %vm3249, %v3609, 0
      %v3615 = vsel %vm3249, %v3610, 0
      %v3618 = vsel %vm3302, %v3515, 0
      %3620 = vmatprep.subr.bf16.mxu0 0
      %3621 = vmatpush1.bf16.msra.mxu0 %v3618
      %3622 = vmatprep.subr.bf16.mxu0 0
      %3623 = vmatpush1.bf16.msra.mxu0 0
      %3624 = vmatprep.subr.bf16.mxu0 0
      %3625 = vmatpush1.bf16.msra.mxu0 0
      %3626 = vmatprep.subr.bf16.mxu0 0
      %3627 = vmatpush1.bf16.msra.mxu0 0
      %3628 = vmatprep.subr.bf16.mxu0 0
      %3629 = vmatpush1.bf16.msra.mxu0 0
      %3630 = vmatprep.subr.bf16.mxu0 0
      %3631 = vmatpush1.bf16.msra.mxu0 0
      %3632 = vmatprep.subr.bf16.mxu0 0
      %3633 = vmatpush1.bf16.msra.mxu0 0
      %3634 = vmatprep.subr.bf16.mxu0 0
      %3635 = vmatpush1.bf16.msra.mxu0 0
      %3636 = vmatprep.subr.bf16.mxu0 0
      %3637 = vmatpush1.bf16.msra.mxu0 0
      %3638 = vmatprep.subr.bf16.mxu0 0
      %3639 = vmatpush1.bf16.msra.mxu0 0
      %3640 = vmatprep.subr.bf16.mxu0 0
      %3641 = vmatpush1.bf16.msra.mxu0 0
      %3642 = vmatprep.subr.bf16.mxu0 0
      %3643 = vmatpush1.bf16.msra.mxu0 0
      %3644 = vmatprep.subr.bf16.mxu0 0
      %3645 = vmatpush1.bf16.msra.mxu0 0
      %3646 = vmatprep.subr.bf16.mxu0 0
      %3647 = vmatpush1.bf16.msra.mxu0 0
      %3648 = vmatprep.subr.bf16.mxu0 0
      %3649 = vmatpush1.bf16.msra.mxu0 0
      %3650 = vmatprep.subr.bf16.mxu0 0
      %3651 = vmatpush1.bf16.msra.mxu0 0
      %3652 = vmatprep.mubr.bf16.mxu0 0
      %3653 = vmatmul.mubr.bf16.gmra.mrb[0].mxu0 %v3612
      %v3654 = vpop.f32.mrb[0].mxu0
      %v3655 = vadd.f32 0.0, %v3654
      %v3656 = vpop.f32.mrb[0].mxu0
      %v3657 = vpop.f32.mrb[0].mxu0
      %v3658 = vadd.f32 0.0, %v3657
      %v3659 = vpop.f32.mrb[0].mxu0
      %3660 = vmatprep.mubr.bf16.mxu0 0
      %3661 = vmatmul.mubr.bf16.gmra.mrb[0].mxu0 %v3615
      %v3662 = vpop.f32.mrb[0].mxu0
      %v3663 = vadd.f32 0.0, %v3662
      %v3664 = vpop.f32.mrb[0].mxu0
      %v3665 = vpop.f32.mrb[0].mxu0
      %v3666 = vadd.f32 0.0, %v3665
      %v3667 = vpop.f32.mrb[0].mxu0
      %3668 = vdwg.mxu0
      %v3669 = vpack.c.bf16 %v3658, %v3655
      %v3670 = vpack.c.bf16 %v3666, %v3663
      %v3671 = vld [vmem:[#allocation4 + $0xc] sm:$0xf]
      %v3672 = vld [vmem:[#allocation5 + $0xc] sm:$0xf]
      %3673 = vmatprep.subr.bf16.mxu0 0
      %3674 = vmatpush1.bf16.xpose.msra.mxu0 %v3671
      %3675 = vmatprep.subr.bf16.mxu0 0
      %3676 = vmatpush1.bf16.xpose.msra.mxu0 0
      %3677 = vmatprep.subr.bf16.mxu0 0
      %3678 = vmatpush1.bf16.xpose.msra.mxu0 0
      %3679 = vmatprep.subr.bf16.mxu0 0
      %3680 = vmatpush1.bf16.xpose.msra.mxu0 0
      %3681 = vmatprep.subr.bf16.mxu0 0
      %3682 = vmatpush1.bf16.xpose.msra.mxu0 0
      %3683 = vmatprep.subr.bf16.mxu0 0
      %3684 = vmatpush1.bf16.xpose.msra.mxu0 0
      %3685 = vmatprep.subr.bf16.mxu0 0
      %3686 = vmatpush1.bf16.xpose.msra.mxu0 0
      %3687 = vmatprep.subr.bf16.mxu0 0
      %3688 = vmatpush1.bf16.xpose.msra.mxu0 0
      %3689 = vmatprep.subr.bf16.mxu0 0
      %3690 = vmatpush1.bf16.xpose.msra.mxu0 0
      %3691 = vmatprep.subr.bf16.mxu0 0
      %3692 = vmatpush1.bf16.xpose.msra.mxu0 0
      %3693 = vmatprep.subr.bf16.mxu0 0
      %3694 = vmatpush1.bf16.xpose.msra.mxu0 0
      %3695 = vmatprep.subr.bf16.mxu0 0
      %3696 = vmatpush1.bf16.xpose.msra.mxu0 0
      %3697 = vmatprep.subr.bf16.mxu0 0
      %3698 = vmatpush1.bf16.xpose.msra.mxu0 0
      %3699 = vmatprep.subr.bf16.mxu0 0
      %3700 = vmatpush1.bf16.xpose.msra.mxu0 0
      %3701 = vmatprep.subr.bf16.mxu0 0
      %3702 = vmatpush1.bf16.xpose.msra.mxu0 0
      %3703 = vmatprep.subr.bf16.mxu0 0
      %3704 = vmatpush1.bf16.xpose.msra.mxu0 0
      %3705 = vmatprep.mubr.bf16.mxu0 0
      %3706 = vmatmul.mubr.bf16.gmra.mrb[0].mxu0 %v3193
      %v3707 = vpop.f32.mrb[0].mxu0
      %v3708 = vadd.f32 0.0, %v3707
      %v3709 = vpop.f32.mrb[0].mxu0
      %v3710 = vpop.f32.mrb[0].mxu0
      %v3711 = vadd.f32 0.0, %v3710
      %v3712 = vpop.f32.mrb[0].mxu0
      %3713 = vmatprep.mubr.bf16.mxu0 0
      %3714 = vmatmul.mubr.bf16.gmra.mrb[0].mxu0 %v3197
      %v3715 = vpop.f32.mrb[0].mxu0
      %v3716 = vadd.f32 0.0, %v3715
      %v3717 = vpop.f32.mrb[0].mxu0
      %v3718 = vpop.f32.mrb[0].mxu0
      %v3719 = vadd.f32 0.0, %v3718
      %v3720 = vpop.f32.mrb[0].mxu0
      %3721 = vdwg.mxu0
      %v3722 = vsel %vm3249, %v3708, -inf
      %3723 = vmax.xlane.f32.xlu0 %v3722
      %v3724 = vpop.xlane.xlu0 %3723
      %v3725 = vsel %vm3249, %v3711, -inf
      %3726 = vmax.xlane.f32.xlu0 %v3725
      %v3727 = vpop.xlane.xlu0 %3726
      %v3728 = vsel %vm3249, %v3716, -inf
      %3729 = vmax.xlane.f32.xlu0 %v3728
      %v3730 = vpop.xlane.xlu0 %3729
      %v3731 = vsel %vm3249, %v3719, -inf
      %3732 = vmax.xlane.f32.xlu0 %v3731
      %v3733 = vpop.xlane.xlu0 %3732
      %v3734 = vsub.f32 %v3708, %v3724
      %v3735 = vsub.f32 %v3711, %v3727
      %v3736 = vsub.f32 %v3716, %v3730
      %v3737 = vsub.f32 %v3719, %v3733
      %v3738 = vmul.f32 %v3734, 1.442695
      %v3739 = vpow.pop %v3738
      %v3740 = vmul.f32 %v3735, 1.442695
      %v3741 = vpow.pop %v3740
      %v3742 = vmul.f32 %v3736, 1.442695
      %v3743 = vpow.pop %v3742
      %v3744 = vmul.f32 %v3737, 1.442695
      %v3745 = vpow.pop %v3744
      %v3746 = vsel %vm3249, %v3739, 0.0
      %3747 = vadd.xlane.f32.xlu0 %v3746
      %v3748 = vpop.xlane.xlu0 %3747
      %v3749 = vsel %vm3249, %v3741, 0.0
      %3750 = vadd.xlane.f32.xlu0 %v3749
      %v3751 = vpop.xlane.xlu0 %3750
      %v3752 = vsel %vm3249, %v3743, 0.0
      %3753 = vadd.xlane.f32.xlu0 %v3752
      %v3754 = vpop.xlane.xlu0 %3753
      %v3755 = vsel %vm3249, %v3745, 0.0
      %3756 = vadd.xlane.f32.xlu0 %v3755
      %v3757 = vpop.xlane.xlu0 %3756
      %v3758 = vrcp.pop %v3748
      %v3759 = vrcp.pop %v3751
      %v3760 = vrcp.pop %v3754
      %v3761 = vrcp.pop %v3757
      %v3762 = vmul.f32 %v3739, %v3758
      %v3763 = vmul.f32 %v3741, %v3759
      %v3764 = vmul.f32 %v3743, %v3760
      %v3765 = vmul.f32 %v3745, %v3761
      %v3766 = vpack.c.bf16 %v3763, %v3762
      %v3767 = vpack.c.bf16 %v3765, %v3764
      %v3769 = vsel %vm3249, %v3766, 0
      %v3772 = vsel %vm3249, %v3767, 0
      %v3775 = vsel %vm3302, %v3672, 0
      %3777 = vmatprep.subr.bf16.mxu0 0
      %3778 = vmatpush1.bf16.msra.mxu0 %v3775
      %3779 = vmatprep.subr.bf16.mxu0 0
      %3780 = vmatpush1.bf16.msra.mxu0 0
      %3781 = vmatprep.subr.bf16.mxu0 0
      %3782 = vmatpush1.bf16.msra.mxu0 0
      %3783 = vmatprep.subr.bf16.mxu0 0
      %3784 = vmatpush1.bf16.msra.mxu0 0
      %3785 = vmatprep.subr.bf16.mxu0 0
      %3786 = vmatpush1.bf16.msra.mxu0 0
      %3787 = vmatprep.subr.bf16.mxu0 0
      %3788 = vmatpush1.bf16.msra.mxu0 0
      %3789 = vmatprep.subr.bf16.mxu0 0
      %3790 = vmatpush1.bf16.msra.mxu0 0
      %3791 = vmatprep.subr.bf16.mxu0 0
      %3792 = vmatpush1.bf16.msra.mxu0 0
      %3793 = vmatprep.subr.bf16.mxu0 0
      %3794 = vmatpush1.bf16.msra.mxu0 0
      %3795 = vmatprep.subr.bf16.mxu0 0
      %3796 = vmatpush1.bf16.msra.mxu0 0
      %3797 = vmatprep.subr.bf16.mxu0 0
      %3798 = vmatpush1.bf16.msra.mxu0 0
      %3799 = vmatprep.subr.bf16.mxu0 0
      %3800 = vmatpush1.bf16.msra.mxu0 0
      %3801 = vmatprep.subr.bf16.mxu0 0
      %3802 = vmatpush1.bf16.msra.mxu0 0
      %3803 = vmatprep.subr.bf16.mxu0 0
      %3804 = vmatpush1.bf16.msra.mxu0 0
      %3805 = vmatprep.subr.bf16.mxu0 0
      %3806 = vmatpush1.bf16.msra.mxu0 0
      %3807 = vmatprep.subr.bf16.mxu0 0
      %3808 = vmatpush1.bf16.msra.mxu0 0
      %3809 = vmatprep.mubr.bf16.mxu0 0
      %3810 = vmatmul.mubr.bf16.gmra.mrb[0].mxu0 %v3769
      %v3811 = vpop.f32.mrb[0].mxu0
      %v3812 = vadd.f32 0.0, %v3811
      %v3813 = vpop.f32.mrb[0].mxu0
      %v3814 = vpop.f32.mrb[0].mxu0
      %v3815 = vadd.f32 0.0, %v3814
      %v3816 = vpop.f32.mrb[0].mxu0
      %3817 = vmatprep.mubr.bf16.mxu0 0
      %3818 = vmatmul.mubr.bf16.gmra.mrb[0].mxu0 %v3772
      %v3819 = vpop.f32.mrb[0].mxu0
      %v3820 = vadd.f32 0.0, %v3819
      %v3821 = vpop.f32.mrb[0].mxu0
      %v3822 = vpop.f32.mrb[0].mxu0
      %v3823 = vadd.f32 0.0, %v3822
      %v3824 = vpop.f32.mrb[0].mxu0
      %3825 = vdwg.mxu0
      %v3826 = vpack.c.bf16 %v3815, %v3812
      %v3827 = vpack.c.bf16 %v3823, %v3820
      %v3828 = vld [vmem:[%s19] sm:$0xf]
      %v3829 = vld [vmem:[%s19 + $0x4] sm:$0xf]
      %v3830 = vld [vmem:[%s19 + $0x8] sm:$0xf]
      %v3831 = vld [vmem:[%s19 + $0xc] sm:$0xf]
      %v3832 = vld [vmem:[%s19 + $0x10] sm:$0xf]
      %v3833 = vld [vmem:[%s19 + $0x14] sm:$0xf]
      %v3834 = vld [vmem:[%s19 + $0x18] sm:$0xf]
      %v3835 = vld [vmem:[%s19 + $0x1c] sm:$0xf]
      %v3836 = vld [vmem:[%s19 + $0x20] sm:$0xf]
      %v3837 = vld [vmem:[%s19 + $0x24] sm:$0xf]
      %v3838 = vld [vmem:[%s19 + $0x28] sm:$0xf]
      %v3839 = vld [vmem:[%s19 + $0x2c] sm:$0xf]
      %v3840 = vld [vmem:[%s19 + $0x30] sm:$0xf]
      %v3841 = vld [vmem:[%s19 + $0x34] sm:$0xf]
      %v3842 = vld [vmem:[%s19 + $0x38] sm:$0xf]
      %v3843 = vld [vmem:[%s19 + $0x3c] sm:$0xf]
      %v3844 = vld [vmem:[%s19 + $0x40] sm:$0xf]
      %v3845 = vld [vmem:[%s19 + $0x44] sm:$0xf]
      %v3846 = vld [vmem:[%s19 + $0x48] sm:$0xf]
      %v3847 = vld [vmem:[%s19 + $0x4c] sm:$0xf]
      %v3848 = vld [vmem:[%s19 + $0x50] sm:$0xf]
      %v3849 = vld [vmem:[%s19 + $0x54] sm:$0xf]
      %v3850 = vld [vmem:[%s19 + $0x58] sm:$0xf]
      %v3851 = vld [vmem:[%s19 + $0x5c] sm:$0xf]
      %v3852 = vld [vmem:[%s19 + $0x60] sm:$0xf]
      %v3853 = vld [vmem:[%s19 + $0x64] sm:$0xf]
      %v3854 = vld [vmem:[%s19 + $0x68] sm:$0xf]
      %v3855 = vld [vmem:[%s19 + $0x6c] sm:$0xf]
      %v3856 = vld [vmem:[%s19 + $0x70] sm:$0xf]
      %v3857 = vld [vmem:[%s19 + $0x74] sm:$0xf]
      %v3858 = vld [vmem:[%s19 + $0x78] sm:$0xf]
      %v3859 = vld [vmem:[%s19 + $0x7c] sm:$0xf]
      %v3860 = vld [vmem:[%s19 + $0x80] sm:$0xf]
      %v3861 = vld [vmem:[%s19 + $0x84] sm:$0xf]
      %v3862 = vld [vmem:[%s19 + $0x88] sm:$0xf]
      %v3863 = vld [vmem:[%s19 + $0x8c] sm:$0xf]
      %v3864 = vld [vmem:[%s19 + $0x90] sm:$0xf]
      %v3865 = vld [vmem:[%s19 + $0x94] sm:$0xf]
      %v3866 = vld [vmem:[%s19 + $0x98] sm:$0xf]
      %v3867 = vld [vmem:[%s19 + $0x9c] sm:$0xf]
      %v3868 = vld [vmem:[%s19 + $0xa0] sm:$0xf]
      %v3869 = vld [vmem:[%s19 + $0xa4] sm:$0xf]
      %v3870 = vld [vmem:[%s19 + $0xa8] sm:$0xf]
      %v3871 = vld [vmem:[%s19 + $0xac] sm:$0xf]
      %v3872 = vld [vmem:[%s19 + $0xb0] sm:$0xf]
      %v3873 = vld [vmem:[%s19 + $0xb4] sm:$0xf]
      %v3874 = vld [vmem:[%s19 + $0xb8] sm:$0xf]
      %v3875 = vld [vmem:[%s19 + $0xbc] sm:$0xf]
      %v3876 = vld [vmem:[%s19 + $0xc0] sm:$0xf]
      %v3877 = vld [vmem:[%s19 + $0xc4] sm:$0xf]
      %v3878 = vld [vmem:[%s19 + $0xc8] sm:$0xf]
      %v3879 = vld [vmem:[%s19 + $0xcc] sm:$0xf]
      %v3880 = vld [vmem:[%s19 + $0xd0] sm:$0xf]
      %v3881 = vld [vmem:[%s19 + $0xd4] sm:$0xf]
      %v3882 = vld [vmem:[%s19 + $0xd8] sm:$0xf]
      %v3883 = vld [vmem:[%s19 + $0xdc] sm:$0xf]
      %v3884 = vld [vmem:[%s19 + $0xe0] sm:$0xf]
      %v3885 = vld [vmem:[%s19 + $0xe4] sm:$0xf]
      %v3886 = vld [vmem:[%s19 + $0xe8] sm:$0xf]
      %v3887 = vld [vmem:[%s19 + $0xec] sm:$0xf]
      %v3888 = vld [vmem:[%s19 + $0xf0] sm:$0xf]
      %v3889 = vld [vmem:[%s19 + $0xf4] sm:$0xf]
      %v3890 = vld [vmem:[%s19 + $0xf8] sm:$0xf]
      %v3891 = vld [vmem:[%s19 + $0xfc] sm:$0xf]
      %v3892 = vld [vmem:[%s20] sm:$0x1]
      %v3894 = vlaneseq
      %v3895 = vshrl.u32 %v3894, 7
      %v3896 = vsub.s32 0, %v3895
      %v3897 = vrot.slane %v3892, %v3896
      %v3963 = vunpack.c.l.b16 %v3828
      %v3964 = vunpack.c.l.b16 %v3829
      %v3965 = vunpack.c.l.b16 %v3830
      %v3966 = vunpack.c.l.b16 %v3831
      %v3967 = vunpack.c.l.b16 %v3832
      %v3968 = vunpack.c.l.b16 %v3833
      %v3969 = vunpack.c.l.b16 %v3834
      %v3970 = vunpack.c.l.b16 %v3835
      %v3971 = vunpack.c.l.b16 %v3836
      %v3972 = vunpack.c.l.b16 %v3837
      %v3973 = vunpack.c.l.b16 %v3838
      %v3974 = vunpack.c.l.b16 %v3839
      %v3975 = vunpack.c.l.b16 %v3840
      %v3976 = vunpack.c.l.b16 %v3841
      %v3977 = vunpack.c.l.b16 %v3842
      %v3978 = vunpack.c.l.b16 %v3843
      %v3979 = vunpack.c.l.b16 %v3844
      %v3980 = vunpack.c.l.b16 %v3845
      %v3981 = vunpack.c.l.b16 %v3846
      %v3982 = vunpack.c.l.b16 %v3847
      %v3983 = vunpack.c.l.b16 %v3848
      %v3984 = vunpack.c.l.b16 %v3849
      %v3985 = vunpack.c.l.b16 %v3850
      %v3986 = vunpack.c.l.b16 %v3851
      %v3987 = vunpack.c.l.b16 %v3852
      %v3988 = vunpack.c.l.b16 %v3853
      %v3989 = vunpack.c.l.b16 %v3854
      %v3990 = vunpack.c.l.b16 %v3855
      %v3991 = vunpack.c.l.b16 %v3856
      %v3992 = vunpack.c.l.b16 %v3857
      %v3993 = vunpack.c.l.b16 %v3858
      %v3994 = vunpack.c.l.b16 %v3859
      %v3995 = vunpack.c.l.b16 %v3860
      %v3996 = vunpack.c.l.b16 %v3861
      %v3997 = vunpack.c.l.b16 %v3862
      %v3998 = vunpack.c.l.b16 %v3863
      %v3999 = vunpack.c.l.b16 %v3864
      %v4000 = vunpack.c.l.b16 %v3865
      %v4001 = vunpack.c.l.b16 %v3866
      %v4002 = vunpack.c.l.b16 %v3867
      %v4003 = vunpack.c.l.b16 %v3868
      %v4004 = vunpack.c.l.b16 %v3869
      %v4005 = vunpack.c.l.b16 %v3870
      %v4006 = vunpack.c.l.b16 %v3871
      %v4007 = vunpack.c.l.b16 %v3872
      %v4008 = vunpack.c.l.b16 %v3873
      %v4009 = vunpack.c.l.b16 %v3874
      %v4010 = vunpack.c.l.b16 %v3875
      %v4011 = vunpack.c.l.b16 %v3876
      %v4012 = vunpack.c.l.b16 %v3877
      %v4013 = vunpack.c.l.b16 %v3878
      %v4014 = vunpack.c.l.b16 %v3879
      %v4015 = vunpack.c.l.b16 %v3880
      %v4016 = vunpack.c.l.b16 %v3881
      %v4017 = vunpack.c.l.b16 %v3882
      %v4018 = vunpack.c.l.b16 %v3883
      %v4019 = vunpack.c.l.b16 %v3884
      %v4020 = vunpack.c.l.b16 %v3885
      %v4021 = vunpack.c.l.b16 %v3886
      %v4022 = vunpack.c.l.b16 %v3887
      %v4023 = vunpack.c.l.b16 %v3888
      %v4024 = vunpack.c.l.b16 %v3889
      %v4025 = vunpack.c.l.b16 %v3890
      %v4026 = vunpack.c.l.b16 %v3891
      %v4027 = vpack.c.b16 %v3964, %v3963
      %v4028 = vpack.c.b16 %v3966, %v3965
      %v4029 = vpack.c.b16 %v3968, %v3967
      %v4030 = vpack.c.b16 %v3970, %v3969
      %v4031 = vpack.c.b16 %v3972, %v3971
      %v4032 = vpack.c.b16 %v3974, %v3973
      %v4033 = vpack.c.b16 %v3976, %v3975
      %v4034 = vpack.c.b16 %v3978, %v3977
      %v4035 = vpack.c.b16 %v3980, %v3979
      %v4036 = vpack.c.b16 %v3982, %v3981
      %v4037 = vpack.c.b16 %v3984, %v3983
      %v4038 = vpack.c.b16 %v3986, %v3985
      %v4039 = vpack.c.b16 %v3988, %v3987
      %v4040 = vpack.c.b16 %v3990, %v3989
      %v4041 = vpack.c.b16 %v3992, %v3991
      %v4042 = vpack.c.b16 %v3994, %v3993
      %v4043 = vpack.c.b16 %v3996, %v3995
      %v4044 = vpack.c.b16 %v3998, %v3997
      %v4045 = vpack.c.b16 %v4000, %v3999
      %v4046 = vpack.c.b16 %v4002, %v4001
      %v4047 = vpack.c.b16 %v4004, %v4003
      %v4048 = vpack.c.b16 %v4006, %v4005
      %v4049 = vpack.c.b16 %v4008, %v4007
      %v4050 = vpack.c.b16 %v4010, %v4009
      %v4051 = vpack.c.b16 %v4012, %v4011
      %v4052 = vpack.c.b16 %v4014, %v4013
      %v4053 = vpack.c.b16 %v4016, %v4015
      %v4054 = vpack.c.b16 %v4018, %v4017
      %v4055 = vpack.c.b16 %v4020, %v4019
      %v4056 = vpack.c.b16 %v4022, %v4021
      %v4057 = vpack.c.b16 %v4024, %v4023
      %v4058 = vpack.c.b16 %v4026, %v4025
      %4091 = vmatprep.subr.bf16.mxu0 0
      %4092 = vmatpush1.bf16.msra.mxu0 %v4027
      %4093 = vmatprep.subr.bf16.mxu0 0
      %4094 = vmatpush1.bf16.msra.mxu0 %v4028
      %4095 = vmatprep.subr.bf16.mxu0 0
      %4096 = vmatpush1.bf16.msra.mxu0 %v4029
      %4097 = vmatprep.subr.bf16.mxu0 0
      %4098 = vmatpush1.bf16.msra.mxu0 %v4030
      %4099 = vmatprep.subr.bf16.mxu0 0
      %4100 = vmatpush1.bf16.msra.mxu0 %v4031
      %4101 = vmatprep.subr.bf16.mxu0 0
      %4102 = vmatpush1.bf16.msra.mxu0 %v4032
      %4103 = vmatprep.subr.bf16.mxu0 0
      %4104 = vmatpush1.bf16.msra.mxu0 %v4033
      %4105 = vmatprep.subr.bf16.mxu0 0
      %4106 = vmatpush1.bf16.msra.mxu0 %v4034
      %4107 = vmatprep.subr.bf16.mxu0 0
      %4108 = vmatpush1.bf16.msra.mxu0 %v4035
      %4109 = vmatprep.subr.bf16.mxu0 0
      %4110 = vmatpush1.bf16.msra.mxu0 %v4036
      %4111 = vmatprep.subr.bf16.mxu0 0
      %4112 = vmatpush1.bf16.msra.mxu0 %v4037
      %4113 = vmatprep.subr.bf16.mxu0 0
      %4114 = vmatpush1.bf16.msra.mxu0 %v4038
      %4115 = vmatprep.subr.bf16.mxu0 0
      %4116 = vmatpush1.bf16.msra.mxu0 %v4039
      %4117 = vmatprep.subr.bf16.mxu0 0
      %4118 = vmatpush1.bf16.msra.mxu0 %v4040
      %4119 = vmatprep.subr.bf16.mxu0 0
      %4120 = vmatpush1.bf16.msra.mxu0 %v4041
      %4121 = vmatprep.subr.bf16.mxu0 0
      %4122 = vmatpush1.bf16.msra.mxu0 %v4042
      %4123 = vmatprep.mubr.bf16.mxu0 %v3512
      %4124 = vmatmul.mubr.bf16.gmra.mrb[0].mxu0 %v3355
      %v4125 = vpop.f32.mrb[0].mxu0
      %v4126 = vadd.f32 %v3897, %v4125
      %v4127 = vpop.f32.mrb[0].mxu0
      %v4128 = vpop.f32.mrb[0].mxu0
      %v4129 = vadd.f32 %v3897, %v4128
      %v4130 = vpop.f32.mrb[0].mxu0
      %4131 = vmatprep.mubr.bf16.mxu0 %v3513
      %4132 = vmatmul.mubr.bf16.gmra.mrb[0].mxu0 %v3356
      %v4133 = vpop.f32.mrb[0].mxu0
      %v4134 = vadd.f32 %v3897, %v4133
      %v4135 = vpop.f32.mrb[0].mxu0
      %v4136 = vpop.f32.mrb[0].mxu0
      %v4137 = vadd.f32 %v3897, %v4136
      %v4138 = vpop.f32.mrb[0].mxu0
      %4139 = vdwg.mxu0
      %4140 = vmatprep.subr.bf16.mxu0 0
      %4141 = vmatpush1.bf16.msra.mxu0 %v4043
      %4142 = vmatprep.subr.bf16.mxu0 0
      %4143 = vmatpush1.bf16.msra.mxu0 %v4044
      %4144 = vmatprep.subr.bf16.mxu0 0
      %4145 = vmatpush1.bf16.msra.mxu0 %v4045
      %4146 = vmatprep.subr.bf16.mxu0 0
      %4147 = vmatpush1.bf16.msra.mxu0 %v4046
      %4148 = vmatprep.subr.bf16.mxu0 0
      %4149 = vmatpush1.bf16.msra.mxu0 %v4047
      %4150 = vmatprep.subr.bf16.mxu0 0
      %4151 = vmatpush1.bf16.msra.mxu0 %v4048
      %4152 = vmatprep.subr.bf16.mxu0 0
      %4153 = vmatpush1.bf16.msra.mxu0 %v4049
      %4154 = vmatprep.subr.bf16.mxu0 0
      %4155 = vmatpush1.bf16.msra.mxu0 %v4050
      %4156 = vmatprep.subr.bf16.mxu0 0
      %4157 = vmatpush1.bf16.msra.mxu0 %v4051
      %4158 = vmatprep.subr.bf16.mxu0 0
      %4159 = vmatpush1.bf16.msra.mxu0 %v4052
      %4160 = vmatprep.subr.bf16.mxu0 0
      %4161 = vmatpush1.bf16.msra.mxu0 %v4053
      %4162 = vmatprep.subr.bf16.mxu0 0
      %4163 = vmatpush1.bf16.msra.mxu0 %v4054
      %4164 = vmatprep.subr.bf16.mxu0 0
      %4165 = vmatpush1.bf16.msra.mxu0 %v4055
      %4166 = vmatprep.subr.bf16.mxu0 0
      %4167 = vmatpush1.bf16.msra.mxu0 %v4056
      %4168 = vmatprep.subr.bf16.mxu0 0
      %4169 = vmatpush1.bf16.msra.mxu0 %v4057
      %4170 = vmatprep.subr.bf16.mxu0 0
      %4171 = vmatpush1.bf16.msra.mxu0 %v4058
      %4172 = vmatprep.mubr.bf16.mxu0 %v3826
      %4173 = vmatmul.mubr.bf16.gmra.mrb[0].mxu0 %v3669
      %v4174 = vpop.f32.mrb[0].mxu0
      %v4175 = vadd.f32 %v4126, %v4174
      %v4176 = vpop.f32.mrb[0].mxu0
      %v4177 = vpop.f32.mrb[0].mxu0
      %v4178 = vadd.f32 %v4129, %v4177
      %v4179 = vpop.f32.mrb[0].mxu0
      %4180 = vmatprep.mubr.bf16.mxu0 %v3827
      %4181 = vmatmul.mubr.bf16.gmra.mrb[0].mxu0 %v3670
      %v4182 = vpop.f32.mrb[0].mxu0
      %v4183 = vadd.f32 %v4134, %v4182
      %v4184 = vpop.f32.mrb[0].mxu0
      %v4185 = vpop.f32.mrb[0].mxu0
      %v4186 = vadd.f32 %v4137, %v4185
      %v4187 = vpop.f32.mrb[0].mxu0
      %4188 = vdwg.mxu0
      %v4189 = vadd.f32 %v2986, %v4175
      %v4190 = vadd.f32 %v2987, %v4178
      %v4191 = vadd.f32 %v2988, %v4183
      %v4192 = vadd.f32 %v2989, %v4186
      %v4193 = vsel %vm1697, %v4189, 0.0
      %4194 = vadd.xlane.f32.xlu0 %v4193
      %v4195 = vpop.xlane.xlu0 %4194
      %v4196 = vsel %vm1697, %v4190, 0.0
      %4197 = vadd.xlane.f32.xlu0 %v4196
      %v4198 = vpop.xlane.xlu0 %4197
      %v4199 = vsel %vm1697, %v4191, 0.0
      %4200 = vadd.xlane.f32.xlu0 %v4199
      %v4201 = vpop.xlane.xlu0 %4200
      %v4202 = vsel %vm1697, %v4192, 0.0
      %4203 = vadd.xlane.f32.xlu0 %v4202
      %v4204 = vpop.xlane.xlu0 %4203
      %v4205 = vmul.f32 %v4195, %v1710
      %v4206 = vmul.f32 %v4198, %v1710
      %v4207 = vmul.f32 %v4201, %v1710
      %v4208 = vmul.f32 %v4204, %v1710
      %v4209 = vsub.f32 %v4189, %v4205
      %v4210 = vsub.f32 %v4190, %v4206
      %v4211 = vsub.f32 %v4191, %v4207
      %v4212 = vsub.f32 %v4192, %v4208
      %v4213 = vmul.f32 %v4209, %v4209
      %v4214 = vmul.f32 %v4210, %v4210
      %v4215 = vmul.f32 %v4211, %v4211
      %v4216 = vmul.f32 %v4212, %v4212
      %v4217 = vsel %vm1697, %v4213, 0.0
      %4218 = vadd.xlane.f32.xlu0 %v4217
      %v4219 = vpop.xlane.xlu0 %4218
      %v4220 = vsel %vm1697, %v4214, 0.0
      %4221 = vadd.xlane.f32.xlu0 %v4220
      %v4222 = vpop.xlane.xlu0 %4221
      %v4223 = vsel %vm1697, %v4215, 0.0
      %4224 = vadd.xlane.f32.xlu0 %v4223
      %v4225 = vpop.xlane.xlu0 %4224
      %v4226 = vsel %vm1697, %v4216, 0.0
      %4227 = vadd.xlane.f32.xlu0 %v4226
      %v4228 = vpop.xlane.xlu0 %4227
      %v4229 = vmul.f32 %v4219, %v1710
      %v4230 = vmul.f32 %v4222, %v1710
      %v4231 = vmul.f32 %v4225, %v1710
      %v4232 = vmul.f32 %v4228, %v1710
      %v4233 = vadd.f32 %v4229, 1e-06
      %v4234 = vadd.f32 %v4230, 1e-06
      %v4235 = vadd.f32 %v4231, 1e-06
      %v4236 = vadd.f32 %v4232, 1e-06
      %v4237 = vrsqrt.pop %v4233
      %v4238 = vrsqrt.pop %v4234
      %v4239 = vrsqrt.pop %v4235
      %v4240 = vrsqrt.pop %v4236
      %v4241 = vmul.f32 %v4209, %v4237
      %v4242 = vmul.f32 %v4210, %v4238
      %v4243 = vmul.f32 %v4211, %v4239
      %v4244 = vmul.f32 %v4212, %v4240
      %v4245 = vlaneseq
      %v4246 = vshrl.u32 %v4245, 7
      %v4247 = vsub.s32 4, %v4246
      %v4248 = vrot.slane %v1751, %v4247
      %v4249 = vmul.f32 %v4241, %v4248
      %v4250 = vmul.f32 %v4242, %v4248
      %v4251 = vmul.f32 %v4243, %v4248
      %v4252 = vmul.f32 %v4244, %v4248
      %v4253 = vlaneseq
      %v4254 = vshrl.u32 %v4253, 7
      %v4255 = vsub.s32 3, %v4254
      %v4256 = vrot.slane %v861, %v4255
      %v4257 = vadd.f32 %v4249, %v4256
      %v4258 = vadd.f32 %v4250, %v4256
      %v4259 = vadd.f32 %v4251, %v4256
      %v4260 = vadd.f32 %v4252, %v4256
      %v4261 = vpack.c.bf16 %v4258, %v4257
      %v4262 = vpack.c.bf16 %v4260, %v4259
      %v4263 = vld [vmem:[%s21] sm:$0xf]
      %v4264 = vld [vmem:[%s21 + $0x4] sm:$0xf]
      %v4265 = vld [vmem:[%s21 + $0x8] sm:$0xf]
      %v4266 = vld [vmem:[%s21 + $0xc] sm:$0xf]
      %v4267 = vld [vmem:[%s22] sm:$0x1]
      %v4269 = vlaneseq
      %v4270 = vshrl.u32 %v4269, 7
      %v4271 = vsub.s32 0, %v4270
      %v4272 = vrot.slane %v4267, %v4271
      %v4278 = vunpack.c.l.b16 %v4263
      %v4279 = vunpack.c.l.b16 %v4264
      %v4280 = vunpack.c.l.b16 %v4265
      %v4281 = vunpack.c.l.b16 %v4266
      %v4282 = vpack.c.b16 %v4279, %v4278
      %v4283 = vpack.c.b16 %v4281, %v4280
      %v4287 = vsel %vm1697, %v4261, 0
      %v4290 = vsel %vm1697, %v4262, 0
      %4292 = vmatprep.subr.bf16.mxu0 0
      %4293 = vmatpush1.bf16.msra.mxu0 %v4282
      %4294 = vmatprep.subr.bf16.mxu0 0
      %4295 = vmatpush1.bf16.msra.mxu0 %v4283
      %4296 = vmatprep.subr.bf16.mxu0 0
      %4297 = vmatpush1.bf16.msra.mxu0 0
      %4298 = vmatprep.subr.bf16.mxu0 0
      %4299 = vmatpush1.bf16.msra.mxu0 0
      %4300 = vmatprep.subr.bf16.mxu0 0
      %4301 = vmatpush1.bf16.msra.mxu0 0
      %4302 = vmatprep.subr.bf16.mxu0 0
      %4303 = vmatpush1.bf16.msra.mxu0 0
      %4304 = vmatprep.subr.bf16.mxu0 0
      %4305 = vmatpush1.bf16.msra.mxu0 0
      %4306 = vmatprep.subr.bf16.mxu0 0
      %4307 = vmatpush1.bf16.msra.mxu0 0
      %4308 = vmatprep.subr.bf16.mxu0 0
      %4309 = vmatpush1.bf16.msra.mxu0 0
      %4310 = vmatprep.subr.bf16.mxu0 0
      %4311 = vmatpush1.bf16.msra.mxu0 0
      %4312 = vmatprep.subr.bf16.mxu0 0
      %4313 = vmatpush1.bf16.msra.mxu0 0
      %4314 = vmatprep.subr.bf16.mxu0 0
      %4315 = vmatpush1.bf16.msra.mxu0 0
      %4316 = vmatprep.subr.bf16.mxu0 0
      %4317 = vmatpush1.bf16.msra.mxu0 0
      %4318 = vmatprep.subr.bf16.mxu0 0
      %4319 = vmatpush1.bf16.msra.mxu0 0
      %4320 = vmatprep.subr.bf16.mxu0 0
      %4321 = vmatpush1.bf16.msra.mxu0 0
      %4322 = vmatprep.subr.bf16.mxu0 0
      %4323 = vmatpush1.bf16.msra.mxu0 0
      %4324 = vmatprep.mubr.bf16.mxu0 0
      %4325 = vmatmul.mubr.bf16.gmra.mrb[0].mxu0 %v4287
      %v4326 = vpop.f32.mrb[0].mxu0
      %v4327 = vadd.f32 %v4272, %v4326
      %v4328 = vpop.f32.mrb[0].mxu0
      %v4329 = vpop.f32.mrb[0].mxu0
      %v4330 = vadd.f32 %v4272, %v4329
      %v4331 = vpop.f32.mrb[0].mxu0
      %4332 = vmatprep.mubr.bf16.mxu0 0
      %4333 = vmatmul.mubr.bf16.gmra.mrb[0].mxu0 %v4290
      %v4334 = vpop.f32.mrb[0].mxu0
      %v4335 = vadd.f32 %v4272, %v4334
      %v4336 = vpop.f32.mrb[0].mxu0
      %v4337 = vpop.f32.mrb[0].mxu0
      %v4338 = vadd.f32 %v4272, %v4337
      %v4339 = vpop.f32.mrb[0].mxu0
      %4340 = vdwg.mxu0
      %v4341 = vmul.f32 %v4327, 0.5
      %v4342 = vmul.f32 %v4330, 0.5
      %v4343 = vmul.f32 %v4335, 0.5
      %v4344 = vmul.f32 %v4338, 0.5
      %v4345 = vmul.f32 %v4327, 0.044715
      %v4346 = vmul.f32 %v4330, 0.044715
      %v4347 = vmul.f32 %v4335, 0.044715
      %v4348 = vmul.f32 %v4338, 0.044715
      %v4349 = vmul.f32 %v4345, %v4327
      %v4350 = vmul.f32 %v4346, %v4330
      %v4351 = vmul.f32 %v4347, %v4335
      %v4352 = vmul.f32 %v4348, %v4338
      %v4353 = vmul.f32 %v4349, %v4327
      %v4354 = vmul.f32 %v4350, %v4330
      %v4355 = vmul.f32 %v4351, %v4335
      %v4356 = vmul.f32 %v4352, %v4338
      %v4357 = vadd.f32 %v4327, %v4353
      %v4358 = vadd.f32 %v4330, %v4354
      %v4359 = vadd.f32 %v4335, %v4355
      %v4360 = vadd.f32 %v4338, %v4356
      %v4361 = vmul.f32 %v4357, 0.7978846
      %v4362 = vmul.f32 %v4358, 0.7978846
      %v4363 = vmul.f32 %v4359, 0.7978846
      %v4364 = vmul.f32 %v4360, 0.7978846
      %v4365 = vtanh.pop %v4361
      %v4366 = vtanh.pop %v4362
      %v4367 = vtanh.pop %v4363
      %v4368 = vtanh.pop %v4364
      %v4369 = vadd.f32 %v4365, 1.0
      %v4370 = vadd.f32 %v4366, 1.0
      %v4371 = vadd.f32 %v4367, 1.0
      %v4372 = vadd.f32 %v4368, 1.0
      %v4373 = vmul.f32 %v4341, %v4369
      %v4374 = vmul.f32 %v4342, %v4370
      %v4375 = vmul.f32 %v4343, %v4371
      %v4376 = vmul.f32 %v4344, %v4372
      %v4377 = vpack.c.bf16 %v4374, %v4373
      %v4378 = vpack.c.bf16 %v4376, %v4375
      %v4379 = vld [vmem:[%s23] sm:$0xf]
      %v4380 = vld [vmem:[%s23 + $0x4] sm:$0xf]
      %v4381 = vld [vmem:[%s23 + $0x8] sm:$0xf]
      %v4382 = vld [vmem:[%s23 + $0xc] sm:$0xf]
      %v4383 = vld [vmem:[%s23 + $0x10] sm:$0xf]
      %v4384 = vld [vmem:[%s23 + $0x14] sm:$0xf]
      %v4385 = vld [vmem:[%s23 + $0x18] sm:$0xf]
      %v4386 = vld [vmem:[%s23 + $0x1c] sm:$0xf]
      %v4387 = vld [vmem:[%s23 + $0x20] sm:$0xf]
      %v4388 = vld [vmem:[%s23 + $0x24] sm:$0xf]
      %v4389 = vld [vmem:[%s23 + $0x28] sm:$0xf]
      %v4390 = vld [vmem:[%s23 + $0x2c] sm:$0xf]
      %v4391 = vld [vmem:[%s23 + $0x30] sm:$0xf]
      %v4392 = vld [vmem:[%s23 + $0x34] sm:$0xf]
      %v4393 = vld [vmem:[%s23 + $0x38] sm:$0xf]
      %v4394 = vld [vmem:[%s23 + $0x3c] sm:$0xf]
      %v4395 = vld [vmem:[%s24] sm:$0x1]
      %v4397 = vlaneseq
      %v4398 = vshrl.u32 %v4397, 7
      %v4399 = vsub.s32 0, %v4398
      %v4400 = vrot.slane %v4395, %v4399
      %v4418 = vunpack.c.l.b16 %v4379
      %v4419 = vunpack.c.l.b16 %v4380
      %v4420 = vunpack.c.l.b16 %v4381
      %v4421 = vunpack.c.l.b16 %v4382
      %v4422 = vunpack.c.l.b16 %v4383
      %v4423 = vunpack.c.l.b16 %v4384
      %v4424 = vunpack.c.l.b16 %v4385
      %v4425 = vunpack.c.l.b16 %v4386
      %v4426 = vunpack.c.l.b16 %v4387
      %v4427 = vunpack.c.l.b16 %v4388
      %v4428 = vunpack.c.l.b16 %v4389
      %v4429 = vunpack.c.l.b16 %v4390
      %v4430 = vunpack.c.l.b16 %v4391
      %v4431 = vunpack.c.l.b16 %v4392
      %v4432 = vunpack.c.l.b16 %v4393
      %v4433 = vunpack.c.l.b16 %v4394
      %v4434 = vpack.c.b16 %v4419, %v4418
      %v4435 = vpack.c.b16 %v4421, %v4420
      %v4436 = vpack.c.b16 %v4423, %v4422
      %v4437 = vpack.c.b16 %v4425, %v4424
      %v4438 = vpack.c.b16 %v4427, %v4426
      %v4439 = vpack.c.b16 %v4429, %v4428
      %v4440 = vpack.c.b16 %v4431, %v4430
      %v4441 = vpack.c.b16 %v4433, %v4432
      %4450 = vmatprep.subr.bf16.mxu0 0
      %4451 = vmatpush1.bf16.msra.mxu0 %v4434
      %4452 = vmatprep.subr.bf16.mxu0 0
      %4453 = vmatpush1.bf16.msra.mxu0 %v4435
      %4454 = vmatprep.subr.bf16.mxu0 0
      %4455 = vmatpush1.bf16.msra.mxu0 %v4436
      %4456 = vmatprep.subr.bf16.mxu0 0
      %4457 = vmatpush1.bf16.msra.mxu0 %v4437
      %4458 = vmatprep.subr.bf16.mxu0 0
      %4459 = vmatpush1.bf16.msra.mxu0 %v4438
      %4460 = vmatprep.subr.bf16.mxu0 0
      %4461 = vmatpush1.bf16.msra.mxu0 %v4439
      %4462 = vmatprep.subr.bf16.mxu0 0
      %4463 = vmatpush1.bf16.msra.mxu0 %v4440
      %4464 = vmatprep.subr.bf16.mxu0 0
      %4465 = vmatpush1.bf16.msra.mxu0 %v4441
      %4466 = vmatprep.subr.bf16.mxu0 0
      %4467 = vmatpush1.bf16.msra.mxu0 0
      %4468 = vmatprep.subr.bf16.mxu0 0
      %4469 = vmatpush1.bf16.msra.mxu0 0
      %4470 = vmatprep.subr.bf16.mxu0 0
      %4471 = vmatpush1.bf16.msra.mxu0 0
      %4472 = vmatprep.subr.bf16.mxu0 0
      %4473 = vmatpush1.bf16.msra.mxu0 0
      %4474 = vmatprep.subr.bf16.mxu0 0
      %4475 = vmatpush1.bf16.msra.mxu0 0
      %4476 = vmatprep.subr.bf16.mxu0 0
      %4477 = vmatpush1.bf16.msra.mxu0 0
      %4478 = vmatprep.subr.bf16.mxu0 0
      %4479 = vmatpush1.bf16.msra.mxu0 0
      %4480 = vmatprep.subr.bf16.mxu0 0
      %4481 = vmatpush1.bf16.msra.mxu0 0
      %4482 = vmatprep.mubr.bf16.mxu0 0
      %4483 = vmatmul.mubr.bf16.gmra.mrb[0].mxu0 %v4377
      %v4484 = vpop.f32.mrb[0].mxu0
      %v4485 = vadd.f32 %v4400, %v4484
      %v4486 = vpop.f32.mrb[0].mxu0
      %v4487 = vpop.f32.mrb[0].mxu0
      %v4488 = vadd.f32 %v4400, %v4487
      %v4489 = vpop.f32.mrb[0].mxu0
      %4490 = vmatprep.mubr.bf16.mxu0 0
      %4491 = vmatmul.mubr.bf16.gmra.mrb[0].mxu0 %v4378
      %v4492 = vpop.f32.mrb[0].mxu0
      %v4493 = vadd.f32 %v4400, %v4492
      %v4494 = vpop.f32.mrb[0].mxu0
      %v4495 = vpop.f32.mrb[0].mxu0
      %v4496 = vadd.f32 %v4400, %v4495
      %v4497 = vpop.f32.mrb[0].mxu0
      %4498 = vdwg.mxu0
      %v4499 = vlaneseq
      %v4500 = vshrl.u32 %v4499, 7
      %v4501 = vsub.s32 5, %v4500
      %v4502 = vrot.slane %v861, %v4501
      %v4503 = vmul.f32 %v4502, %v4485
      %v4504 = vmul.f32 %v4502, %v4488
      %v4505 = vmul.f32 %v4502, %v4493
      %v4506 = vmul.f32 %v4502, %v4496
      %v4507 = vadd.f32 %v4189, %v4503
      %v4508 = vadd.f32 %v4190, %v4504
      %v4509 = vadd.f32 %v4191, %v4505
      %v4510 = vadd.f32 %v4192, %v4506
      %4511 = vst.msk [vmem:[%s856] sm:$0xff] %vm1697, %v4507
      %4512 = vst.msk [vmem:[%s856 + $0x8] sm:$0xff] %vm1697, %v4508
      %4513 = vst.msk [vmem:[%s856 + $0x10] sm:$0xff] %vm1697, %v4509
      %4514 = vst.msk [vmem:[%s856 + $0x18] sm:$0xff] %vm1697, %v4510
      %s4515 = smul.u32 4, %s41
      %p4516 = scmp.lt.s32.totalorder %s40, 1
      %s4517 = scalar_select %p4516, %s40, 1
      %p4518 = scmp.lt.s32.totalorder %s4515, 7
      %s4519 = scalar_select %p4518, %s4515, 7
      %s4520 = smul.addr %s4517, 8
      %s4521 = sadd.s32 %s4519, %s4520
      %s4522 = smul.addr %s4521, 8
      %s4523 = scalar_lea.vmem %s25, %s4522
      // Predicated region
      $region132: #{tpu_custom_call.1} parent=119 // pred_check
        %p4524 = pneg %p615
      $region133: #{tpu_custom_call.1} parent=119 // pred_check_branch
        %4526 = sbr.rel (%p4524) target = $region135
      $region134: #{tpu_custom_call.1} parent=119 // pred_region
        %s4527 = smul.u32 4, %s41
      $region135: #{tpu_custom_call.1} parent=119 // pred_fallthru
        _
    $region120: #{tpu_custom_call.1} parent=5 // pred_fallthru
      _
    %p4528 = scmp.le.s32.totalorder 2, %s31
    // Predicated region
    $region136: #{tpu_custom_call.1} parent=5 // pred_check
      %p4529 = pneg %p4528
    $region137: #{tpu_custom_call.1} parent=5 // pred_check_branch
      %4531 = sbr.rel (%p4529) target = $region139
    $region138: #{tpu_custom_call.1} parent=5 // pred_region
      %s4532 = ssub.s32 %s31, 2
      // Predicated region
      $region140: #{tpu_custom_call.1} parent=138 // pred_check
        %p4533 = pneg %p621
      $region141: #{tpu_custom_call.1} parent=138 // pred_check_branch
        %4535 = sbr.rel (%p4533) target = $region143
      $region142: #{tpu_custom_call.1} parent=138 // pred_region
        %s4536 = smul.u32 4, %s43
        %p4537 = scmp.lt.s32.totalorder %s42, 1
        %s4538 = scalar_select %p4537, %s42, 1
        %p4539 = scmp.lt.s32.totalorder %s4536, 7
        %s4540 = scalar_select %p4539, %s4536, 7
        %s4541 = smul.addr %s4538, 8
        %s4542 = sadd.s32 %s4540, %s4541
        %s4543 = smul.addr %s4542, 8
        %s4544 = scalar_lea.vmem %s25, %s4543
      $region143: #{tpu_custom_call.1} parent=138 // pred_fallthru
        _
    $region139: #{tpu_custom_call.1} parent=5 // pred_fallthru
      _
  $region6: #{tpu_custom_call.1} parent=0 // loop_footer
    %s35 = sadd.s32 1, %s31
  $region7: #{tpu_custom_call.1} parent=0 // loop_footer_branch
    %30 = sbr.rel target = $region3
  $region8: #{tpu_custom_call.1} parent=0 // loop_exit
    _

</llo_original>
